<compile_context>
chip_gen: v7x
topology: tpu7x:2x2x1
jax: 0.10.0
libtpu: 0.0.40
codegen_flags: <defaults>
</compile_context>

<pallas_src>
import functools

import numpy as np
import jax
import jax.numpy as jnp
from jax.experimental import pallas as pl
from jax.experimental.pallas import tpu as pltpu

PADDING = 63    # SimpleBlock1d.padding
N_LAYERS = 4    # four (SpectralConv1d + 1x1 conv) layers


# --------------------------------------------------------------------------
# Pallas kernel: the whole SimpleBlock1d forward for one batch tile.
# Layout inside the kernel: channels-last with the batch tile folded into the
# lane dim, i.e. the running activation is (L, C) with C = TB * width and
# column t*width + c holding channel c of sample t.
# --------------------------------------------------------------------------
def _fno1d_kernel(xg_ref,            # (1, S, 2*TB)      input cat grid (lane-folded batch)
                  w0_ref, b0_ref,    # (2*TB, C), (1, C)            fc0   (kron-replicated)
                  cfwd_ref,          # (2M, L)   stacked [Re; Im] forward rDFT
                  cinv_ref,          # (L, 2M)   stacked [Re | Im] inverse rDFT
                  mask_ref,          # (M, 2*M*C) block-diagonal lane selector
                  wstack_ref,        # (4, 2*M*C, 2C)  per-layer block-stacked complex mix
                  wc_ref, bc_ref,    # (4, C, C), (4, 1, C)         1x1 convs
                  w1_ref, b1_ref,    # (C, TB*128), (1, TB*128)     fc1
                  w2_ref, b2_ref,    # (TB*128, TB), (1, TB)        fc2
                  w3_ref, b3_ref,    # (1, S), (1, 1)               fc3
                  o_ref,             # (1, 1, TB)  output (lane-dense row)
                  *, s_len, modes, chan, pad_len):
    f32 = jnp.float32
    C = chan

    xg = xg_ref[0]                                                      # (S, 2*TB)

    # fc0 lift (all TB samples at once), then F.pad(..., [0, 63]) as a concat.
    h0 = jnp.dot(xg, w0_ref[...], preferred_element_type=f32) + b0_ref[...]    # (S, C)
    xcl = jnp.concatenate([h0, jnp.zeros((pad_len, C), f32)], axis=0)          # (L, C)

    # Loop-invariant loads hoisted once.
    cfwd = cfwd_ref[...]                                                # (2M, L)
    cinv = cinv_ref[...]                                                # (L, 2M)
    mask = mask_ref[...]                                                # (M, 2*M*C)

    for layer in range(N_LAYERS):
        # ---- pointwise (1x1 conv) branch: w_l(x) ----
        pw = jnp.dot(xcl, wc_ref[layer], preferred_element_type=f32) + bc_ref[layer]   # (L, C)

        # ---- spectral branch: conv_l(x) ----
        # truncated normalized rFFT: one stacked matmul (rows 0..M-1 = Re, M..2M-1 = Im)
        xri = jnp.dot(cfwd, xcl, preferred_element_type=f32)            # (2M, C)
        # real embedding [Re_k | Im_k] per mode along lanes
        xcat = jnp.concatenate([xri[:modes, :], xri[modes:, :]], axis=1)   # (M, 2C)

        # Per-mode complex channel mix as ONE block-diagonal matmul:
        # row k of xblk carries xcat[k] in lane block k and zeros elsewhere,
        # so xblk @ wstack[layer] == per-mode (1,2C)@(2C,2C) for every mode.
        xblk = jnp.concatenate([xcat] * modes, axis=1) * mask            # (M, 2*M*C)
        ycat = jnp.dot(xblk, wstack_ref[layer], preferred_element_type=f32)   # (M, 2C)

        # restack to (2M, C) = [Y_re; Y_im] and do the normalized inverse rDFT
        # (plus the zero-padded high modes) as a SINGLE matmul.
        yri = jnp.concatenate([ycat[:, :C], ycat[:, C:]], axis=0)       # (2M, C)
        x1 = jnp.dot(cinv, yri, preferred_element_type=f32)             # (L, C)

        acc = pw + x1
        # relu after layers 0,1,2 only (matches the PyTorch forward)
        xcl = jnp.maximum(acc, 0.0) if layer < N_LAYERS - 1 else acc

    # drop padding (already channels-last)
    xs = xcl[:s_len, :]                                                 # (S, C)

    # fc1 -> relu -> fc2 (kron-replicated per sample)
    h1 = jnp.maximum(
        jnp.dot(xs, w1_ref[...], preferred_element_type=f32) + b1_ref[...], 0.0)   # (S, TB*128)
    o2 = jnp.dot(h1, w2_ref[...], preferred_element_type=f32) + b2_ref[...]        # (S, TB)

    # torch.squeeze -> fc3 (Linear(S, 1) across the spatial dim), lane-dense output row
    out = jnp.dot(w3_ref[...], o2, preferred_element_type=f32) + b3_ref[...]       # (1, TB)
    o_ref[0] = out


# --------------------------------------------------------------------------
# Glue: DFT matrices, parameters, pallas_call wrapper, pure-JAX reference.
# --------------------------------------------------------------------------
def make_dft_mats(length, modes):
    """Stacked real/imag normalized rfft (first `modes` bins) and its inverse."""
    n = np.arange(length)[:, None].astype(np.float64)
    k = np.arange(modes)[None, :].astype(np.float64)
    ang = 2.0 * np.pi * n * k / length
    scale = 1.0 / np.sqrt(length)
    af = (np.cos(ang) * scale).T          # (M, L)   Re part of forward rDFT
    bf = (-np.sin(ang) * scale).T         # (M, L)   Im part of forward rDFT
    # Hermitian inverse; factor 2 for non-DC (and non-Nyquist) bins.
    ck = np.where((k == 0) | ((length % 2 == 0) & (k == length // 2)), 1.0, 2.0)
    ai = np.cos(ang) * scale * ck         # (L, M)
    bi = -np.sin(ang) * scale * ck        # (L, M)  (col 0 is zero -> imag of DC ignored, like C2R)
    cfwd = np.concatenate([af, bf], axis=0)     # (2M, L)
    cinv = np.concatenate([ai, bi], axis=1)     # (L, 2M)
    return jnp.asarray(cfwd, jnp.float32), jnp.asarray(cinv, jnp.float32)


def init_params(key, modes, width, s_len):
    """Deterministic synthetic parameters with the same shapes as the torch module."""
    ks = jax.random.split(key, 12)

    def unif(k, shape, bound):
        return jax.random.uniform(k, shape, jnp.float32, -bound, bound)

    p = {}
    p["fc0_w"] = unif(ks[0], (width, 2), 1.0 / np.sqrt(2.0))
    p["fc0_b"] = unif(ks[1], (width,), 1.0 / np.sqrt(2.0))
    # SpectralConv1d: scale * rand(in, out, modes, 2) for each of the 4 layers
    scale = 1.0 / (width * width)
    p["spec_w"] = scale * jax.random.uniform(
        ks[2], (N_LAYERS, width, width, modes, 2), jnp.float32)
    p["conv_w"] = unif(ks[3], (N_LAYERS, width, width), 1.0 / np.sqrt(width))   # (out, in)
    p["conv_b"] = unif(ks[4], (N_LAYERS, width), 1.0 / np.sqrt(width))
    p["fc1_w"] = unif(ks[5], (128, width), 1.0 / np.sqrt(width))
    p["fc1_b"] = unif(ks[6], (128,), 1.0 / np.sqrt(width))
    p["fc2_w"] = unif(ks[7], (1, 128), 1.0 / np.sqrt(128.0))
    p["fc2_b"] = unif(ks[8], (1,), 1.0 / np.sqrt(128.0))
    p["fc3_w"] = unif(ks[9], (1, s_len), 1.0 / np.sqrt(s_len))
    p["fc3_b"] = unif(ks[10], (1,), 1.0 / np.sqrt(s_len))
    return p


def net1d_forward_pallas(x, params, modes, width):
    B, S, cin = x.shape
    assert cin == 1, "Net1d expects input of shape (B, S, 1)"
    assert S == params["fc3_w"].shape[1], "fc3 = Linear(2,1) forces spatial size == 2"
    L = S + PADDING

    # Batch tile folded into lanes: C = TB * width lanes per activation row.
    TB = max(1, min(B, max(1, 128 // width)))
    G = -(-B // TB)                     # ceil(B / TB) grid steps
    B_pad = G * TB
    C = TB * width
    C2 = 2 * C

    # Net1d.get_grid + cat, batch-padding, lane folding (plain-JAX glue).
    xf = x.astype(jnp.float32)
    if B_pad > B:
        xf = jnp.concatenate([xf, jnp.zeros((B_pad - B, S, 1), jnp.float32)], axis=0)
    gridx = jnp.broadcast_to(
        jnp.linspace(0.0, 1.0, S, dtype=jnp.float32).reshape(1, S, 1), (B_pad, S, 1))
    xg = jnp.concatenate([xf, gridx], axis=-1)                           # (B_pad, S, 2)
    xg_wide = xg.reshape(G, TB, S, 2).transpose(0, 2, 1, 3).reshape(G, S, TB * 2)

    cfwd, cinv = make_dft_mats(L, modes)

    # kron(I_TB, .) replication of per-sample weights (host-side, one-time).
    eye_tb = jnp.eye(TB, dtype=jnp.float32)
    w0k = jnp.kron(eye_tb, params["fc0_w"].T)                            # (2*TB, C)
    b0k = jnp.tile(params["fc0_b"], TB).reshape(1, C)

    conv_wt = jnp.transpose(params["conv_w"], (0, 2, 1))                 # (4, Win, Wout)
    wck = jnp.einsum("tu,nio->ntiuo", eye_tb, conv_wt).reshape(N_LAYERS, C, C)
    bck = jnp.tile(params["conv_b"], (1, TB)).reshape(N_LAYERS, 1, C)

    # Per-layer, per-mode complex mix in real-embedded form [[Wr, Wi], [-Wi, Wr]],
    # kron-replicated over the batch tile, then block-stacked along the
    # contraction dim -> (4, 2*M*C, 2C).  The block-diagonal lane selector
    # `blkmask` (M, 2*M*C) turns the per-mode mix into one matmul per layer.
    wr = jnp.transpose(params["spec_w"][..., 0], (0, 3, 1, 2))           # (4, M, Win, Wout)
    wi = jnp.transpose(params["spec_w"][..., 1], (0, 3, 1, 2))
    kwr = jnp.einsum("tu,nkio->nktiuo", eye_tb, wr).reshape(N_LAYERS, modes, C, C)
    kwi = jnp.einsum("tu,nkio->nktiuo", eye_tb, wi).reshape(N_LAYERS, modes, C, C)
    wmix = jnp.concatenate(
        [jnp.concatenate([kwr, kwi], axis=-1),
         jnp.concatenate([-kwi, kwr], axis=-1)], axis=-2)                # (4, M, 2C, 2C)
    wstack = wmix.reshape(N_LAYERS, modes * C2, C2)                      # (4, 2MC, 2C)
    blkmask = jnp.kron(jnp.eye(modes, dtype=jnp.float32),
                       jnp.ones((1, C2), jnp.float32))                   # (M, 2MC)

    w1k = jnp.kron(eye_tb, params["fc1_w"].T)                            # (C, TB*128)
    b1k = jnp.tile(params["fc1_b"], TB).reshape(1, TB * 128)
    w2k = jnp.kron(eye_tb, params["fc2_w"].T)                            # (TB*128, TB)
    b2k = jnp.tile(params["fc2_b"], TB).reshape(1, TB)
    w3 = params["fc3_w"]                                                 # (1, S)
    b3 = params["fc3_b"].reshape(1, 1)

    weights = (w0k, b0k, cfwd, cinv, blkmask, wstack, wck, bck,
               w1k, b1k, w2k, b2k, w3, b3)

    def full_spec(a):
        zeros = (0,) * a.ndim
        return pl.BlockSpec(a.shape, lambda g, _z=zeros: _z)   # whole array resident in VMEM

    in_specs = ([pl.BlockSpec((1, S, TB * 2), lambda g: (g, 0, 0))]
                + [full_spec(a) for a in weights])
    out_spec = pl.BlockSpec((1, 1, TB), lambda g: (g, 0, 0))

    kernel = functools.partial(_fno1d_kernel, s_len=S, modes=modes,
                               chan=C, pad_len=L - S)
    out = pl.pallas_call(
        kernel,
        out_shape=jax.ShapeDtypeStruct((G, 1, TB), jnp.float32),
        grid=(G,),
        in_specs=in_specs,
        out_specs=out_spec,
        compiler_params=pltpu.CompilerParams(dimension_semantics=("parallel",)),
    )(xg_wide, *weights)
    return out.reshape(G * TB, 1)[:B]


def net1d_forward_reference(x, params, modes, width):
    """Pure-JAX mirror of the PyTorch forward (uses jnp.fft) for validation."""
    B, S, _ = x.shape
    L = S + PADDING
    gridx = jnp.broadcast_to(
        jnp.linspace(0.0, 1.0, S, dtype=jnp.float32).reshape(1, S, 1), (B, S, 1))
    h = jnp.concatenate([x.astype(jnp.float32), gridx], axis=-1)       # (B, S, 2)
    h = h @ params["fc0_w"].T + params["fc0_b"]                        # (B, S, W)
    h = jnp.transpose(h, (0, 2, 1))                                    # (B, W, S)
    h = jnp.pad(h, ((0, 0), (0, 0), (0, PADDING)))                     # (B, W, L)
    wc = params["spec_w"][..., 0] + 1j * params["spec_w"][..., 1]      # (4, W, W, M)
    for layer in range(N_LAYERS):
        x_ft = jnp.fft.rfft(h, axis=-1, norm="ortho")                  # (B, W, L//2+1)
        y_ft = jnp.einsum("bix,iox->box", x_ft[:, :, :modes], wc[layer])
        out_ft = jnp.zeros((B, width, L // 2 + 1), jnp.complex64).at[:, :, :modes].set(y_ft)
        x1 = jnp.fft.irfft(out_ft, n=L, axis=-1, norm="ortho")
        x2 = (jnp.einsum("oi,bil->bol", params["conv_w"][layer], h)
              + params["conv_b"][layer][None, :, None])
        h = x1 + x2
        if layer < N_LAYERS - 1:
            h = jax.nn.relu(h)
    h = h[..., :S]                                                     # x[..., :-padding]
    h = jnp.transpose(h, (0, 2, 1))                                    # (B, S, W)
    h = jax.nn.relu(h @ params["fc1_w"].T + params["fc1_b"])
    h = h @ params["fc2_w"].T + params["fc2_b"]                        # (B, S, 1)
    h = jnp.squeeze(h)                                                 # (B, S)
    h = h @ params["fc3_w"].T + params["fc3_b"]                        # (B, 1)
    return h


if __name__ == "__main__":
    MODES, WIDTH, BATCH, S = 8, 16, 2, 2   # S must be 2 (fc3 = Linear(2, 1))
    key = jax.random.PRNGKey(0)
    kx, kp = jax.random.split(key)
    x = jax.random.normal(kx, (BATCH, S, 1), jnp.float32)
    params = init_params(kp, MODES, WIDTH, S)

    out = net1d_forward_pallas(x, params, MODES, WIDTH)
    out = jax.block_until_ready(out)

    ref = net1d_forward_reference(x, params, MODES, WIDTH)
    if not np.allclose(np.asarray(out), np.asarray(ref), rtol=2e-3, atol=2e-3):
        raise AssertionError(f"Pallas/JAX mismatch:\n{out}\nvs\n{ref}")
    print("KERNEL_OK")
</pallas_src>

<mosaic_0001>
module attributes {stable_mosaic.version = 11 : i64} {
  func.func @_fno1d_kernel(%arg0: i32, %arg1: memref<1x2x4xf32, #tpu.memory_space<vmem>>, %arg2: memref<4x32xf32, #tpu.memory_space<vmem>>, %arg3: memref<1x32xf32, #tpu.memory_space<vmem>>, %arg4: memref<16x65xf32, #tpu.memory_space<vmem>>, %arg5: memref<65x16xf32, #tpu.memory_space<vmem>>, %arg6: memref<8x512xf32, #tpu.memory_space<vmem>>, %arg7: memref<4x512x64xf32, #tpu.memory_space<vmem>>, %arg8: memref<4x32x32xf32, #tpu.memory_space<vmem>>, %arg9: memref<4x1x32xf32, #tpu.memory_space<vmem>>, %arg10: memref<32x256xf32, #tpu.memory_space<vmem>>, %arg11: memref<1x256xf32, #tpu.memory_space<vmem>>, %arg12: memref<256x2xf32, #tpu.memory_space<vmem>>, %arg13: memref<1x2xf32, #tpu.memory_space<vmem>>, %arg14: memref<1x2xf32, #tpu.memory_space<vmem>>, %arg15: memref<1x1xf32, #tpu.memory_space<vmem>>, %arg16: memref<1x1x2xf32, #tpu.memory_space<vmem>>) attributes {dimension_semantics = [#tpu.dimension_semantics<parallel>], iteration_bounds = array<i64: 1>, scalar_prefetch = 0 : i64, scratch_operands = 0 : i64, tpu.core_type = #tpu.core_type<tc>, window_params = [{transform_indices = @transform_0, window_bounds = array<i64: 1, 2, 4>}, {pipeline_mode = #tpu.pipeline_mode<synchronous>, transform_indices = @transform_1, window_bounds = array<i64: 4, 32>}, {pipeline_mode = #tpu.pipeline_mode<synchronous>, transform_indices = @transform_2, window_bounds = array<i64: 1, 32>}, {pipeline_mode = #tpu.pipeline_mode<synchronous>, transform_indices = @transform_3, window_bounds = array<i64: 16, 65>}, {pipeline_mode = #tpu.pipeline_mode<synchronous>, transform_indices = @transform_4, window_bounds = array<i64: 65, 16>}, {pipeline_mode = #tpu.pipeline_mode<synchronous>, transform_indices = @transform_5, window_bounds = array<i64: 8, 512>}, {pipeline_mode = #tpu.pipeline_mode<synchronous>, transform_indices = @transform_6, window_bounds = array<i64: 4, 512, 64>}, {pipeline_mode = #tpu.pipeline_mode<synchronous>, transform_indices = @transform_7, window_bounds = array<i64: 4, 32, 32>}, {pipeline_mode = #tpu.pipeline_mode<synchronous>, transform_indices = @transform_8, window_bounds = array<i64: 4, 1, 32>}, {pipeline_mode = #tpu.pipeline_mode<synchronous>, transform_indices = @transform_9, window_bounds = array<i64: 32, 256>}, {pipeline_mode = #tpu.pipeline_mode<synchronous>, transform_indices = @transform_10, window_bounds = array<i64: 1, 256>}, {pipeline_mode = #tpu.pipeline_mode<synchronous>, transform_indices = @transform_11, window_bounds = array<i64: 256, 2>}, {pipeline_mode = #tpu.pipeline_mode<synchronous>, transform_indices = @transform_12, window_bounds = array<i64: 1, 2>}, {pipeline_mode = #tpu.pipeline_mode<synchronous>, transform_indices = @transform_13, window_bounds = array<i64: 1, 2>}, {pipeline_mode = #tpu.pipeline_mode<synchronous>, transform_indices = @transform_14, window_bounds = array<i64: 1, 1>}, {transform_indices = @transform_15, window_bounds = array<i64: 1, 1, 2>}]} {
    %c0 = arith.constant 0 : index
    %c0_0 = arith.constant 0 : index
    %c0_1 = arith.constant 0 : index
    %0 = vector.load %arg1[%c0, %c0_0, %c0_1] : memref<1x2x4xf32, #tpu.memory_space<vmem>>, vector<1x2x4xf32>
    %1 = vector.shape_cast %0 : vector<1x2x4xf32> to vector<2x4xf32>
    %c0_2 = arith.constant 0 : index
    %c0_3 = arith.constant 0 : index
    %2 = vector.load %arg2[%c0_2, %c0_3] : memref<4x32xf32, #tpu.memory_space<vmem>>, vector<4x32xf32>
    %cst = arith.constant dense<0.000000e+00> : vector<2x32xf32>
    %3 = tpu.matmul %1, %2, %cst {dimension_numbers = #tpu.dot_dimension_numbers<[1], [0], [0], [1], [0, 0, 1, 1], [], []>} : vector<2x4xf32>, vector<4x32xf32>, vector<2x32xf32> -> vector<2x32xf32>
    %c0_4 = arith.constant 0 : index
    %c0_5 = arith.constant 0 : index
    %4 = vector.load %arg3[%c0_4, %c0_5] : memref<1x32xf32, #tpu.memory_space<vmem>>, vector<1x32xf32>
    %5 = vector.broadcast %4 : vector<1x32xf32> to vector<2x32xf32>
    %6 = arith.addf %3, %5 : vector<2x32xf32>
    %cst_6 = arith.constant 0.000000e+00 : f32
    %7 = vector.broadcast %cst_6 : f32 to vector<63x32xf32>
    %8 = tpu.concatenate %6, %7 in 0 : vector<2x32xf32>, vector<63x32xf32> -> vector<65x32xf32>
    %c0_7 = arith.constant 0 : index
    %c0_8 = arith.constant 0 : index
    %9 = vector.load %arg4[%c0_7, %c0_8] : memref<16x65xf32, #tpu.memory_space<vmem>>, vector<16x65xf32>
    %c0_9 = arith.constant 0 : index
    %c0_10 = arith.constant 0 : index
    %10 = vector.load %arg5[%c0_9, %c0_10] : memref<65x16xf32, #tpu.memory_space<vmem>>, vector<65x16xf32>
    %c0_11 = arith.constant 0 : index
    %c0_12 = arith.constant 0 : index
    %11 = vector.load %arg6[%c0_11, %c0_12] : memref<8x512xf32, #tpu.memory_space<vmem>>, vector<8x512xf32>
    %c0_13 = arith.constant 0 : index
    %c0_14 = arith.constant 0 : index
    %c0_15 = arith.constant 0 : index
    %12 = vector.load %arg8[%c0_13, %c0_14, %c0_15] : memref<4x32x32xf32, #tpu.memory_space<vmem>>, vector<1x32x32xf32>
    %13 = vector.shape_cast %12 : vector<1x32x32xf32> to vector<32x32xf32>
    %cst_16 = arith.constant dense<0.000000e+00> : vector<65x32xf32>
    %14 = tpu.matmul %8, %13, %cst_16 {dimension_numbers = #tpu.dot_dimension_numbers<[1], [0], [0], [1], [0, 0, 1, 1], [], []>} : vector<65x32xf32>, vector<32x32xf32>, vector<65x32xf32> -> vector<65x32xf32>
    %c0_17 = arith.constant 0 : index
    %c0_18 = arith.constant 0 : index
    %c0_19 = arith.constant 0 : index
    %15 = vector.load %arg9[%c0_17, %c0_18, %c0_19] : memref<4x1x32xf32, #tpu.memory_space<vmem>>, vector<1x1x32xf32>
    %16 = vector.shape_cast %15 : vector<1x1x32xf32> to vector<1x32xf32>
    %17 = vector.broadcast %16 : vector<1x32xf32> to vector<65x32xf32>
    %18 = arith.addf %14, %17 : vector<65x32xf32>
    %cst_20 = arith.constant dense<0.000000e+00> : vector<16x32xf32>
    %19 = tpu.matmul %9, %8, %cst_20 {dimension_numbers = #tpu.dot_dimension_numbers<[1], [0], [0], [1], [0, 0, 1, 1], [], []>} : vector<16x65xf32>, vector<65x32xf32>, vector<16x32xf32> -> vector<16x32xf32>
    %20 = vector.extract_strided_slice %19 {offsets = [0, 0], sizes = [8, 32], strides = [1, 1]} : vector<16x32xf32> to vector<8x32xf32>
    %21 = vector.extract_strided_slice %19 {offsets = [8, 0], sizes = [8, 32], strides = [1, 1]} : vector<16x32xf32> to vector<8x32xf32>
    %22 = tpu.concatenate %20, %21 in 1 : vector<8x32xf32>, vector<8x32xf32> -> vector<8x64xf32>
    %23 = tpu.concatenate %22, %22, %22, %22, %22, %22, %22, %22 in 1 : vector<8x64xf32>, vector<8x64xf32>, vector<8x64xf32>, vector<8x64xf32>, vector<8x64xf32>, vector<8x64xf32>, vector<8x64xf32>, vector<8x64xf32> -> vector<8x512xf32>
    %24 = arith.mulf %23, %11 : vector<8x512xf32>
    %c0_21 = arith.constant 0 : index
    %c0_22 = arith.constant 0 : index
    %c0_23 = arith.constant 0 : index
    %25 = vector.load %arg7[%c0_21, %c0_22, %c0_23] : memref<4x512x64xf32, #tpu.memory_space<vmem>>, vector<1x512x64xf32>
    %26 = vector.shape_cast %25 : vector<1x512x64xf32> to vector<512x64xf32>
    %cst_24 = arith.constant dense<0.000000e+00> : vector<8x64xf32>
    %27 = tpu.matmul %24, %26, %cst_24 {dimension_numbers = #tpu.dot_dimension_numbers<[1], [0], [0], [1], [0, 0, 1, 1], [], []>} : vector<8x512xf32>, vector<512x64xf32>, vector<8x64xf32> -> vector<8x64xf32>
    %28 = vector.extract_strided_slice %27 {offsets = [0, 0], sizes = [8, 32], strides = [1, 1]} : vector<8x64xf32> to vector<8x32xf32>
    %29 = vector.extract_strided_slice %27 {offsets = [0, 32], sizes = [8, 32], strides = [1, 1]} : vector<8x64xf32> to vector<8x32xf32>
    %30 = tpu.concatenate %28, %29 in 0 : vector<8x32xf32>, vector<8x32xf32> -> vector<16x32xf32>
    %cst_25 = arith.constant dense<0.000000e+00> : vector<65x32xf32>
    %31 = tpu.matmul %10, %30, %cst_25 {dimension_numbers = #tpu.dot_dimension_numbers<[1], [0], [0], [1], [0, 0, 1, 1], [], []>} : vector<65x16xf32>, vector<16x32xf32>, vector<65x32xf32> -> vector<65x32xf32>
    %32 = arith.addf %18, %31 : vector<65x32xf32>
    %cst_26 = arith.constant 0.000000e+00 : f32
    %33 = vector.broadcast %cst_26 : f32 to vector<65x32xf32>
    %34 = arith.maximumf %32, %33 : vector<65x32xf32>
    %c1 = arith.constant 1 : index
    %c0_27 = arith.constant 0 : index
    %c0_28 = arith.constant 0 : index
    %35 = vector.load %arg8[%c1, %c0_27, %c0_28] : memref<4x32x32xf32, #tpu.memory_space<vmem>>, vector<1x32x32xf32>
    %36 = vector.shape_cast %35 : vector<1x32x32xf32> to vector<32x32xf32>
    %cst_29 = arith.constant dense<0.000000e+00> : vector<65x32xf32>
    %37 = tpu.matmul %34, %36, %cst_29 {dimension_numbers = #tpu.dot_dimension_numbers<[1], [0], [0], [1], [0, 0, 1, 1], [], []>} : vector<65x32xf32>, vector<32x32xf32>, vector<65x32xf32> -> vector<65x32xf32>
    %c1_30 = arith.constant 1 : index
    %c0_31 = arith.constant 0 : index
    %c0_32 = arith.constant 0 : index
    %38 = vector.load %arg9[%c1_30, %c0_31, %c0_32] : memref<4x1x32xf32, #tpu.memory_space<vmem>>, vector<1x1x32xf32>
    %39 = vector.shape_cast %38 : vector<1x1x32xf32> to vector<1x32xf32>
    %40 = vector.broadcast %39 : vector<1x32xf32> to vector<65x32xf32>
    %41 = arith.addf %37, %40 : vector<65x32xf32>
    %cst_33 = arith.constant dense<0.000000e+00> : vector<16x32xf32>
    %42 = tpu.matmul %9, %34, %cst_33 {dimension_numbers = #tpu.dot_dimension_numbers<[1], [0], [0], [1], [0, 0, 1, 1], [], []>} : vector<16x65xf32>, vector<65x32xf32>, vector<16x32xf32> -> vector<16x32xf32>
    %43 = vector.extract_strided_slice %42 {offsets = [0, 0], sizes = [8, 32], strides = [1, 1]} : vector<16x32xf32> to vector<8x32xf32>
    %44 = vector.extract_strided_slice %42 {offsets = [8, 0], sizes = [8, 32], strides = [1, 1]} : vector<16x32xf32> to vector<8x32xf32>
    %45 = tpu.concatenate %43, %44 in 1 : vector<8x32xf32>, vector<8x32xf32> -> vector<8x64xf32>
    %46 = tpu.concatenate %45, %45, %45, %45, %45, %45, %45, %45 in 1 : vector<8x64xf32>, vector<8x64xf32>, vector<8x64xf32>, vector<8x64xf32>, vector<8x64xf32>, vector<8x64xf32>, vector<8x64xf32>, vector<8x64xf32> -> vector<8x512xf32>
    %47 = arith.mulf %46, %11 : vector<8x512xf32>
    %c1_34 = arith.constant 1 : index
    %c0_35 = arith.constant 0 : index
    %c0_36 = arith.constant 0 : index
    %48 = vector.load %arg7[%c1_34, %c0_35, %c0_36] : memref<4x512x64xf32, #tpu.memory_space<vmem>>, vector<1x512x64xf32>
    %49 = vector.shape_cast %48 : vector<1x512x64xf32> to vector<512x64xf32>
    %cst_37 = arith.constant dense<0.000000e+00> : vector<8x64xf32>
    %50 = tpu.matmul %47, %49, %cst_37 {dimension_numbers = #tpu.dot_dimension_numbers<[1], [0], [0], [1], [0, 0, 1, 1], [], []>} : vector<8x512xf32>, vector<512x64xf32>, vector<8x64xf32> -> vector<8x64xf32>
    %51 = vector.extract_strided_slice %50 {offsets = [0, 0], sizes = [8, 32], strides = [1, 1]} : vector<8x64xf32> to vector<8x32xf32>
    %52 = vector.extract_strided_slice %50 {offsets = [0, 32], sizes = [8, 32], strides = [1, 1]} : vector<8x64xf32> to vector<8x32xf32>
    %53 = tpu.concatenate %51, %52 in 0 : vector<8x32xf32>, vector<8x32xf32> -> vector<16x32xf32>
    %cst_38 = arith.constant dense<0.000000e+00> : vector<65x32xf32>
    %54 = tpu.matmul %10, %53, %cst_38 {dimension_numbers = #tpu.dot_dimension_numbers<[1], [0], [0], [1], [0, 0, 1, 1], [], []>} : vector<65x16xf32>, vector<16x32xf32>, vector<65x32xf32> -> vector<65x32xf32>
    %55 = arith.addf %41, %54 : vector<65x32xf32>
    %cst_39 = arith.constant 0.000000e+00 : f32
    %56 = vector.broadcast %cst_39 : f32 to vector<65x32xf32>
    %57 = arith.maximumf %55, %56 : vector<65x32xf32>
    %c2 = arith.constant 2 : index
    %c0_40 = arith.constant 0 : index
    %c0_41 = arith.constant 0 : index
    %58 = vector.load %arg8[%c2, %c0_40, %c0_41] : memref<4x32x32xf32, #tpu.memory_space<vmem>>, vector<1x32x32xf32>
    %59 = vector.shape_cast %58 : vector<1x32x32xf32> to vector<32x32xf32>
    %cst_42 = arith.constant dense<0.000000e+00> : vector<65x32xf32>
    %60 = tpu.matmul %57, %59, %cst_42 {dimension_numbers = #tpu.dot_dimension_numbers<[1], [0], [0], [1], [0, 0, 1, 1], [], []>} : vector<65x32xf32>, vector<32x32xf32>, vector<65x32xf32> -> vector<65x32xf32>
    %c2_43 = arith.constant 2 : index
    %c0_44 = arith.constant 0 : index
    %c0_45 = arith.constant 0 : index
    %61 = vector.load %arg9[%c2_43, %c0_44, %c0_45] : memref<4x1x32xf32, #tpu.memory_space<vmem>>, vector<1x1x32xf32>
    %62 = vector.shape_cast %61 : vector<1x1x32xf32> to vector<1x32xf32>
    %63 = vector.broadcast %62 : vector<1x32xf32> to vector<65x32xf32>
    %64 = arith.addf %60, %63 : vector<65x32xf32>
    %cst_46 = arith.constant dense<0.000000e+00> : vector<16x32xf32>
    %65 = tpu.matmul %9, %57, %cst_46 {dimension_numbers = #tpu.dot_dimension_numbers<[1], [0], [0], [1], [0, 0, 1, 1], [], []>} : vector<16x65xf32>, vector<65x32xf32>, vector<16x32xf32> -> vector<16x32xf32>
    %66 = vector.extract_strided_slice %65 {offsets = [0, 0], sizes = [8, 32], strides = [1, 1]} : vector<16x32xf32> to vector<8x32xf32>
    %67 = vector.extract_strided_slice %65 {offsets = [8, 0], sizes = [8, 32], strides = [1, 1]} : vector<16x32xf32> to vector<8x32xf32>
    %68 = tpu.concatenate %66, %67 in 1 : vector<8x32xf32>, vector<8x32xf32> -> vector<8x64xf32>
    %69 = tpu.concatenate %68, %68, %68, %68, %68, %68, %68, %68 in 1 : vector<8x64xf32>, vector<8x64xf32>, vector<8x64xf32>, vector<8x64xf32>, vector<8x64xf32>, vector<8x64xf32>, vector<8x64xf32>, vector<8x64xf32> -> vector<8x512xf32>
    %70 = arith.mulf %69, %11 : vector<8x512xf32>
    %c2_47 = arith.constant 2 : index
    %c0_48 = arith.constant 0 : index
    %c0_49 = arith.constant 0 : index
    %71 = vector.load %arg7[%c2_47, %c0_48, %c0_49] : memref<4x512x64xf32, #tpu.memory_space<vmem>>, vector<1x512x64xf32>
    %72 = vector.shape_cast %71 : vector<1x512x64xf32> to vector<512x64xf32>
    %cst_50 = arith.constant dense<0.000000e+00> : vector<8x64xf32>
    %73 = tpu.matmul %70, %72, %cst_50 {dimension_numbers = #tpu.dot_dimension_numbers<[1], [0], [0], [1], [0, 0, 1, 1], [], []>} : vector<8x512xf32>, vector<512x64xf32>, vector<8x64xf32> -> vector<8x64xf32>
    %74 = vector.extract_strided_slice %73 {offsets = [0, 0], sizes = [8, 32], strides = [1, 1]} : vector<8x64xf32> to vector<8x32xf32>
    %75 = vector.extract_strided_slice %73 {offsets = [0, 32], sizes = [8, 32], strides = [1, 1]} : vector<8x64xf32> to vector<8x32xf32>
    %76 = tpu.concatenate %74, %75 in 0 : vector<8x32xf32>, vector<8x32xf32> -> vector<16x32xf32>
    %cst_51 = arith.constant dense<0.000000e+00> : vector<65x32xf32>
    %77 = tpu.matmul %10, %76, %cst_51 {dimension_numbers = #tpu.dot_dimension_numbers<[1], [0], [0], [1], [0, 0, 1, 1], [], []>} : vector<65x16xf32>, vector<16x32xf32>, vector<65x32xf32> -> vector<65x32xf32>
    %78 = arith.addf %64, %77 : vector<65x32xf32>
    %cst_52 = arith.constant 0.000000e+00 : f32
    %79 = vector.broadcast %cst_52 : f32 to vector<65x32xf32>
    %80 = arith.maximumf %78, %79 : vector<65x32xf32>
    %c3 = arith.constant 3 : index
    %c0_53 = arith.constant 0 : index
    %c0_54 = arith.constant 0 : index
    %81 = vector.load %arg8[%c3, %c0_53, %c0_54] : memref<4x32x32xf32, #tpu.memory_space<vmem>>, vector<1x32x32xf32>
    %82 = vector.shape_cast %81 : vector<1x32x32xf32> to vector<32x32xf32>
    %cst_55 = arith.constant dense<0.000000e+00> : vector<65x32xf32>
    %83 = tpu.matmul %80, %82, %cst_55 {dimension_numbers = #tpu.dot_dimension_numbers<[1], [0], [0], [1], [0, 0, 1, 1], [], []>} : vector<65x32xf32>, vector<32x32xf32>, vector<65x32xf32> -> vector<65x32xf32>
    %c3_56 = arith.constant 3 : index
    %c0_57 = arith.constant 0 : index
    %c0_58 = arith.constant 0 : index
    %84 = vector.load %arg9[%c3_56, %c0_57, %c0_58] : memref<4x1x32xf32, #tpu.memory_space<vmem>>, vector<1x1x32xf32>
    %85 = vector.shape_cast %84 : vector<1x1x32xf32> to vector<1x32xf32>
    %86 = vector.broadcast %85 : vector<1x32xf32> to vector<65x32xf32>
    %87 = arith.addf %83, %86 : vector<65x32xf32>
    %cst_59 = arith.constant dense<0.000000e+00> : vector<16x32xf32>
    %88 = tpu.matmul %9, %80, %cst_59 {dimension_numbers = #tpu.dot_dimension_numbers<[1], [0], [0], [1], [0, 0, 1, 1], [], []>} : vector<16x65xf32>, vector<65x32xf32>, vector<16x32xf32> -> vector<16x32xf32>
    %89 = vector.extract_strided_slice %88 {offsets = [0, 0], sizes = [8, 32], strides = [1, 1]} : vector<16x32xf32> to vector<8x32xf32>
    %90 = vector.extract_strided_slice %88 {offsets = [8, 0], sizes = [8, 32], strides = [1, 1]} : vector<16x32xf32> to vector<8x32xf32>
    %91 = tpu.concatenate %89, %90 in 1 : vector<8x32xf32>, vector<8x32xf32> -> vector<8x64xf32>
    %92 = tpu.concatenate %91, %91, %91, %91, %91, %91, %91, %91 in 1 : vector<8x64xf32>, vector<8x64xf32>, vector<8x64xf32>, vector<8x64xf32>, vector<8x64xf32>, vector<8x64xf32>, vector<8x64xf32>, vector<8x64xf32> -> vector<8x512xf32>
    %93 = arith.mulf %92, %11 : vector<8x512xf32>
    %c3_60 = arith.constant 3 : index
    %c0_61 = arith.constant 0 : index
    %c0_62 = arith.constant 0 : index
    %94 = vector.load %arg7[%c3_60, %c0_61, %c0_62] : memref<4x512x64xf32, #tpu.memory_space<vmem>>, vector<1x512x64xf32>
    %95 = vector.shape_cast %94 : vector<1x512x64xf32> to vector<512x64xf32>
    %cst_63 = arith.constant dense<0.000000e+00> : vector<8x64xf32>
    %96 = tpu.matmul %93, %95, %cst_63 {dimension_numbers = #tpu.dot_dimension_numbers<[1], [0], [0], [1], [0, 0, 1, 1], [], []>} : vector<8x512xf32>, vector<512x64xf32>, vector<8x64xf32> -> vector<8x64xf32>
    %97 = vector.extract_strided_slice %96 {offsets = [0, 0], sizes = [8, 32], strides = [1, 1]} : vector<8x64xf32> to vector<8x32xf32>
    %98 = vector.extract_strided_slice %96 {offsets = [0, 32], sizes = [8, 32], strides = [1, 1]} : vector<8x64xf32> to vector<8x32xf32>
    %99 = tpu.concatenate %97, %98 in 0 : vector<8x32xf32>, vector<8x32xf32> -> vector<16x32xf32>
    %cst_64 = arith.constant dense<0.000000e+00> : vector<65x32xf32>
    %100 = tpu.matmul %10, %99, %cst_64 {dimension_numbers = #tpu.dot_dimension_numbers<[1], [0], [0], [1], [0, 0, 1, 1], [], []>} : vector<65x16xf32>, vector<16x32xf32>, vector<65x32xf32> -> vector<65x32xf32>
    %101 = arith.addf %87, %100 : vector<65x32xf32>
    %102 = vector.extract_strided_slice %101 {offsets = [0, 0], sizes = [2, 32], strides = [1, 1]} : vector<65x32xf32> to vector<2x32xf32>
    %c0_65 = arith.constant 0 : index
    %c0_66 = arith.constant 0 : index
    %103 = vector.load %arg10[%c0_65, %c0_66] : memref<32x256xf32, #tpu.memory_space<vmem>>, vector<32x256xf32>
    %cst_67 = arith.constant dense<0.000000e+00> : vector<2x256xf32>
    %104 = tpu.matmul %102, %103, %cst_67 {dimension_numbers = #tpu.dot_dimension_numbers<[1], [0], [0], [1], [0, 0, 1, 1], [], []>} : vector<2x32xf32>, vector<32x256xf32>, vector<2x256xf32> -> vector<2x256xf32>
    %c0_68 = arith.constant 0 : index
    %c0_69 = arith.constant 0 : index
    %105 = vector.load %arg11[%c0_68, %c0_69] : memref<1x256xf32, #tpu.memory_space<vmem>>, vector<1x256xf32>
    %106 = vector.broadcast %105 : vector<1x256xf32> to vector<2x256xf32>
    %107 = arith.addf %104, %106 : vector<2x256xf32>
    %cst_70 = arith.constant 0.000000e+00 : f32
    %108 = vector.broadcast %cst_70 : f32 to vector<2x256xf32>
    %109 = arith.maximumf %107, %108 : vector<2x256xf32>
    %c0_71 = arith.constant 0 : index
    %c0_72 = arith.constant 0 : index
    %110 = vector.load %arg12[%c0_71, %c0_72] : memref<256x2xf32, #tpu.memory_space<vmem>>, vector<256x2xf32>
    %cst_73 = arith.constant dense<0.000000e+00> : vector<2x2xf32>
    %111 = tpu.matmul %109, %110, %cst_73 {dimension_numbers = #tpu.dot_dimension_numbers<[1], [0], [0], [1], [0, 0, 1, 1], [], []>} : vector<2x256xf32>, vector<256x2xf32>, vector<2x2xf32> -> vector<2x2xf32>
    %c0_74 = arith.constant 0 : index
    %c0_75 = arith.constant 0 : index
    %112 = vector.load %arg13[%c0_74, %c0_75] : memref<1x2xf32, #tpu.memory_space<vmem>>, vector<1x2xf32>
    %113 = vector.broadcast %112 : vector<1x2xf32> to vector<2x2xf32>
    %114 = arith.addf %111, %113 : vector<2x2xf32>
    %c0_76 = arith.constant 0 : index
    %c0_77 = arith.constant 0 : index
    %115 = vector.load %arg14[%c0_76, %c0_77] : memref<1x2xf32, #tpu.memory_space<vmem>>, vector<1x2xf32>
    %cst_78 = arith.constant dense<0.000000e+00> : vector<1x2xf32>
    %116 = tpu.matmul %115, %114, %cst_78 {dimension_numbers = #tpu.dot_dimension_numbers<[1], [0], [0], [1], [0, 0, 1, 1], [], []>} : vector<1x2xf32>, vector<2x2xf32>, vector<1x2xf32> -> vector<1x2xf32>
    %c0_79 = arith.constant 0 : index
    %c0_80 = arith.constant 0 : index
    %117 = vector.load %arg15[%c0_79, %c0_80] : memref<1x1xf32, #tpu.memory_space<vmem>>, vector<1x1xf32>
    %118 = vector.broadcast %117 : vector<1x1xf32> to vector<1x2xf32>
    %119 = arith.addf %116, %118 : vector<1x2xf32>
    %c0_81 = arith.constant 0 : index
    %c0_82 = arith.constant 0 : index
    %c0_83 = arith.constant 0 : index
    %120 = vector.load %arg16[%c0_81, %c0_82, %c0_83] : memref<1x1x2xf32, #tpu.memory_space<vmem>>, vector<1x1x2xf32>
    %121 = vector.shape_cast %120 : vector<1x1x2xf32> to vector<1x2xf32>
    %122 = vector.shape_cast %119 : vector<1x2xf32> to vector<1x1x2xf32>
    tpu.vector_store %arg16[%c0_81, %c0_82, %c0_83], %122 {strides = array<i32>} : memref<1x1x2xf32, #tpu.memory_space<vmem>>, vector<1x1x2xf32>,
    return
  }
  func.func @transform_0(%arg0: i32) -> (i32, i32, i32) {
    %c0_i32 = arith.constant 0 : i32
    %c0_i32_0 = arith.constant 0 : i32
    %c0_i32_1 = arith.constant 0 : i32
    return %arg0, %c0_i32, %c0_i32_0 : i32, i32, i32
  }
  func.func @transform_1(%arg0: i32) -> (i32, i32) {
    %c0_i32 = arith.constant 0 : i32
    %c0_i32_0 = arith.constant 0 : i32
    %c0_i32_1 = arith.constant 0 : i32
    return %c0_i32, %c0_i32_0 : i32, i32
  }
  func.func @transform_2(%arg0: i32) -> (i32, i32) {
    %c0_i32 = arith.constant 0 : i32
    %c0_i32_0 = arith.constant 0 : i32
    %c0_i32_1 = arith.constant 0 : i32
    return %c0_i32, %c0_i32_0 : i32, i32
  }
  func.func @transform_3(%arg0: i32) -> (i32, i32) {
    %c0_i32 = arith.constant 0 : i32
    %c0_i32_0 = arith.constant 0 : i32
    %c0_i32_1 = arith.constant 0 : i32
    return %c0_i32, %c0_i32_0 : i32, i32
  }
  func.func @transform_4(%arg0: i32) -> (i32, i32) {
    %c0_i32 = arith.constant 0 : i32
    %c0_i32_0 = arith.constant 0 : i32
    %c0_i32_1 = arith.constant 0 : i32
    return %c0_i32, %c0_i32_0 : i32, i32
  }
  func.func @transform_5(%arg0: i32) -> (i32, i32) {
    %c0_i32 = arith.constant 0 : i32
    %c0_i32_0 = arith.constant 0 : i32
    %c0_i32_1 = arith.constant 0 : i32
    return %c0_i32, %c0_i32_0 : i32, i32
  }
  func.func @transform_6(%arg0: i32) -> (i32, i32, i32) {
    %c0_i32 = arith.constant 0 : i32
    %c0_i32_0 = arith.constant 0 : i32
    %c0_i32_1 = arith.constant 0 : i32
    %c0_i32_2 = arith.constant 0 : i32
    return %c0_i32, %c0_i32_0, %c0_i32_1 : i32, i32, i32
  }
  func.func @transform_7(%arg0: i32) -> (i32, i32, i32) {
    %c0_i32 = arith.constant 0 : i32
    %c0_i32_0 = arith.constant 0 : i32
    %c0_i32_1 = arith.constant 0 : i32
    %c0_i32_2 = arith.constant 0 : i32
    return %c0_i32, %c0_i32_0, %c0_i32_1 : i32, i32, i32
  }
  func.func @transform_8(%arg0: i32) -> (i32, i32, i32) {
    %c0_i32 = arith.constant 0 : i32
    %c0_i32_0 = arith.constant 0 : i32
    %c0_i32_1 = arith.constant 0 : i32
    %c0_i32_2 = arith.constant 0 : i32
    return %c0_i32, %c0_i32_0, %c0_i32_1 : i32, i32, i32
  }
  func.func @transform_9(%arg0: i32) -> (i32, i32) {
    %c0_i32 = arith.constant 0 : i32
    %c0_i32_0 = arith.constant 0 : i32
    %c0_i32_1 = arith.constant 0 : i32
    return %c0_i32, %c0_i32_0 : i32, i32
  }
  func.func @transform_10(%arg0: i32) -> (i32, i32) {
    %c0_i32 = arith.constant 0 : i32
    %c0_i32_0 = arith.constant 0 : i32
    %c0_i32_1 = arith.constant 0 : i32
    return %c0_i32, %c0_i32_0 : i32, i32
  }
  func.func @transform_11(%arg0: i32) -> (i32, i32) {
    %c0_i32 = arith.constant 0 : i32
    %c0_i32_0 = arith.constant 0 : i32
    %c0_i32_1 = arith.constant 0 : i32
    return %c0_i32, %c0_i32_0 : i32, i32
  }
  func.func @transform_12(%arg0: i32) -> (i32, i32) {
    %c0_i32 = arith.constant 0 : i32
    %c0_i32_0 = arith.constant 0 : i32
    %c0_i32_1 = arith.constant 0 : i32
    return %c0_i32, %c0_i32_0 : i32, i32
  }
  func.func @transform_13(%arg0: i32) -> (i32, i32) {
    %c0_i32 = arith.constant 0 : i32
    %c0_i32_0 = arith.constant 0 : i32
    %c0_i32_1 = arith.constant 0 : i32
    return %c0_i32, %c0_i32_0 : i32, i32
  }
  func.func @transform_14(%arg0: i32) -> (i32, i32) {
    %c0_i32 = arith.constant 0 : i32
    %c0_i32_0 = arith.constant 0 : i32
    %c0_i32_1 = arith.constant 0 : i32
    return %c0_i32, %c0_i32_0 : i32, i32
  }
  func.func @transform_15(%arg0: i32) -> (i32, i32, i32) {
    %c0_i32 = arith.constant 0 : i32
    %c0_i32_0 = arith.constant 0 : i32
    %c0_i32_1 = arith.constant 0 : i32
    return %arg0, %c0_i32, %c0_i32_0 : i32, i32, i32
  }
}

</mosaic_0001>

<llo_original>
// kernel: tpu_custom_call.1
$region0: #{tpu_custom_call.1}
  #allocation0 [shape = 'u32[]', space=smem, size = 0x4, offset = 0x4, fixed_abs, tag = 'smem constant byte address 0x4 - core index']
  #allocation1 [shape = 'u32[144,128]{1,0:T(1,128)}', space=vmem, size = 0x12000, scoped, tag = 'internal scratch']
  #allocation2 [shape = 'f32[1,1]{1,0:T(1,128)S(1)}', space=vmem, size = 0x200, scoped, tag = 'scoped memory for tpu_custom_call.1']
  %s0 = inlined_call_operand.vmem [shape: f32[1,2,4], index: 0, kind: input, shape index: {}]
  %s1 = inlined_call_operand.vmem [shape: f32[4,32], index: 1, kind: input, shape index: {}]
  %s2 = inlined_call_operand.vmem [shape: f32[1,32], index: 2, kind: input, shape index: {}]
  %s3 = inlined_call_operand.vmem [shape: f32[16,65], index: 3, kind: input, shape index: {}]
  %s4 = inlined_call_operand.vmem [shape: f32[65,16], index: 4, kind: input, shape index: {}]
  %s5 = inlined_call_operand.vmem [shape: f32[8,512], index: 5, kind: input, shape index: {}]
  %s6 = inlined_call_operand.vmem [shape: f32[4,512,64], index: 6, kind: input, shape index: {}]
  %s7 = inlined_call_operand.vmem [shape: f32[4,32,32], index: 7, kind: input, shape index: {}]
  %s8 = inlined_call_operand.vmem [shape: f32[4,1,32], index: 8, kind: input, shape index: {}]
  %s9 = inlined_call_operand.vmem [shape: f32[32,256], index: 9, kind: input, shape index: {}]
  %s10 = inlined_call_operand.vmem [shape: f32[1,256], index: 10, kind: input, shape index: {}]
  %s11 = inlined_call_operand.vmem [shape: f32[256,2], index: 11, kind: input, shape index: {}]
  %s12 = inlined_call_operand.vmem [shape: f32[1,2], index: 12, kind: input, shape index: {}]
  %s13 = inlined_call_operand.vmem [shape: f32[1,2], index: 13, kind: input, shape index: {}]
  %s14 = inlined_call_operand.<no memory space> [shape: f32[1,1], index: 14, kind: input, shape index: {}]
  %s15 = inlined_call_operand.hbm [shape: f32[1,1,2], index: 15, kind: output, shape index: {}]
  %s16 = sld [smem:[#allocation0]]
  $region70: #{tpu_custom_call.1} parent=0
    _
  %s18 = ssub.s32 1, %s16
  %s19 = scalar_select 0, %s18, %s16
  %v20 = vstv %s14
  %21 = vst [vmem:[#allocation2] sm:$0x1] %v20
  $region1: #{tpu_custom_call.1} parent=0
    #allocation3 [shape = 'u8[512]{0}', space=vmem, size = 0x400, scoped, tag = 'output window, operand 0, single buffered']
    #allocation4 [shape = 's32[1]{0}', space=sflag, size = 0x4, scoped, tag = 'scoped memory for tpu_custom_call.1']
    %22 = vsyncpa [#allocation4], 0
    // Predicated region
    $region2: #{tpu_custom_call.1} parent=1 // pred_check
      _
    $region3: #{tpu_custom_call.1} parent=1 // pred_check_branch
      %24 = sbr.rel (0) target = $region5
    $region4: #{tpu_custom_call.1} parent=1 // pred_region
      _
    $region5: #{tpu_custom_call.1} parent=1 // pred_fallthru
      _
    // Predicated region
    $region6: #{tpu_custom_call.1} parent=1 // pred_check
      _
    $region7: #{tpu_custom_call.1} parent=1 // pred_check_branch
      %26 = sbr.rel (0) target = $region9
    $region8: #{tpu_custom_call.1} parent=1 // pred_region
      _
    $region9: #{tpu_custom_call.1} parent=1 // pred_fallthru
      _
    // Predicated region
    $region10: #{tpu_custom_call.1} parent=1 // pred_check
      _
    $region11: #{tpu_custom_call.1} parent=1 // pred_check_branch
      %28 = sbr.rel (0) target = $region13
    $region12: #{tpu_custom_call.1} parent=1 // pred_region
      _
    $region13: #{tpu_custom_call.1} parent=1 // pred_fallthru
      _
    // Predicated region
    $region14: #{tpu_custom_call.1} parent=1 // pred_check
      _
    $region15: #{tpu_custom_call.1} parent=1 // pred_check_branch
      %30 = sbr.rel (0) target = $region17
    $region16: #{tpu_custom_call.1} parent=1 // pred_region
      _
    $region17: #{tpu_custom_call.1} parent=1 // pred_fallthru
      _
    // Predicated region
    $region18: #{tpu_custom_call.1} parent=1 // pred_check
      _
    $region19: #{tpu_custom_call.1} parent=1 // pred_check_branch
      %32 = sbr.rel (0) target = $region21
    $region20: #{tpu_custom_call.1} parent=1 // pred_region
      _
    $region21: #{tpu_custom_call.1} parent=1 // pred_fallthru
      _
    // Predicated region
    $region22: #{tpu_custom_call.1} parent=1 // pred_check
      _
    $region23: #{tpu_custom_call.1} parent=1 // pred_check_branch
      %34 = sbr.rel (0) target = $region25
    $region24: #{tpu_custom_call.1} parent=1 // pred_region
      _
    $region25: #{tpu_custom_call.1} parent=1 // pred_fallthru
      _
    // Predicated region
    $region26: #{tpu_custom_call.1} parent=1 // pred_check
      _
    $region27: #{tpu_custom_call.1} parent=1 // pred_check_branch
      %36 = sbr.rel (0) target = $region29
    $region28: #{tpu_custom_call.1} parent=1 // pred_region
      _
    $region29: #{tpu_custom_call.1} parent=1 // pred_fallthru
      _
    // Predicated region
    $region30: #{tpu_custom_call.1} parent=1 // pred_check
      _
    $region31: #{tpu_custom_call.1} parent=1 // pred_check_branch
      %38 = sbr.rel (0) target = $region33
    $region32: #{tpu_custom_call.1} parent=1 // pred_region
      _
    $region33: #{tpu_custom_call.1} parent=1 // pred_fallthru
      _
    // Predicated region
    $region34: #{tpu_custom_call.1} parent=1 // pred_check
      _
    $region35: #{tpu_custom_call.1} parent=1 // pred_check_branch
      %40 = sbr.rel (0) target = $region37
    $region36: #{tpu_custom_call.1} parent=1 // pred_region
      _
    $region37: #{tpu_custom_call.1} parent=1 // pred_fallthru
      _
    // Predicated region
    $region38: #{tpu_custom_call.1} parent=1 // pred_check
      _
    $region39: #{tpu_custom_call.1} parent=1 // pred_check_branch
      %42 = sbr.rel (0) target = $region41
    $region40: #{tpu_custom_call.1} parent=1 // pred_region
      _
    $region41: #{tpu_custom_call.1} parent=1 // pred_fallthru
      _
    // Predicated region
    $region42: #{tpu_custom_call.1} parent=1 // pred_check
      _
    $region43: #{tpu_custom_call.1} parent=1 // pred_check_branch
      %44 = sbr.rel (0) target = $region45
    $region44: #{tpu_custom_call.1} parent=1 // pred_region
      _
    $region45: #{tpu_custom_call.1} parent=1 // pred_fallthru
      _
    // Predicated region
    $region46: #{tpu_custom_call.1} parent=1 // pred_check
      _
    $region47: #{tpu_custom_call.1} parent=1 // pred_check_branch
      %46 = sbr.rel (0) target = $region49
    $region48: #{tpu_custom_call.1} parent=1 // pred_region
      _
    $region49: #{tpu_custom_call.1} parent=1 // pred_fallthru
      _
    // Predicated region
    $region50: #{tpu_custom_call.1} parent=1 // pred_check
      _
    $region51: #{tpu_custom_call.1} parent=1 // pred_check_branch
      %48 = sbr.rel (0) target = $region53
    $region52: #{tpu_custom_call.1} parent=1 // pred_region
      _
    $region53: #{tpu_custom_call.1} parent=1 // pred_fallthru
      _
    // Predicated region
    $region54: #{tpu_custom_call.1} parent=1 // pred_check
      _
    $region55: #{tpu_custom_call.1} parent=1 // pred_check_branch
      %50 = sbr.rel (0) target = $region57
    $region56: #{tpu_custom_call.1} parent=1 // pred_region
      _
    $region57: #{tpu_custom_call.1} parent=1 // pred_fallthru
      _
    // Predicated region
    $region58: #{tpu_custom_call.1} parent=1 // pred_check
      _
    $region59: #{tpu_custom_call.1} parent=1 // pred_check_branch
      %52 = sbr.rel (0) target = $region61
    $region60: #{tpu_custom_call.1} parent=1 // pred_region
      _
    $region61: #{tpu_custom_call.1} parent=1 // pred_fallthru
      _
    %v53 = vld [vmem:[%s0] sm:$0x3]
    %v54 = vld [vmem:[%s1] sm:$0xf]
    %v55 = vld [vmem:[%s2] sm:$0x1]
    %v57 = vlaneseq
    %v58 = vshrl.u32 %v57, 7
    %v59 = vsub.s32 0, %v58
    %v60 = vrot.slane %v55, %v59
    %vm62 = vcmask 31744
    %v64 = vsel %vm62, %v53, 0
    %vm66 = vcmask 1043456
    %v68 = vsel %vm66, %v54, 0
    %70 = vmatprep.subr.mxu0 0.0
    %71 = vmatpush1.msra.mxu0 %v68
    %72 = vmatprep.subr.mxu0 0.0
    %73 = vmatpush1.msra.mxu0 0.0
    %74 = vmatprep.subr.mxu0 0.0
    %75 = vmatpush1.msra.mxu0 0.0
    %76 = vmatprep.subr.mxu0 0.0
    %77 = vmatpush1.msra.mxu0 0.0
    %78 = vmatprep.subr.mxu0 0.0
    %79 = vmatpush1.msra.mxu0 0.0
    %80 = vmatprep.subr.mxu0 0.0
    %81 = vmatpush1.msra.mxu0 0.0
    %82 = vmatprep.subr.mxu0 0.0
    %83 = vmatpush1.msra.mxu0 0.0
    %84 = vmatprep.subr.mxu0 0.0
    %85 = vmatpush1.msra.mxu0 0.0
    %86 = vmatprep.subr.mxu0 0.0
    %87 = vmatpush1.msra.mxu0 0.0
    %88 = vmatprep.subr.mxu0 0.0
    %89 = vmatpush1.msra.mxu0 0.0
    %90 = vmatprep.subr.mxu0 0.0
    %91 = vmatpush1.msra.mxu0 0.0
    %92 = vmatprep.subr.mxu0 0.0
    %93 = vmatpush1.msra.mxu0 0.0
    %94 = vmatprep.subr.mxu0 0.0
    %95 = vmatpush1.msra.mxu0 0.0
    %96 = vmatprep.subr.mxu0 0.0
    %97 = vmatpush1.msra.mxu0 0.0
    %98 = vmatprep.subr.mxu0 0.0
    %99 = vmatpush1.msra.mxu0 0.0
    %100 = vmatprep.subr.mxu0 0.0
    %101 = vmatpush1.msra.mxu0 0.0
    %102 = vmatprep.subr.mxu0 0.0
    %103 = vmatpush1.msra.mxu0 0.0
    %104 = vmatprep.subr.mxu0 0.0
    %105 = vmatpush1.msra.mxu0 0.0
    %106 = vmatprep.subr.mxu0 0.0
    %107 = vmatpush1.msra.mxu0 0.0
    %108 = vmatprep.subr.mxu0 0.0
    %109 = vmatpush1.msra.mxu0 0.0
    %110 = vmatprep.subr.mxu0 0.0
    %111 = vmatpush1.msra.mxu0 0.0
    %112 = vmatprep.subr.mxu0 0.0
    %113 = vmatpush1.msra.mxu0 0.0
    %114 = vmatprep.subr.mxu0 0.0
    %115 = vmatpush1.msra.mxu0 0.0
    %116 = vmatprep.subr.mxu0 0.0
    %117 = vmatpush1.msra.mxu0 0.0
    %118 = vmatprep.subr.mxu0 0.0
    %119 = vmatpush1.msra.mxu0 0.0
    %120 = vmatprep.subr.mxu0 0.0
    %121 = vmatpush1.msra.mxu0 0.0
    %122 = vmatprep.subr.mxu0 0.0
    %123 = vmatpush1.msra.mxu0 0.0
    %124 = vmatprep.subr.mxu0 0.0
    %125 = vmatpush1.msra.mxu0 0.0
    %126 = vmatprep.subr.mxu0 0.0
    %127 = vmatpush1.msra.mxu0 0.0
    %128 = vmatprep.subr.mxu0 0.0
    %129 = vmatpush1.msra.mxu0 0.0
    %130 = vmatprep.subr.mxu0 0.0
    %131 = vmatpush1.msra.mxu0 0.0
    %132 = vmatprep.subr.mxu0 0.0
    %133 = vmatpush1.msra.mxu0 0.0
    %134 = vmatprep.mubr.f32.mxu0 0.0
    %135 = vmatmul.mubr.f32.gmra.mrb[0].mxu0 %v64
    %v136 = vpop.f32.mrb[0].mxu0
    %v137 = vadd.f32 %v60, %v136
    %v138 = vpop.f32.mrb[0].mxu0
    %139 = vdwg.mxu0
    %vm140 = vcmask 1041408
    %v141 = vsel %vm140, %v137, 0.0
    %v142 = vld [vmem:[%s3] sm:$0xff]
    %v143 = vld [vmem:[%s3 + $0x8] sm:$0xff]
    %v144 = vld [vmem:[%s4] sm:$0xff]
    %v145 = vld [vmem:[%s4 + $0x8] sm:$0xff]
    %v146 = vld [vmem:[%s4 + $0x10] sm:$0xff]
    %v147 = vld [vmem:[%s4 + $0x18] sm:$0xff]
    %v148 = vld [vmem:[%s4 + $0x20] sm:$0xff]
    %v149 = vld [vmem:[%s4 + $0x28] sm:$0xff]
    %v150 = vld [vmem:[%s4 + $0x30] sm:$0xff]
    %v151 = vld [vmem:[%s4 + $0x38] sm:$0xff]
    %v152 = vld [vmem:[%s4 + $0x40] sm:$0x1]
    %v153 = vld [vmem:[%s5] sm:$0xff]
    %v154 = vld [vmem:[%s5 + $0x8] sm:$0xff]
    %v155 = vld [vmem:[%s5 + $0x10] sm:$0xff]
    %v156 = vld [vmem:[%s5 + $0x18] sm:$0xff]
    %v157 = vld [vmem:[%s7] sm:$0xff]
    %v158 = vld [vmem:[%s7 + $0x8] sm:$0xff]
    %v159 = vld [vmem:[%s7 + $0x10] sm:$0xff]
    %v160 = vld [vmem:[%s7 + $0x18] sm:$0xff]
    %v161 = vld [vmem:[%s8] sm:$0x1]
    %v163 = vlaneseq
    %v164 = vshrl.u32 %v163, 7
    %v165 = vsub.s32 0, %v164
    %v166 = vrot.slane %v161, %v165
    %vm168 = vcmask 261120
    %v170 = vsel %vm168, %v141, 0
    %v173 = vsel %vm168, 0.0, 0
    %175 = vmatprep.subr.mxu0 0.0
    %176 = vmatpush1.msra.mxu0 %v157
    %177 = vmatprep.subr.mxu0 0.0
    %178 = vmatpush1.msra.mxu0 %v158
    %179 = vmatprep.subr.mxu0 0.0
    %180 = vmatpush1.msra.mxu0 %v159
    %181 = vmatprep.subr.mxu0 0.0
    %182 = vmatpush1.msra.mxu0 %v160
    %183 = vmatprep.subr.mxu0 0.0
    %184 = vmatpush1.msra.mxu0 0.0
    %185 = vmatprep.subr.mxu0 0.0
    %186 = vmatpush1.msra.mxu0 0.0
    %187 = vmatprep.subr.mxu0 0.0
    %188 = vmatpush1.msra.mxu0 0.0
    %189 = vmatprep.subr.mxu0 0.0
    %190 = vmatpush1.msra.mxu0 0.0
    %191 = vmatprep.subr.mxu0 0.0
    %192 = vmatpush1.msra.mxu0 0.0
    %193 = vmatprep.subr.mxu0 0.0
    %194 = vmatpush1.msra.mxu0 0.0
    %195 = vmatprep.subr.mxu0 0.0
    %196 = vmatpush1.msra.mxu0 0.0
    %197 = vmatprep.subr.mxu0 0.0
    %198 = vmatpush1.msra.mxu0 0.0
    %199 = vmatprep.subr.mxu0 0.0
    %200 = vmatpush1.msra.mxu0 0.0
    %201 = vmatprep.subr.mxu0 0.0
    %202 = vmatpush1.msra.mxu0 0.0
    %203 = vmatprep.subr.mxu0 0.0
    %204 = vmatpush1.msra.mxu0 0.0
    %205 = vmatprep.subr.mxu0 0.0
    %206 = vmatpush1.msra.mxu0 0.0
    %207 = vmatprep.subr.mxu0 0.0
    %208 = vmatpush1.msra.mxu0 0.0
    %209 = vmatprep.subr.mxu0 0.0
    %210 = vmatpush1.msra.mxu0 0.0
    %211 = vmatprep.subr.mxu0 0.0
    %212 = vmatpush1.msra.mxu0 0.0
    %213 = vmatprep.subr.mxu0 0.0
    %214 = vmatpush1.msra.mxu0 0.0
    %215 = vmatprep.subr.mxu0 0.0
    %216 = vmatpush1.msra.mxu0 0.0
    %217 = vmatprep.subr.mxu0 0.0
    %218 = vmatpush1.msra.mxu0 0.0
    %219 = vmatprep.subr.mxu0 0.0
    %220 = vmatpush1.msra.mxu0 0.0
    %221 = vmatprep.subr.mxu0 0.0
    %222 = vmatpush1.msra.mxu0 0.0
    %223 = vmatprep.subr.mxu0 0.0
    %224 = vmatpush1.msra.mxu0 0.0
    %225 = vmatprep.subr.mxu0 0.0
    %226 = vmatpush1.msra.mxu0 0.0
    %227 = vmatprep.subr.mxu0 0.0
    %228 = vmatpush1.msra.mxu0 0.0
    %229 = vmatprep.subr.mxu0 0.0
    %230 = vmatpush1.msra.mxu0 0.0
    %231 = vmatprep.subr.mxu0 0.0
    %232 = vmatpush1.msra.mxu0 0.0
    %233 = vmatprep.subr.mxu0 0.0
    %234 = vmatpush1.msra.mxu0 0.0
    %235 = vmatprep.subr.mxu0 0.0
    %236 = vmatpush1.msra.mxu0 0.0
    %237 = vmatprep.subr.mxu0 0.0
    %238 = vmatpush1.msra.mxu0 0.0
    %239 = vmatprep.mubr.f32.mxu0 0.0
    %240 = vmatmul.mubr.f32.gmra.mrb[0].mxu0 %v170
    %v241 = vpop.f32.mrb[0].mxu0
    %v242 = vadd.f32 %v166, %v241
    %v243 = vpop.f32.mrb[0].mxu0
    %244 = vmatprep.mubr.f32.mxu0 0.0
    %245 = vmatmul.mubr.f32.gmra.mrb[0].mxu0 %v173
    %v246 = vpop.f32.mrb[0].mxu0
    %v247 = vadd.f32 %v166, %v246
    %v248 = vpop.f32.mrb[0].mxu0
    %249 = vmatprep.mubr.f32.mxu0 0.0
    %250 = vmatmul.mubr.f32.gmra.mrb[0].mxu0 %v173
    %v251 = vpop.f32.mrb[0].mxu0
    %v252 = vadd.f32 %v166, %v251
    %v253 = vpop.f32.mrb[0].mxu0
    %254 = vmatprep.mubr.f32.mxu0 0.0
    %255 = vmatmul.mubr.f32.gmra.mrb[0].mxu0 %v173
    %v256 = vpop.f32.mrb[0].mxu0
    %v257 = vadd.f32 %v166, %v256
    %v258 = vpop.f32.mrb[0].mxu0
    %259 = vmatprep.mubr.f32.mxu0 0.0
    %260 = vmatmul.mubr.f32.gmra.mrb[0].mxu0 %v173
    %v261 = vpop.f32.mrb[0].mxu0
    %v262 = vadd.f32 %v166, %v261
    %v263 = vpop.f32.mrb[0].mxu0
    %264 = vmatprep.mubr.f32.mxu0 0.0
    %265 = vmatmul.mubr.f32.gmra.mrb[0].mxu0 %v173
    %v266 = vpop.f32.mrb[0].mxu0
    %v267 = vadd.f32 %v166, %v266
    %v268 = vpop.f32.mrb[0].mxu0
    %269 = vmatprep.mubr.f32.mxu0 0.0
    %270 = vmatmul.mubr.f32.gmra.mrb[0].mxu0 %v173
    %v271 = vpop.f32.mrb[0].mxu0
    %v272 = vadd.f32 %v166, %v271
    %v273 = vpop.f32.mrb[0].mxu0
    %274 = vmatprep.mubr.f32.mxu0 0.0
    %275 = vmatmul.mubr.f32.gmra.mrb[0].mxu0 %v173
    %v276 = vpop.f32.mrb[0].mxu0
    %v277 = vadd.f32 %v166, %v276
    %v278 = vpop.f32.mrb[0].mxu0
    %279 = vmatprep.mubr.f32.mxu0 0.0
    %280 = vmatmul.mubr.f32.gmra.mrb[0].mxu0 %v173
    %v281 = vpop.f32.mrb[0].mxu0
    %v282 = vadd.f32 %v166, %v281
    %v283 = vpop.f32.mrb[0].mxu0
    %284 = vdwg.mxu0
    %vm285 = vcmask 531456
    %v287 = vsel %vm285, %v142, 0
    %v290 = vsel %vm285, %v143, 0
    %vm292 = vcmask 1040384
    %v293 = vsel %vm292, 0.0, 0
    %295 = vmatprep.subr.mxu0 0.0
    %296 = vmatpush1.msra.mxu0 %v141
    %297 = vmatprep.subr.mxu0 0.0
    %298 = vmatpush1.msra.mxu0 0.0
    %299 = vmatprep.subr.mxu0 0.0
    %300 = vmatpush1.msra.mxu0 0.0
    %301 = vmatprep.subr.mxu0 0.0
    %302 = vmatpush1.msra.mxu0 0.0
    %303 = vmatprep.subr.mxu0 0.0
    %304 = vmatpush1.msra.mxu0 0.0
    %305 = vmatprep.subr.mxu0 0.0
    %306 = vmatpush1.msra.mxu0 0.0
    %307 = vmatprep.subr.mxu0 0.0
    %308 = vmatpush1.msra.mxu0 0.0
    %309 = vmatprep.subr.mxu0 0.0
    %310 = vmatpush1.msra.mxu0 0.0
    %311 = vmatprep.subr.mxu0 0.0
    %312 = vmatpush1.msra.mxu0 %v293
    %313 = vmatprep.subr.mxu0 0.0
    %314 = vmatpush1.msra.mxu0 0.0
    %315 = vmatprep.subr.mxu0 0.0
    %316 = vmatpush1.msra.mxu0 0.0
    %317 = vmatprep.subr.mxu0 0.0
    %318 = vmatpush1.msra.mxu0 0.0
    %319 = vmatprep.subr.mxu0 0.0
    %320 = vmatpush1.msra.mxu0 0.0
    %321 = vmatprep.subr.mxu0 0.0
    %322 = vmatpush1.msra.mxu0 0.0
    %323 = vmatprep.subr.mxu0 0.0
    %324 = vmatpush1.msra.mxu0 0.0
    %325 = vmatprep.subr.mxu0 0.0
    %326 = vmatpush1.msra.mxu0 0.0
    %327 = vmatprep.subr.mxu0 0.0
    %328 = vmatpush1.msra.mxu0 0.0
    %329 = vmatprep.subr.mxu0 0.0
    %330 = vmatpush1.msra.mxu0 0.0
    %331 = vmatprep.subr.mxu0 0.0
    %332 = vmatpush1.msra.mxu0 0.0
    %333 = vmatprep.subr.mxu0 0.0
    %334 = vmatpush1.msra.mxu0 0.0
    %335 = vmatprep.subr.mxu0 0.0
    %336 = vmatpush1.msra.mxu0 0.0
    %337 = vmatprep.subr.mxu0 0.0
    %338 = vmatpush1.msra.mxu0 0.0
    %339 = vmatprep.subr.mxu0 0.0
    %340 = vmatpush1.msra.mxu0 0.0
    %341 = vmatprep.subr.mxu0 0.0
    %342 = vmatpush1.msra.mxu0 0.0
    %343 = vmatprep.subr.mxu0 0.0
    %344 = vmatpush1.msra.mxu0 0.0
    %345 = vmatprep.subr.mxu0 0.0
    %346 = vmatpush1.msra.mxu0 0.0
    %347 = vmatprep.subr.mxu0 0.0
    %348 = vmatpush1.msra.mxu0 0.0
    %349 = vmatprep.subr.mxu0 0.0
    %350 = vmatpush1.msra.mxu0 0.0
    %351 = vmatprep.subr.mxu0 0.0
    %352 = vmatpush1.msra.mxu0 0.0
    %353 = vmatprep.subr.mxu0 0.0
    %354 = vmatpush1.msra.mxu0 0.0
    %355 = vmatprep.subr.mxu0 0.0
    %356 = vmatpush1.msra.mxu0 0.0
    %357 = vmatprep.subr.mxu0 0.0
    %358 = vmatpush1.msra.mxu0 0.0
    %359 = vmatprep.mubr.f32.mxu0 0.0
    %360 = vmatmul.mubr.f32.gmra.mrb[0].mxu0 %v287
    %v361 = vpop.f32.mrb[0].mxu0
    %v362 = vadd.f32 0.0, %v361
    %v363 = vpop.f32.mrb[0].mxu0
    %364 = vmatprep.mubr.f32.mxu0 0.0
    %365 = vmatmul.mubr.f32.gmra.mrb[0].mxu0 %v290
    %v366 = vpop.f32.mrb[0].mxu0
    %v367 = vadd.f32 0.0, %v366
    %v368 = vpop.f32.mrb[0].mxu0
    %369 = vdwg.mxu0
    %371 = vrot.lane.b32.xlu0 %v367, 32
    %v372 = vpop.permute.xlu0 %371
    %v374 = vsel %vm168, %v362, %v372
    %376 = vrot.lane.b32.xlu0 %v374, 64
    %v377 = vpop.permute.xlu0 %376
    %vm379 = vcmask 523264
    %v380 = vsel %vm379, %v374, %v377
    %v381 = vmul.f32 %v380, %v153
    %v382 = vmul.f32 %v380, %v154
    %v383 = vmul.f32 %v380, %v155
    %v384 = vmul.f32 %v380, %v156
    %v385 = vld [vmem:[%s6] sm:$0xff]
    %v386 = vld [vmem:[%s6 + $0x8] sm:$0xff]
    %v387 = vld [vmem:[%s6 + $0x10] sm:$0xff]
    %v388 = vld [vmem:[%s6 + $0x18] sm:$0xff]
    %v389 = vld [vmem:[%s6 + $0x20] sm:$0xff]
    %v390 = vld [vmem:[%s6 + $0x28] sm:$0xff]
    %v391 = vld [vmem:[%s6 + $0x30] sm:$0xff]
    %v392 = vld [vmem:[%s6 + $0x38] sm:$0xff]
    %v393 = vld [vmem:[%s6 + $0x40] sm:$0xff]
    %v394 = vld [vmem:[%s6 + $0x48] sm:$0xff]
    %v395 = vld [vmem:[%s6 + $0x50] sm:$0xff]
    %v396 = vld [vmem:[%s6 + $0x58] sm:$0xff]
    %v397 = vld [vmem:[%s6 + $0x60] sm:$0xff]
    %v398 = vld [vmem:[%s6 + $0x68] sm:$0xff]
    %v399 = vld [vmem:[%s6 + $0x70] sm:$0xff]
    %v400 = vld [vmem:[%s6 + $0x78] sm:$0xff]
    %v401 = vld [vmem:[%s6 + $0x80] sm:$0xff]
    %v402 = vld [vmem:[%s6 + $0x88] sm:$0xff]
    %v403 = vld [vmem:[%s6 + $0x90] sm:$0xff]
    %v404 = vld [vmem:[%s6 + $0x98] sm:$0xff]
    %v405 = vld [vmem:[%s6 + $0xa0] sm:$0xff]
    %v406 = vld [vmem:[%s6 + $0xa8] sm:$0xff]
    %v407 = vld [vmem:[%s6 + $0xb0] sm:$0xff]
    %v408 = vld [vmem:[%s6 + $0xb8] sm:$0xff]
    %v409 = vld [vmem:[%s6 + $0xc0] sm:$0xff]
    %v410 = vld [vmem:[%s6 + $0xc8] sm:$0xff]
    %v411 = vld [vmem:[%s6 + $0xd0] sm:$0xff]
    %v412 = vld [vmem:[%s6 + $0xd8] sm:$0xff]
    %v413 = vld [vmem:[%s6 + $0xe0] sm:$0xff]
    %v414 = vld [vmem:[%s6 + $0xe8] sm:$0xff]
    %v415 = vld [vmem:[%s6 + $0xf0] sm:$0xff]
    %v416 = vld [vmem:[%s6 + $0xf8] sm:$0xff]
    %v417 = vld [vmem:[%s6 + $0x100] sm:$0xff]
    %v418 = vld [vmem:[%s6 + $0x108] sm:$0xff]
    %v419 = vld [vmem:[%s6 + $0x110] sm:$0xff]
    %v420 = vld [vmem:[%s6 + $0x118] sm:$0xff]
    %v421 = vld [vmem:[%s6 + $0x120] sm:$0xff]
    %v422 = vld [vmem:[%s6 + $0x128] sm:$0xff]
    %v423 = vld [vmem:[%s6 + $0x130] sm:$0xff]
    %v424 = vld [vmem:[%s6 + $0x138] sm:$0xff]
    %v425 = vld [vmem:[%s6 + $0x140] sm:$0xff]
    %v426 = vld [vmem:[%s6 + $0x148] sm:$0xff]
    %v427 = vld [vmem:[%s6 + $0x150] sm:$0xff]
    %v428 = vld [vmem:[%s6 + $0x158] sm:$0xff]
    %v429 = vld [vmem:[%s6 + $0x160] sm:$0xff]
    %v430 = vld [vmem:[%s6 + $0x168] sm:$0xff]
    %v431 = vld [vmem:[%s6 + $0x170] sm:$0xff]
    %v432 = vld [vmem:[%s6 + $0x178] sm:$0xff]
    %v433 = vld [vmem:[%s6 + $0x180] sm:$0xff]
    %v434 = vld [vmem:[%s6 + $0x188] sm:$0xff]
    %v435 = vld [vmem:[%s6 + $0x190] sm:$0xff]
    %v436 = vld [vmem:[%s6 + $0x198] sm:$0xff]
    %v437 = vld [vmem:[%s6 + $0x1a0] sm:$0xff]
    %v438 = vld [vmem:[%s6 + $0x1a8] sm:$0xff]
    %v439 = vld [vmem:[%s6 + $0x1b0] sm:$0xff]
    %v440 = vld [vmem:[%s6 + $0x1b8] sm:$0xff]
    %v441 = vld [vmem:[%s6 + $0x1c0] sm:$0xff]
    %v442 = vld [vmem:[%s6 + $0x1c8] sm:$0xff]
    %v443 = vld [vmem:[%s6 + $0x1d0] sm:$0xff]
    %v444 = vld [vmem:[%s6 + $0x1d8] sm:$0xff]
    %v445 = vld [vmem:[%s6 + $0x1e0] sm:$0xff]
    %v446 = vld [vmem:[%s6 + $0x1e8] sm:$0xff]
    %v447 = vld [vmem:[%s6 + $0x1f0] sm:$0xff]
    %v448 = vld [vmem:[%s6 + $0x1f8] sm:$0xff]
    %449 = vmatprep.subr.mxu0 0.0
    %450 = vmatpush1.msra.mxu0 %v385
    %451 = vmatprep.subr.mxu0 0.0
    %452 = vmatpush1.msra.mxu0 %v386
    %453 = vmatprep.subr.mxu0 0.0
    %454 = vmatpush1.msra.mxu0 %v387
    %455 = vmatprep.subr.mxu0 0.0
    %456 = vmatpush1.msra.mxu0 %v388
    %457 = vmatprep.subr.mxu0 0.0
    %458 = vmatpush1.msra.mxu0 %v389
    %459 = vmatprep.subr.mxu0 0.0
    %460 = vmatpush1.msra.mxu0 %v390
    %461 = vmatprep.subr.mxu0 0.0
    %462 = vmatpush1.msra.mxu0 %v391
    %463 = vmatprep.subr.mxu0 0.0
    %464 = vmatpush1.msra.mxu0 %v392
    %465 = vmatprep.subr.mxu0 0.0
    %466 = vmatpush1.msra.mxu0 %v393
    %467 = vmatprep.subr.mxu0 0.0
    %468 = vmatpush1.msra.mxu0 %v394
    %469 = vmatprep.subr.mxu0 0.0
    %470 = vmatpush1.msra.mxu0 %v395
    %471 = vmatprep.subr.mxu0 0.0
    %472 = vmatpush1.msra.mxu0 %v396
    %473 = vmatprep.subr.mxu0 0.0
    %474 = vmatpush1.msra.mxu0 %v397
    %475 = vmatprep.subr.mxu0 0.0
    %476 = vmatpush1.msra.mxu0 %v398
    %477 = vmatprep.subr.mxu0 0.0
    %478 = vmatpush1.msra.mxu0 %v399
    %479 = vmatprep.subr.mxu0 0.0
    %480 = vmatpush1.msra.mxu0 %v400
    %481 = vmatprep.subr.mxu0 0.0
    %482 = vmatpush1.msra.mxu0 %v401
    %483 = vmatprep.subr.mxu0 0.0
    %484 = vmatpush1.msra.mxu0 %v402
    %485 = vmatprep.subr.mxu0 0.0
    %486 = vmatpush1.msra.mxu0 %v403
    %487 = vmatprep.subr.mxu0 0.0
    %488 = vmatpush1.msra.mxu0 %v404
    %489 = vmatprep.subr.mxu0 0.0
    %490 = vmatpush1.msra.mxu0 %v405
    %491 = vmatprep.subr.mxu0 0.0
    %492 = vmatpush1.msra.mxu0 %v406
    %493 = vmatprep.subr.mxu0 0.0
    %494 = vmatpush1.msra.mxu0 %v407
    %495 = vmatprep.subr.mxu0 0.0
    %496 = vmatpush1.msra.mxu0 %v408
    %497 = vmatprep.subr.mxu0 0.0
    %498 = vmatpush1.msra.mxu0 %v409
    %499 = vmatprep.subr.mxu0 0.0
    %500 = vmatpush1.msra.mxu0 %v410
    %501 = vmatprep.subr.mxu0 0.0
    %502 = vmatpush1.msra.mxu0 %v411
    %503 = vmatprep.subr.mxu0 0.0
    %504 = vmatpush1.msra.mxu0 %v412
    %505 = vmatprep.subr.mxu0 0.0
    %506 = vmatpush1.msra.mxu0 %v413
    %507 = vmatprep.subr.mxu0 0.0
    %508 = vmatpush1.msra.mxu0 %v414
    %509 = vmatprep.subr.mxu0 0.0
    %510 = vmatpush1.msra.mxu0 %v415
    %511 = vmatprep.subr.mxu0 0.0
    %512 = vmatpush1.msra.mxu0 %v416
    %513 = vmatprep.mubr.f32.mxu0 %v382
    %514 = vmatmul.mubr.f32.gmra.mrb[0].mxu0 %v381
    %v515 = vpop.f32.mrb[0].mxu0
    %v516 = vadd.f32 0.0, %v515
    %v517 = vpop.f32.mrb[0].mxu0
    %518 = vdwg.mxu0
    %519 = vmatprep.subr.mxu0 0.0
    %520 = vmatpush1.msra.mxu0 %v417
    %521 = vmatprep.subr.mxu0 0.0
    %522 = vmatpush1.msra.mxu0 %v418
    %523 = vmatprep.subr.mxu0 0.0
    %524 = vmatpush1.msra.mxu0 %v419
    %525 = vmatprep.subr.mxu0 0.0
    %526 = vmatpush1.msra.mxu0 %v420
    %527 = vmatprep.subr.mxu0 0.0
    %528 = vmatpush1.msra.mxu0 %v421
    %529 = vmatprep.subr.mxu0 0.0
    %530 = vmatpush1.msra.mxu0 %v422
    %531 = vmatprep.subr.mxu0 0.0
    %532 = vmatpush1.msra.mxu0 %v423
    %533 = vmatprep.subr.mxu0 0.0
    %534 = vmatpush1.msra.mxu0 %v424
    %535 = vmatprep.subr.mxu0 0.0
    %536 = vmatpush1.msra.mxu0 %v425
    %537 = vmatprep.subr.mxu0 0.0
    %538 = vmatpush1.msra.mxu0 %v426
    %539 = vmatprep.subr.mxu0 0.0
    %540 = vmatpush1.msra.mxu0 %v427
    %541 = vmatprep.subr.mxu0 0.0
    %542 = vmatpush1.msra.mxu0 %v428
    %543 = vmatprep.subr.mxu0 0.0
    %544 = vmatpush1.msra.mxu0 %v429
    %545 = vmatprep.subr.mxu0 0.0
    %546 = vmatpush1.msra.mxu0 %v430
    %547 = vmatprep.subr.mxu0 0.0
    %548 = vmatpush1.msra.mxu0 %v431
    %549 = vmatprep.subr.mxu0 0.0
    %550 = vmatpush1.msra.mxu0 %v432
    %551 = vmatprep.subr.mxu0 0.0
    %552 = vmatpush1.msra.mxu0 %v433
    %553 = vmatprep.subr.mxu0 0.0
    %554 = vmatpush1.msra.mxu0 %v434
    %555 = vmatprep.subr.mxu0 0.0
    %556 = vmatpush1.msra.mxu0 %v435
    %557 = vmatprep.subr.mxu0 0.0
    %558 = vmatpush1.msra.mxu0 %v436
    %559 = vmatprep.subr.mxu0 0.0
    %560 = vmatpush1.msra.mxu0 %v437
    %561 = vmatprep.subr.mxu0 0.0
    %562 = vmatpush1.msra.mxu0 %v438
    %563 = vmatprep.subr.mxu0 0.0
    %564 = vmatpush1.msra.mxu0 %v439
    %565 = vmatprep.subr.mxu0 0.0
    %566 = vmatpush1.msra.mxu0 %v440
    %567 = vmatprep.subr.mxu0 0.0
    %568 = vmatpush1.msra.mxu0 %v441
    %569 = vmatprep.subr.mxu0 0.0
    %570 = vmatpush1.msra.mxu0 %v442
    %571 = vmatprep.subr.mxu0 0.0
    %572 = vmatpush1.msra.mxu0 %v443
    %573 = vmatprep.subr.mxu0 0.0
    %574 = vmatpush1.msra.mxu0 %v444
    %575 = vmatprep.subr.mxu0 0.0
    %576 = vmatpush1.msra.mxu0 %v445
    %577 = vmatprep.subr.mxu0 0.0
    %578 = vmatpush1.msra.mxu0 %v446
    %579 = vmatprep.subr.mxu0 0.0
    %580 = vmatpush1.msra.mxu0 %v447
    %581 = vmatprep.subr.mxu0 0.0
    %582 = vmatpush1.msra.mxu0 %v448
    %583 = vmatprep.mubr.f32.mxu0 %v384
    %584 = vmatmul.mubr.f32.gmra.mrb[0].mxu0 %v383
    %v585 = vpop.f32.mrb[0].mxu0
    %v586 = vadd.f32 %v516, %v585
    %v587 = vpop.f32.mrb[0].mxu0
    %588 = vdwg.mxu0
    %590 = vrot.lane.b32.xlu0 %v586, 96
    %v591 = vpop.permute.xlu0 %590
    %vm593 = vcmask 130048
    %v595 = vsel %vm593, %v144, 0
    %v598 = vsel %vm593, %v145, 0
    %v601 = vsel %vm593, %v146, 0
    %v604 = vsel %vm593, %v147, 0
    %v607 = vsel %vm593, %v148, 0
    %v610 = vsel %vm593, %v149, 0
    %v613 = vsel %vm593, %v150, 0
    %v616 = vsel %vm593, %v151, 0
    %v619 = vsel %vm593, %v152, 0
    %621 = vmatprep.subr.mxu0 0.0
    %622 = vmatpush1.msra.mxu0 %v586
    %623 = vmatprep.subr.mxu0 0.0
    %624 = vmatpush1.msra.mxu0 %v591
    %625 = vmatprep.subr.mxu0 0.0
    %626 = vmatpush1.msra.mxu0 0.0
    %627 = vmatprep.subr.mxu0 0.0
    %628 = vmatpush1.msra.mxu0 0.0
    %629 = vmatprep.subr.mxu0 0.0
    %630 = vmatpush1.msra.mxu0 0.0
    %631 = vmatprep.subr.mxu0 0.0
    %632 = vmatpush1.msra.mxu0 0.0
    %633 = vmatprep.subr.mxu0 0.0
    %634 = vmatpush1.msra.mxu0 0.0
    %635 = vmatprep.subr.mxu0 0.0
    %636 = vmatpush1.msra.mxu0 0.0
    %637 = vmatprep.subr.mxu0 0.0
    %638 = vmatpush1.msra.mxu0 0.0
    %639 = vmatprep.subr.mxu0 0.0
    %640 = vmatpush1.msra.mxu0 0.0
    %641 = vmatprep.subr.mxu0 0.0
    %642 = vmatpush1.msra.mxu0 0.0
    %643 = vmatprep.subr.mxu0 0.0
    %644 = vmatpush1.msra.mxu0 0.0
    %645 = vmatprep.subr.mxu0 0.0
    %646 = vmatpush1.msra.mxu0 0.0
    %647 = vmatprep.subr.mxu0 0.0
    %648 = vmatpush1.msra.mxu0 0.0
    %649 = vmatprep.subr.mxu0 0.0
    %650 = vmatpush1.msra.mxu0 0.0
    %651 = vmatprep.subr.mxu0 0.0
    %652 = vmatpush1.msra.mxu0 0.0
    %653 = vmatprep.subr.mxu0 0.0
    %654 = vmatpush1.msra.mxu0 0.0
    %655 = vmatprep.subr.mxu0 0.0
    %656 = vmatpush1.msra.mxu0 0.0
    %657 = vmatprep.subr.mxu0 0.0
    %658 = vmatpush1.msra.mxu0 0.0
    %659 = vmatprep.subr.mxu0 0.0
    %660 = vmatpush1.msra.mxu0 0.0
    %661 = vmatprep.subr.mxu0 0.0
    %662 = vmatpush1.msra.mxu0 0.0
    %663 = vmatprep.subr.mxu0 0.0
    %664 = vmatpush1.msra.mxu0 0.0
    %665 = vmatprep.subr.mxu0 0.0
    %666 = vmatpush1.msra.mxu0 0.0
    %667 = vmatprep.subr.mxu0 0.0
    %668 = vmatpush1.msra.mxu0 0.0
    %669 = vmatprep.subr.mxu0 0.0
    %670 = vmatpush1.msra.mxu0 0.0
    %671 = vmatprep.subr.mxu0 0.0
    %672 = vmatpush1.msra.mxu0 0.0
    %673 = vmatprep.subr.mxu0 0.0
    %674 = vmatpush1.msra.mxu0 0.0
    %675 = vmatprep.subr.mxu0 0.0
    %676 = vmatpush1.msra.mxu0 0.0
    %677 = vmatprep.subr.mxu0 0.0
    %678 = vmatpush1.msra.mxu0 0.0
    %679 = vmatprep.subr.mxu0 0.0
    %680 = vmatpush1.msra.mxu0 0.0
    %681 = vmatprep.subr.mxu0 0.0
    %682 = vmatpush1.msra.mxu0 0.0
    %683 = vmatprep.subr.mxu0 0.0
    %684 = vmatpush1.msra.mxu0 0.0
    %685 = vmatprep.mubr.f32.mxu0 0.0
    %686 = vmatmul.mubr.f32.gmra.mrb[0].mxu0 %v595
    %v687 = vpop.f32.mrb[0].mxu0
    %v688 = vadd.f32 0.0, %v687
    %v689 = vpop.f32.mrb[0].mxu0
    %690 = vmatprep.mubr.f32.mxu0 0.0
    %691 = vmatmul.mubr.f32.gmra.mrb[0].mxu0 %v598
    %v692 = vpop.f32.mrb[0].mxu0
    %v693 = vadd.f32 0.0, %v692
    %v694 = vpop.f32.mrb[0].mxu0
    %695 = vmatprep.mubr.f32.mxu0 0.0
    %696 = vmatmul.mubr.f32.gmra.mrb[0].mxu0 %v601
    %v697 = vpop.f32.mrb[0].mxu0
    %v698 = vadd.f32 0.0, %v697
    %v699 = vpop.f32.mrb[0].mxu0
    %700 = vmatprep.mubr.f32.mxu0 0.0
    %701 = vmatmul.mubr.f32.gmra.mrb[0].mxu0 %v604
    %v702 = vpop.f32.mrb[0].mxu0
    %v703 = vadd.f32 0.0, %v702
    %v704 = vpop.f32.mrb[0].mxu0
    %705 = vmatprep.mubr.f32.mxu0 0.0
    %706 = vmatmul.mubr.f32.gmra.mrb[0].mxu0 %v607
    %v707 = vpop.f32.mrb[0].mxu0
    %v708 = vadd.f32 0.0, %v707
    %v709 = vpop.f32.mrb[0].mxu0
    %710 = vmatprep.mubr.f32.mxu0 0.0
    %711 = vmatmul.mubr.f32.gmra.mrb[0].mxu0 %v610
    %v712 = vpop.f32.mrb[0].mxu0
    %v713 = vadd.f32 0.0, %v712
    %v714 = vpop.f32.mrb[0].mxu0
    %715 = vmatprep.mubr.f32.mxu0 0.0
    %716 = vmatmul.mubr.f32.gmra.mrb[0].mxu0 %v613
    %v717 = vpop.f32.mrb[0].mxu0
    %v718 = vadd.f32 0.0, %v717
    %v719 = vpop.f32.mrb[0].mxu0
    %720 = vmatprep.mubr.f32.mxu0 0.0
    %721 = vmatmul.mubr.f32.gmra.mrb[0].mxu0 %v616
    %v722 = vpop.f32.mrb[0].mxu0
    %v723 = vadd.f32 0.0, %v722
    %v724 = vpop.f32.mrb[0].mxu0
    %725 = vmatprep.mubr.f32.mxu0 0.0
    %726 = vmatmul.mubr.f32.gmra.mrb[0].mxu0 %v619
    %v727 = vpop.f32.mrb[0].mxu0
    %v728 = vadd.f32 0.0, %v727
    %v729 = vpop.f32.mrb[0].mxu0
    %730 = vdwg.mxu0
    %v731 = vadd.f32 %v242, %v688
    %v732 = vadd.f32 %v247, %v693
    %v733 = vadd.f32 %v252, %v698
    %v734 = vadd.f32 %v257, %v703
    %v735 = vadd.f32 %v262, %v708
    %v736 = vadd.f32 %v267, %v713
    %v737 = vadd.f32 %v272, %v718
    %v738 = vadd.f32 %v277, %v723
    %v739 = vadd.f32 %v282, %v728
    %v740 = vmax.f32 %v731, 0.0
    %v741 = vmax.f32 %v732, 0.0
    %v742 = vmax.f32 %v733, 0.0
    %v743 = vmax.f32 %v734, 0.0
    %v744 = vmax.f32 %v735, 0.0
    %v745 = vmax.f32 %v736, 0.0
    %v746 = vmax.f32 %v737, 0.0
    %v747 = vmax.f32 %v738, 0.0
    %v748 = vmax.f32 %v739, 0.0
    %s749 = scalar_lea.vmem %s7, 32
    %v750 = vld [vmem:[%s749] sm:$0xff]
    %v751 = vld [vmem:[%s749 + $0x8] sm:$0xff]
    %v752 = vld [vmem:[%s749 + $0x10] sm:$0xff]
    %v753 = vld [vmem:[%s749 + $0x18] sm:$0xff]
    %s754 = scalar_lea.vmem %s8, 1
    %v755 = vld [vmem:[%s754] sm:$0x1]
    %v757 = vlaneseq
    %v758 = vshrl.u32 %v757, 7
    %v759 = vsub.s32 0, %v758
    %v760 = vrot.slane %v755, %v759
    %v763 = vsel %vm168, %v740, 0
    %v766 = vsel %vm168, %v741, 0
    %v769 = vsel %vm168, %v742, 0
    %v772 = vsel %vm168, %v743, 0
    %v775 = vsel %vm168, %v744, 0
    %v778 = vsel %vm168, %v745, 0
    %v781 = vsel %vm168, %v746, 0
    %v784 = vsel %vm168, %v747, 0
    %v787 = vsel %vm168, %v748, 0
    %789 = vmatprep.subr.mxu0 0.0
    %790 = vmatpush1.msra.mxu0 %v750
    %791 = vmatprep.subr.mxu0 0.0
    %792 = vmatpush1.msra.mxu0 %v751
    %793 = vmatprep.subr.mxu0 0.0
    %794 = vmatpush1.msra.mxu0 %v752
    %795 = vmatprep.subr.mxu0 0.0
    %796 = vmatpush1.msra.mxu0 %v753
    %797 = vmatprep.subr.mxu0 0.0
    %798 = vmatpush1.msra.mxu0 0.0
    %799 = vmatprep.subr.mxu0 0.0
    %800 = vmatpush1.msra.mxu0 0.0
    %801 = vmatprep.subr.mxu0 0.0
    %802 = vmatpush1.msra.mxu0 0.0
    %803 = vmatprep.subr.mxu0 0.0
    %804 = vmatpush1.msra.mxu0 0.0
    %805 = vmatprep.subr.mxu0 0.0
    %806 = vmatpush1.msra.mxu0 0.0
    %807 = vmatprep.subr.mxu0 0.0
    %808 = vmatpush1.msra.mxu0 0.0
    %809 = vmatprep.subr.mxu0 0.0
    %810 = vmatpush1.msra.mxu0 0.0
    %811 = vmatprep.subr.mxu0 0.0
    %812 = vmatpush1.msra.mxu0 0.0
    %813 = vmatprep.subr.mxu0 0.0
    %814 = vmatpush1.msra.mxu0 0.0
    %815 = vmatprep.subr.mxu0 0.0
    %816 = vmatpush1.msra.mxu0 0.0
    %817 = vmatprep.subr.mxu0 0.0
    %818 = vmatpush1.msra.mxu0 0.0
    %819 = vmatprep.subr.mxu0 0.0
    %820 = vmatpush1.msra.mxu0 0.0
    %821 = vmatprep.subr.mxu0 0.0
    %822 = vmatpush1.msra.mxu0 0.0
    %823 = vmatprep.subr.mxu0 0.0
    %824 = vmatpush1.msra.mxu0 0.0
    %825 = vmatprep.subr.mxu0 0.0
    %826 = vmatpush1.msra.mxu0 0.0
    %827 = vmatprep.subr.mxu0 0.0
    %828 = vmatpush1.msra.mxu0 0.0
    %829 = vmatprep.subr.mxu0 0.0
    %830 = vmatpush1.msra.mxu0 0.0
    %831 = vmatprep.subr.mxu0 0.0
    %832 = vmatpush1.msra.mxu0 0.0
    %833 = vmatprep.subr.mxu0 0.0
    %834 = vmatpush1.msra.mxu0 0.0
    %835 = vmatprep.subr.mxu0 0.0
    %836 = vmatpush1.msra.mxu0 0.0
    %837 = vmatprep.subr.mxu0 0.0
    %838 = vmatpush1.msra.mxu0 0.0
    %839 = vmatprep.subr.mxu0 0.0
    %840 = vmatpush1.msra.mxu0 0.0
    %841 = vmatprep.subr.mxu0 0.0
    %842 = vmatpush1.msra.mxu0 0.0
    %843 = vmatprep.subr.mxu0 0.0
    %844 = vmatpush1.msra.mxu0 0.0
    %845 = vmatprep.subr.mxu0 0.0
    %846 = vmatpush1.msra.mxu0 0.0
    %847 = vmatprep.subr.mxu0 0.0
    %848 = vmatpush1.msra.mxu0 0.0
    %849 = vmatprep.subr.mxu0 0.0
    %850 = vmatpush1.msra.mxu0 0.0
    %851 = vmatprep.subr.mxu0 0.0
    %852 = vmatpush1.msra.mxu0 0.0
    %853 = vmatprep.mubr.f32.mxu0 0.0
    %854 = vmatmul.mubr.f32.gmra.mrb[0].mxu0 %v763
    %v855 = vpop.f32.mrb[0].mxu0
    %v856 = vadd.f32 %v760, %v855
    %v857 = vpop.f32.mrb[0].mxu0
    %858 = vmatprep.mubr.f32.mxu0 0.0
    %859 = vmatmul.mubr.f32.gmra.mrb[0].mxu0 %v766
    %v860 = vpop.f32.mrb[0].mxu0
    %v861 = vadd.f32 %v760, %v860
    %v862 = vpop.f32.mrb[0].mxu0
    %863 = vmatprep.mubr.f32.mxu0 0.0
    %864 = vmatmul.mubr.f32.gmra.mrb[0].mxu0 %v769
    %v865 = vpop.f32.mrb[0].mxu0
    %v866 = vadd.f32 %v760, %v865
    %v867 = vpop.f32.mrb[0].mxu0
    %868 = vmatprep.mubr.f32.mxu0 0.0
    %869 = vmatmul.mubr.f32.gmra.mrb[0].mxu0 %v772
    %v870 = vpop.f32.mrb[0].mxu0
    %v871 = vadd.f32 %v760, %v870
    %v872 = vpop.f32.mrb[0].mxu0
    %873 = vmatprep.mubr.f32.mxu0 0.0
    %874 = vmatmul.mubr.f32.gmra.mrb[0].mxu0 %v775
    %v875 = vpop.f32.mrb[0].mxu0
    %v876 = vadd.f32 %v760, %v875
    %v877 = vpop.f32.mrb[0].mxu0
    %878 = vmatprep.mubr.f32.mxu0 0.0
    %879 = vmatmul.mubr.f32.gmra.mrb[0].mxu0 %v778
    %v880 = vpop.f32.mrb[0].mxu0
    %v881 = vadd.f32 %v760, %v880
    %v882 = vpop.f32.mrb[0].mxu0
    %883 = vmatprep.mubr.f32.mxu0 0.0
    %884 = vmatmul.mubr.f32.gmra.mrb[0].mxu0 %v781
    %v885 = vpop.f32.mrb[0].mxu0
    %v886 = vadd.f32 %v760, %v885
    %v887 = vpop.f32.mrb[0].mxu0
    %888 = vmatprep.mubr.f32.mxu0 0.0
    %889 = vmatmul.mubr.f32.gmra.mrb[0].mxu0 %v784
    %v890 = vpop.f32.mrb[0].mxu0
    %v891 = vadd.f32 %v760, %v890
    %v892 = vpop.f32.mrb[0].mxu0
    %893 = vmatprep.mubr.f32.mxu0 0.0
    %894 = vmatmul.mubr.f32.gmra.mrb[0].mxu0 %v787
    %v895 = vpop.f32.mrb[0].mxu0
    %v896 = vadd.f32 %v760, %v895
    %v897 = vpop.f32.mrb[0].mxu0
    %898 = vdwg.mxu0
    %v899 = vsel %vm292, %v748, 0
    %901 = vmatprep.subr.mxu0 0.0
    %902 = vmatpush1.msra.mxu0 %v740
    %903 = vmatprep.subr.mxu0 0.0
    %904 = vmatpush1.msra.mxu0 %v741
    %905 = vmatprep.subr.mxu0 0.0
    %906 = vmatpush1.msra.mxu0 %v742
    %907 = vmatprep.subr.mxu0 0.0
    %908 = vmatpush1.msra.mxu0 %v743
    %909 = vmatprep.subr.mxu0 0.0
    %910 = vmatpush1.msra.mxu0 %v744
    %911 = vmatprep.subr.mxu0 0.0
    %912 = vmatpush1.msra.mxu0 %v745
    %913 = vmatprep.subr.mxu0 0.0
    %914 = vmatpush1.msra.mxu0 %v746
    %915 = vmatprep.subr.mxu0 0.0
    %916 = vmatpush1.msra.mxu0 %v747
    %917 = vmatprep.subr.mxu0 0.0
    %918 = vmatpush1.msra.mxu0 %v899
    %919 = vmatprep.subr.mxu0 0.0
    %920 = vmatpush1.msra.mxu0 0.0
    %921 = vmatprep.subr.mxu0 0.0
    %922 = vmatpush1.msra.mxu0 0.0
    %923 = vmatprep.subr.mxu0 0.0
    %924 = vmatpush1.msra.mxu0 0.0
    %925 = vmatprep.subr.mxu0 0.0
    %926 = vmatpush1.msra.mxu0 0.0
    %927 = vmatprep.subr.mxu0 0.0
    %928 = vmatpush1.msra.mxu0 0.0
    %929 = vmatprep.subr.mxu0 0.0
    %930 = vmatpush1.msra.mxu0 0.0
    %931 = vmatprep.subr.mxu0 0.0
    %932 = vmatpush1.msra.mxu0 0.0
    %933 = vmatprep.subr.mxu0 0.0
    %934 = vmatpush1.msra.mxu0 0.0
    %935 = vmatprep.subr.mxu0 0.0
    %936 = vmatpush1.msra.mxu0 0.0
    %937 = vmatprep.subr.mxu0 0.0
    %938 = vmatpush1.msra.mxu0 0.0
    %939 = vmatprep.subr.mxu0 0.0
    %940 = vmatpush1.msra.mxu0 0.0
    %941 = vmatprep.subr.mxu0 0.0
    %942 = vmatpush1.msra.mxu0 0.0
    %943 = vmatprep.subr.mxu0 0.0
    %944 = vmatpush1.msra.mxu0 0.0
    %945 = vmatprep.subr.mxu0 0.0
    %946 = vmatpush1.msra.mxu0 0.0
    %947 = vmatprep.subr.mxu0 0.0
    %948 = vmatpush1.msra.mxu0 0.0
    %949 = vmatprep.subr.mxu0 0.0
    %950 = vmatpush1.msra.mxu0 0.0
    %951 = vmatprep.subr.mxu0 0.0
    %952 = vmatpush1.msra.mxu0 0.0
    %953 = vmatprep.subr.mxu0 0.0
    %954 = vmatpush1.msra.mxu0 0.0
    %955 = vmatprep.subr.mxu0 0.0
    %956 = vmatpush1.msra.mxu0 0.0
    %957 = vmatprep.subr.mxu0 0.0
    %958 = vmatpush1.msra.mxu0 0.0
    %959 = vmatprep.subr.mxu0 0.0
    %960 = vmatpush1.msra.mxu0 0.0
    %961 = vmatprep.subr.mxu0 0.0
    %962 = vmatpush1.msra.mxu0 0.0
    %963 = vmatprep.subr.mxu0 0.0
    %964 = vmatpush1.msra.mxu0 0.0
    %965 = vmatprep.mubr.f32.mxu0 0.0
    %966 = vmatmul.mubr.f32.gmra.mrb[0].mxu0 %v287
    %v967 = vpop.f32.mrb[0].mxu0
    %v968 = vadd.f32 0.0, %v967
    %v969 = vpop.f32.mrb[0].mxu0
    %970 = vmatprep.mubr.f32.mxu0 0.0
    %971 = vmatmul.mubr.f32.gmra.mrb[0].mxu0 %v290
    %v972 = vpop.f32.mrb[0].mxu0
    %v973 = vadd.f32 0.0, %v972
    %v974 = vpop.f32.mrb[0].mxu0
    %975 = vdwg.mxu0
    %977 = vrot.lane.b32.xlu0 %v973, 32
    %v978 = vpop.permute.xlu0 %977
    %v980 = vsel %vm168, %v968, %v978
    %982 = vrot.lane.b32.xlu0 %v980, 64
    %v983 = vpop.permute.xlu0 %982
    %v985 = vsel %vm379, %v980, %v983
    %v986 = vmul.f32 %v985, %v153
    %v987 = vmul.f32 %v985, %v154
    %v988 = vmul.f32 %v985, %v155
    %v989 = vmul.f32 %v985, %v156
    %s990 = scalar_lea.vmem %s6, 512
    %v991 = vld [vmem:[%s990] sm:$0xff]
    %v992 = vld [vmem:[%s990 + $0x8] sm:$0xff]
    %v993 = vld [vmem:[%s990 + $0x10] sm:$0xff]
    %v994 = vld [vmem:[%s990 + $0x18] sm:$0xff]
    %v995 = vld [vmem:[%s990 + $0x20] sm:$0xff]
    %v996 = vld [vmem:[%s990 + $0x28] sm:$0xff]
    %v997 = vld [vmem:[%s990 + $0x30] sm:$0xff]
    %v998 = vld [vmem:[%s990 + $0x38] sm:$0xff]
    %v999 = vld [vmem:[%s990 + $0x40] sm:$0xff]
    %v1000 = vld [vmem:[%s990 + $0x48] sm:$0xff]
    %v1001 = vld [vmem:[%s990 + $0x50] sm:$0xff]
    %v1002 = vld [vmem:[%s990 + $0x58] sm:$0xff]
    %v1003 = vld [vmem:[%s990 + $0x60] sm:$0xff]
    %v1004 = vld [vmem:[%s990 + $0x68] sm:$0xff]
    %v1005 = vld [vmem:[%s990 + $0x70] sm:$0xff]
    %v1006 = vld [vmem:[%s990 + $0x78] sm:$0xff]
    %v1007 = vld [vmem:[%s990 + $0x80] sm:$0xff]
    %v1008 = vld [vmem:[%s990 + $0x88] sm:$0xff]
    %v1009 = vld [vmem:[%s990 + $0x90] sm:$0xff]
    %v1010 = vld [vmem:[%s990 + $0x98] sm:$0xff]
    %v1011 = vld [vmem:[%s990 + $0xa0] sm:$0xff]
    %v1012 = vld [vmem:[%s990 + $0xa8] sm:$0xff]
    %v1013 = vld [vmem:[%s990 + $0xb0] sm:$0xff]
    %v1014 = vld [vmem:[%s990 + $0xb8] sm:$0xff]
    %v1015 = vld [vmem:[%s990 + $0xc0] sm:$0xff]
    %v1016 = vld [vmem:[%s990 + $0xc8] sm:$0xff]
    %v1017 = vld [vmem:[%s990 + $0xd0] sm:$0xff]
    %v1018 = vld [vmem:[%s990 + $0xd8] sm:$0xff]
    %v1019 = vld [vmem:[%s990 + $0xe0] sm:$0xff]
    %v1020 = vld [vmem:[%s990 + $0xe8] sm:$0xff]
    %v1021 = vld [vmem:[%s990 + $0xf0] sm:$0xff]
    %v1022 = vld [vmem:[%s990 + $0xf8] sm:$0xff]
    %v1023 = vld [vmem:[%s990 + $0x100] sm:$0xff]
    %v1024 = vld [vmem:[%s990 + $0x108] sm:$0xff]
    %v1025 = vld [vmem:[%s990 + $0x110] sm:$0xff]
    %v1026 = vld [vmem:[%s990 + $0x118] sm:$0xff]
    %v1027 = vld [vmem:[%s990 + $0x120] sm:$0xff]
    %v1028 = vld [vmem:[%s990 + $0x128] sm:$0xff]
    %v1029 = vld [vmem:[%s990 + $0x130] sm:$0xff]
    %v1030 = vld [vmem:[%s990 + $0x138] sm:$0xff]
    %v1031 = vld [vmem:[%s990 + $0x140] sm:$0xff]
    %v1032 = vld [vmem:[%s990 + $0x148] sm:$0xff]
    %v1033 = vld [vmem:[%s990 + $0x150] sm:$0xff]
    %v1034 = vld [vmem:[%s990 + $0x158] sm:$0xff]
    %v1035 = vld [vmem:[%s990 + $0x160] sm:$0xff]
    %v1036 = vld [vmem:[%s990 + $0x168] sm:$0xff]
    %v1037 = vld [vmem:[%s990 + $0x170] sm:$0xff]
    %v1038 = vld [vmem:[%s990 + $0x178] sm:$0xff]
    %v1039 = vld [vmem:[%s990 + $0x180] sm:$0xff]
    %v1040 = vld [vmem:[%s990 + $0x188] sm:$0xff]
    %v1041 = vld [vmem:[%s990 + $0x190] sm:$0xff]
    %v1042 = vld [vmem:[%s990 + $0x198] sm:$0xff]
    %v1043 = vld [vmem:[%s990 + $0x1a0] sm:$0xff]
    %v1044 = vld [vmem:[%s990 + $0x1a8] sm:$0xff]
    %v1045 = vld [vmem:[%s990 + $0x1b0] sm:$0xff]
    %v1046 = vld [vmem:[%s990 + $0x1b8] sm:$0xff]
    %v1047 = vld [vmem:[%s990 + $0x1c0] sm:$0xff]
    %v1048 = vld [vmem:[%s990 + $0x1c8] sm:$0xff]
    %v1049 = vld [vmem:[%s990 + $0x1d0] sm:$0xff]
    %v1050 = vld [vmem:[%s990 + $0x1d8] sm:$0xff]
    %v1051 = vld [vmem:[%s990 + $0x1e0] sm:$0xff]
    %v1052 = vld [vmem:[%s990 + $0x1e8] sm:$0xff]
    %v1053 = vld [vmem:[%s990 + $0x1f0] sm:$0xff]
    %v1054 = vld [vmem:[%s990 + $0x1f8] sm:$0xff]
    %1055 = vmatprep.subr.mxu0 0.0
    %1056 = vmatpush1.msra.mxu0 %v991
    %1057 = vmatprep.subr.mxu0 0.0
    %1058 = vmatpush1.msra.mxu0 %v992
    %1059 = vmatprep.subr.mxu0 0.0
    %1060 = vmatpush1.msra.mxu0 %v993
    %1061 = vmatprep.subr.mxu0 0.0
    %1062 = vmatpush1.msra.mxu0 %v994
    %1063 = vmatprep.subr.mxu0 0.0
    %1064 = vmatpush1.msra.mxu0 %v995
    %1065 = vmatprep.subr.mxu0 0.0
    %1066 = vmatpush1.msra.mxu0 %v996
    %1067 = vmatprep.subr.mxu0 0.0
    %1068 = vmatpush1.msra.mxu0 %v997
    %1069 = vmatprep.subr.mxu0 0.0
    %1070 = vmatpush1.msra.mxu0 %v998
    %1071 = vmatprep.subr.mxu0 0.0
    %1072 = vmatpush1.msra.mxu0 %v999
    %1073 = vmatprep.subr.mxu0 0.0
    %1074 = vmatpush1.msra.mxu0 %v1000
    %1075 = vmatprep.subr.mxu0 0.0
    %1076 = vmatpush1.msra.mxu0 %v1001
    %1077 = vmatprep.subr.mxu0 0.0
    %1078 = vmatpush1.msra.mxu0 %v1002
    %1079 = vmatprep.subr.mxu0 0.0
    %1080 = vmatpush1.msra.mxu0 %v1003
    %1081 = vmatprep.subr.mxu0 0.0
    %1082 = vmatpush1.msra.mxu0 %v1004
    %1083 = vmatprep.subr.mxu0 0.0
    %1084 = vmatpush1.msra.mxu0 %v1005
    %1085 = vmatprep.subr.mxu0 0.0
    %1086 = vmatpush1.msra.mxu0 %v1006
    %1087 = vmatprep.subr.mxu0 0.0
    %1088 = vmatpush1.msra.mxu0 %v1007
    %1089 = vmatprep.subr.mxu0 0.0
    %1090 = vmatpush1.msra.mxu0 %v1008
    %1091 = vmatprep.subr.mxu0 0.0
    %1092 = vmatpush1.msra.mxu0 %v1009
    %1093 = vmatprep.subr.mxu0 0.0
    %1094 = vmatpush1.msra.mxu0 %v1010
    %1095 = vmatprep.subr.mxu0 0.0
    %1096 = vmatpush1.msra.mxu0 %v1011
    %1097 = vmatprep.subr.mxu0 0.0
    %1098 = vmatpush1.msra.mxu0 %v1012
    %1099 = vmatprep.subr.mxu0 0.0
    %1100 = vmatpush1.msra.mxu0 %v1013
    %1101 = vmatprep.subr.mxu0 0.0
    %1102 = vmatpush1.msra.mxu0 %v1014
    %1103 = vmatprep.subr.mxu0 0.0
    %1104 = vmatpush1.msra.mxu0 %v1015
    %1105 = vmatprep.subr.mxu0 0.0
    %1106 = vmatpush1.msra.mxu0 %v1016
    %1107 = vmatprep.subr.mxu0 0.0
    %1108 = vmatpush1.msra.mxu0 %v1017
    %1109 = vmatprep.subr.mxu0 0.0
    %1110 = vmatpush1.msra.mxu0 %v1018
    %1111 = vmatprep.subr.mxu0 0.0
    %1112 = vmatpush1.msra.mxu0 %v1019
    %1113 = vmatprep.subr.mxu0 0.0
    %1114 = vmatpush1.msra.mxu0 %v1020
    %1115 = vmatprep.subr.mxu0 0.0
    %1116 = vmatpush1.msra.mxu0 %v1021
    %1117 = vmatprep.subr.mxu0 0.0
    %1118 = vmatpush1.msra.mxu0 %v1022
    %1119 = vmatprep.mubr.f32.mxu0 %v987
    %1120 = vmatmul.mubr.f32.gmra.mrb[0].mxu0 %v986
    %v1121 = vpop.f32.mrb[0].mxu0
    %v1122 = vadd.f32 0.0, %v1121
    %v1123 = vpop.f32.mrb[0].mxu0
    %1124 = vdwg.mxu0
    %1125 = vmatprep.subr.mxu0 0.0
    %1126 = vmatpush1.msra.mxu0 %v1023
    %1127 = vmatprep.subr.mxu0 0.0
    %1128 = vmatpush1.msra.mxu0 %v1024
    %1129 = vmatprep.subr.mxu0 0.0
    %1130 = vmatpush1.msra.mxu0 %v1025
    %1131 = vmatprep.subr.mxu0 0.0
    %1132 = vmatpush1.msra.mxu0 %v1026
    %1133 = vmatprep.subr.mxu0 0.0
    %1134 = vmatpush1.msra.mxu0 %v1027
    %1135 = vmatprep.subr.mxu0 0.0
    %1136 = vmatpush1.msra.mxu0 %v1028
    %1137 = vmatprep.subr.mxu0 0.0
    %1138 = vmatpush1.msra.mxu0 %v1029
    %1139 = vmatprep.subr.mxu0 0.0
    %1140 = vmatpush1.msra.mxu0 %v1030
    %1141 = vmatprep.subr.mxu0 0.0
    %1142 = vmatpush1.msra.mxu0 %v1031
    %1143 = vmatprep.subr.mxu0 0.0
    %1144 = vmatpush1.msra.mxu0 %v1032
    %1145 = vmatprep.subr.mxu0 0.0
    %1146 = vmatpush1.msra.mxu0 %v1033
    %1147 = vmatprep.subr.mxu0 0.0
    %1148 = vmatpush1.msra.mxu0 %v1034
    %1149 = vmatprep.subr.mxu0 0.0
    %1150 = vmatpush1.msra.mxu0 %v1035
    %1151 = vmatprep.subr.mxu0 0.0
    %1152 = vmatpush1.msra.mxu0 %v1036
    %1153 = vmatprep.subr.mxu0 0.0
    %1154 = vmatpush1.msra.mxu0 %v1037
    %1155 = vmatprep.subr.mxu0 0.0
    %1156 = vmatpush1.msra.mxu0 %v1038
    %1157 = vmatprep.subr.mxu0 0.0
    %1158 = vmatpush1.msra.mxu0 %v1039
    %1159 = vmatprep.subr.mxu0 0.0
    %1160 = vmatpush1.msra.mxu0 %v1040
    %1161 = vmatprep.subr.mxu0 0.0
    %1162 = vmatpush1.msra.mxu0 %v1041
    %1163 = vmatprep.subr.mxu0 0.0
    %1164 = vmatpush1.msra.mxu0 %v1042
    %1165 = vmatprep.subr.mxu0 0.0
    %1166 = vmatpush1.msra.mxu0 %v1043
    %1167 = vmatprep.subr.mxu0 0.0
    %1168 = vmatpush1.msra.mxu0 %v1044
    %1169 = vmatprep.subr.mxu0 0.0
    %1170 = vmatpush1.msra.mxu0 %v1045
    %1171 = vmatprep.subr.mxu0 0.0
    %1172 = vmatpush1.msra.mxu0 %v1046
    %1173 = vmatprep.subr.mxu0 0.0
    %1174 = vmatpush1.msra.mxu0 %v1047
    %1175 = vmatprep.subr.mxu0 0.0
    %1176 = vmatpush1.msra.mxu0 %v1048
    %1177 = vmatprep.subr.mxu0 0.0
    %1178 = vmatpush1.msra.mxu0 %v1049
    %1179 = vmatprep.subr.mxu0 0.0
    %1180 = vmatpush1.msra.mxu0 %v1050
    %1181 = vmatprep.subr.mxu0 0.0
    %1182 = vmatpush1.msra.mxu0 %v1051
    %1183 = vmatprep.subr.mxu0 0.0
    %1184 = vmatpush1.msra.mxu0 %v1052
    %1185 = vmatprep.subr.mxu0 0.0
    %1186 = vmatpush1.msra.mxu0 %v1053
    %1187 = vmatprep.subr.mxu0 0.0
    %1188 = vmatpush1.msra.mxu0 %v1054
    %1189 = vmatprep.mubr.f32.mxu0 %v989
    %1190 = vmatmul.mubr.f32.gmra.mrb[0].mxu0 %v988
    %v1191 = vpop.f32.mrb[0].mxu0
    %v1192 = vadd.f32 %v1122, %v1191
    %v1193 = vpop.f32.mrb[0].mxu0
    %1194 = vdwg.mxu0
    %1196 = vrot.lane.b32.xlu0 %v1192, 96
    %v1197 = vpop.permute.xlu0 %1196
    %1199 = vmatprep.subr.mxu0 0.0
    %1200 = vmatpush1.msra.mxu0 %v1192
    %1201 = vmatprep.subr.mxu0 0.0
    %1202 = vmatpush1.msra.mxu0 %v1197
    %1203 = vmatprep.subr.mxu0 0.0
    %1204 = vmatpush1.msra.mxu0 0.0
    %1205 = vmatprep.subr.mxu0 0.0
    %1206 = vmatpush1.msra.mxu0 0.0
    %1207 = vmatprep.subr.mxu0 0.0
    %1208 = vmatpush1.msra.mxu0 0.0
    %1209 = vmatprep.subr.mxu0 0.0
    %1210 = vmatpush1.msra.mxu0 0.0
    %1211 = vmatprep.subr.mxu0 0.0
    %1212 = vmatpush1.msra.mxu0 0.0
    %1213 = vmatprep.subr.mxu0 0.0
    %1214 = vmatpush1.msra.mxu0 0.0
    %1215 = vmatprep.subr.mxu0 0.0
    %1216 = vmatpush1.msra.mxu0 0.0
    %1217 = vmatprep.subr.mxu0 0.0
    %1218 = vmatpush1.msra.mxu0 0.0
    %1219 = vmatprep.subr.mxu0 0.0
    %1220 = vmatpush1.msra.mxu0 0.0
    %1221 = vmatprep.subr.mxu0 0.0
    %1222 = vmatpush1.msra.mxu0 0.0
    %1223 = vmatprep.subr.mxu0 0.0
    %1224 = vmatpush1.msra.mxu0 0.0
    %1225 = vmatprep.subr.mxu0 0.0
    %1226 = vmatpush1.msra.mxu0 0.0
    %1227 = vmatprep.subr.mxu0 0.0
    %1228 = vmatpush1.msra.mxu0 0.0
    %1229 = vmatprep.subr.mxu0 0.0
    %1230 = vmatpush1.msra.mxu0 0.0
    %1231 = vmatprep.subr.mxu0 0.0
    %1232 = vmatpush1.msra.mxu0 0.0
    %1233 = vmatprep.subr.mxu0 0.0
    %1234 = vmatpush1.msra.mxu0 0.0
    %1235 = vmatprep.subr.mxu0 0.0
    %1236 = vmatpush1.msra.mxu0 0.0
    %1237 = vmatprep.subr.mxu0 0.0
    %1238 = vmatpush1.msra.mxu0 0.0
    %1239 = vmatprep.subr.mxu0 0.0
    %1240 = vmatpush1.msra.mxu0 0.0
    %1241 = vmatprep.subr.mxu0 0.0
    %1242 = vmatpush1.msra.mxu0 0.0
    %1243 = vmatprep.subr.mxu0 0.0
    %1244 = vmatpush1.msra.mxu0 0.0
    %1245 = vmatprep.subr.mxu0 0.0
    %1246 = vmatpush1.msra.mxu0 0.0
    %1247 = vmatprep.subr.mxu0 0.0
    %1248 = vmatpush1.msra.mxu0 0.0
    %1249 = vmatprep.subr.mxu0 0.0
    %1250 = vmatpush1.msra.mxu0 0.0
    %1251 = vmatprep.subr.mxu0 0.0
    %1252 = vmatpush1.msra.mxu0 0.0
    %1253 = vmatprep.subr.mxu0 0.0
    %1254 = vmatpush1.msra.mxu0 0.0
    %1255 = vmatprep.subr.mxu0 0.0
    %1256 = vmatpush1.msra.mxu0 0.0
    %1257 = vmatprep.subr.mxu0 0.0
    %1258 = vmatpush1.msra.mxu0 0.0
    %1259 = vmatprep.subr.mxu0 0.0
    %1260 = vmatpush1.msra.mxu0 0.0
    %1261 = vmatprep.subr.mxu0 0.0
    %1262 = vmatpush1.msra.mxu0 0.0
    %1263 = vmatprep.mubr.f32.mxu0 0.0
    %1264 = vmatmul.mubr.f32.gmra.mrb[0].mxu0 %v595
    %v1265 = vpop.f32.mrb[0].mxu0
    %v1266 = vadd.f32 0.0, %v1265
    %v1267 = vpop.f32.mrb[0].mxu0
    %1268 = vmatprep.mubr.f32.mxu0 0.0
    %1269 = vmatmul.mubr.f32.gmra.mrb[0].mxu0 %v598
    %v1270 = vpop.f32.mrb[0].mxu0
    %v1271 = vadd.f32 0.0, %v1270
    %v1272 = vpop.f32.mrb[0].mxu0
    %1273 = vmatprep.mubr.f32.mxu0 0.0
    %1274 = vmatmul.mubr.f32.gmra.mrb[0].mxu0 %v601
    %v1275 = vpop.f32.mrb[0].mxu0
    %v1276 = vadd.f32 0.0, %v1275
    %v1277 = vpop.f32.mrb[0].mxu0
    %1278 = vmatprep.mubr.f32.mxu0 0.0
    %1279 = vmatmul.mubr.f32.gmra.mrb[0].mxu0 %v604
    %v1280 = vpop.f32.mrb[0].mxu0
    %v1281 = vadd.f32 0.0, %v1280
    %v1282 = vpop.f32.mrb[0].mxu0
    %1283 = vmatprep.mubr.f32.mxu0 0.0
    %1284 = vmatmul.mubr.f32.gmra.mrb[0].mxu0 %v607
    %v1285 = vpop.f32.mrb[0].mxu0
    %v1286 = vadd.f32 0.0, %v1285
    %v1287 = vpop.f32.mrb[0].mxu0
    %1288 = vmatprep.mubr.f32.mxu0 0.0
    %1289 = vmatmul.mubr.f32.gmra.mrb[0].mxu0 %v610
    %v1290 = vpop.f32.mrb[0].mxu0
    %v1291 = vadd.f32 0.0, %v1290
    %v1292 = vpop.f32.mrb[0].mxu0
    %1293 = vmatprep.mubr.f32.mxu0 0.0
    %1294 = vmatmul.mubr.f32.gmra.mrb[0].mxu0 %v613
    %v1295 = vpop.f32.mrb[0].mxu0
    %v1296 = vadd.f32 0.0, %v1295
    %v1297 = vpop.f32.mrb[0].mxu0
    %1298 = vmatprep.mubr.f32.mxu0 0.0
    %1299 = vmatmul.mubr.f32.gmra.mrb[0].mxu0 %v616
    %v1300 = vpop.f32.mrb[0].mxu0
    %v1301 = vadd.f32 0.0, %v1300
    %v1302 = vpop.f32.mrb[0].mxu0
    %1303 = vmatprep.mubr.f32.mxu0 0.0
    %1304 = vmatmul.mubr.f32.gmra.mrb[0].mxu0 %v619
    %v1305 = vpop.f32.mrb[0].mxu0
    %v1306 = vadd.f32 0.0, %v1305
    %v1307 = vpop.f32.mrb[0].mxu0
    %1308 = vdwg.mxu0
    %v1309 = vadd.f32 %v856, %v1266
    %v1310 = vadd.f32 %v861, %v1271
    %v1311 = vadd.f32 %v866, %v1276
    %v1312 = vadd.f32 %v871, %v1281
    %v1313 = vadd.f32 %v876, %v1286
    %v1314 = vadd.f32 %v881, %v1291
    %v1315 = vadd.f32 %v886, %v1296
    %v1316 = vadd.f32 %v891, %v1301
    %v1317 = vadd.f32 %v896, %v1306
    %v1318 = vmax.f32 %v1309, 0.0
    %v1319 = vmax.f32 %v1310, 0.0
    %v1320 = vmax.f32 %v1311, 0.0
    %v1321 = vmax.f32 %v1312, 0.0
    %v1322 = vmax.f32 %v1313, 0.0
    %v1323 = vmax.f32 %v1314, 0.0
    %v1324 = vmax.f32 %v1315, 0.0
    %v1325 = vmax.f32 %v1316, 0.0
    %v1326 = vmax.f32 %v1317, 0.0
    %s1327 = scalar_lea.vmem %s7, 64
    %v1328 = vld [vmem:[%s1327] sm:$0xff]
    %v1329 = vld [vmem:[%s1327 + $0x8] sm:$0xff]
    %v1330 = vld [vmem:[%s1327 + $0x10] sm:$0xff]
    %v1331 = vld [vmem:[%s1327 + $0x18] sm:$0xff]
    %s1332 = scalar_lea.vmem %s8, 2
    %v1333 = vld [vmem:[%s1332] sm:$0x1]
    %v1335 = vlaneseq
    %v1336 = vshrl.u32 %v1335, 7
    %v1337 = vsub.s32 0, %v1336
    %v1338 = vrot.slane %v1333, %v1337
    %v1341 = vsel %vm168, %v1318, 0
    %v1344 = vsel %vm168, %v1319, 0
    %v1347 = vsel %vm168, %v1320, 0
    %v1350 = vsel %vm168, %v1321, 0
    %v1353 = vsel %vm168, %v1322, 0
    %v1356 = vsel %vm168, %v1323, 0
    %v1359 = vsel %vm168, %v1324, 0
    %v1362 = vsel %vm168, %v1325, 0
    %v1365 = vsel %vm168, %v1326, 0
    %1367 = vmatprep.subr.mxu0 0.0
    %1368 = vmatpush1.msra.mxu0 %v1328
    %1369 = vmatprep.subr.mxu0 0.0
    %1370 = vmatpush1.msra.mxu0 %v1329
    %1371 = vmatprep.subr.mxu0 0.0
    %1372 = vmatpush1.msra.mxu0 %v1330
    %1373 = vmatprep.subr.mxu0 0.0
    %1374 = vmatpush1.msra.mxu0 %v1331
    %1375 = vmatprep.subr.mxu0 0.0
    %1376 = vmatpush1.msra.mxu0 0.0
    %1377 = vmatprep.subr.mxu0 0.0
    %1378 = vmatpush1.msra.mxu0 0.0
    %1379 = vmatprep.subr.mxu0 0.0
    %1380 = vmatpush1.msra.mxu0 0.0
    %1381 = vmatprep.subr.mxu0 0.0
    %1382 = vmatpush1.msra.mxu0 0.0
    %1383 = vmatprep.subr.mxu0 0.0
    %1384 = vmatpush1.msra.mxu0 0.0
    %1385 = vmatprep.subr.mxu0 0.0
    %1386 = vmatpush1.msra.mxu0 0.0
    %1387 = vmatprep.subr.mxu0 0.0
    %1388 = vmatpush1.msra.mxu0 0.0
    %1389 = vmatprep.subr.mxu0 0.0
    %1390 = vmatpush1.msra.mxu0 0.0
    %1391 = vmatprep.subr.mxu0 0.0
    %1392 = vmatpush1.msra.mxu0 0.0
    %1393 = vmatprep.subr.mxu0 0.0
    %1394 = vmatpush1.msra.mxu0 0.0
    %1395 = vmatprep.subr.mxu0 0.0
    %1396 = vmatpush1.msra.mxu0 0.0
    %1397 = vmatprep.subr.mxu0 0.0
    %1398 = vmatpush1.msra.mxu0 0.0
    %1399 = vmatprep.subr.mxu0 0.0
    %1400 = vmatpush1.msra.mxu0 0.0
    %1401 = vmatprep.subr.mxu0 0.0
    %1402 = vmatpush1.msra.mxu0 0.0
    %1403 = vmatprep.subr.mxu0 0.0
    %1404 = vmatpush1.msra.mxu0 0.0
    %1405 = vmatprep.subr.mxu0 0.0
    %1406 = vmatpush1.msra.mxu0 0.0
    %1407 = vmatprep.subr.mxu0 0.0
    %1408 = vmatpush1.msra.mxu0 0.0
    %1409 = vmatprep.subr.mxu0 0.0
    %1410 = vmatpush1.msra.mxu0 0.0
    %1411 = vmatprep.subr.mxu0 0.0
    %1412 = vmatpush1.msra.mxu0 0.0
    %1413 = vmatprep.subr.mxu0 0.0
    %1414 = vmatpush1.msra.mxu0 0.0
    %1415 = vmatprep.subr.mxu0 0.0
    %1416 = vmatpush1.msra.mxu0 0.0
    %1417 = vmatprep.subr.mxu0 0.0
    %1418 = vmatpush1.msra.mxu0 0.0
    %1419 = vmatprep.subr.mxu0 0.0
    %1420 = vmatpush1.msra.mxu0 0.0
    %1421 = vmatprep.subr.mxu0 0.0
    %1422 = vmatpush1.msra.mxu0 0.0
    %1423 = vmatprep.subr.mxu0 0.0
    %1424 = vmatpush1.msra.mxu0 0.0
    %1425 = vmatprep.subr.mxu0 0.0
    %1426 = vmatpush1.msra.mxu0 0.0
    %1427 = vmatprep.subr.mxu0 0.0
    %1428 = vmatpush1.msra.mxu0 0.0
    %1429 = vmatprep.subr.mxu0 0.0
    %1430 = vmatpush1.msra.mxu0 0.0
    %1431 = vmatprep.mubr.f32.mxu0 0.0
    %1432 = vmatmul.mubr.f32.gmra.mrb[0].mxu0 %v1341
    %v1433 = vpop.f32.mrb[0].mxu0
    %v1434 = vadd.f32 %v1338, %v1433
    %v1435 = vpop.f32.mrb[0].mxu0
    %1436 = vmatprep.mubr.f32.mxu0 0.0
    %1437 = vmatmul.mubr.f32.gmra.mrb[0].mxu0 %v1344
    %v1438 = vpop.f32.mrb[0].mxu0
    %v1439 = vadd.f32 %v1338, %v1438
    %v1440 = vpop.f32.mrb[0].mxu0
    %1441 = vmatprep.mubr.f32.mxu0 0.0
    %1442 = vmatmul.mubr.f32.gmra.mrb[0].mxu0 %v1347
    %v1443 = vpop.f32.mrb[0].mxu0
    %v1444 = vadd.f32 %v1338, %v1443
    %v1445 = vpop.f32.mrb[0].mxu0
    %1446 = vmatprep.mubr.f32.mxu0 0.0
    %1447 = vmatmul.mubr.f32.gmra.mrb[0].mxu0 %v1350
    %v1448 = vpop.f32.mrb[0].mxu0
    %v1449 = vadd.f32 %v1338, %v1448
    %v1450 = vpop.f32.mrb[0].mxu0
    %1451 = vmatprep.mubr.f32.mxu0 0.0
    %1452 = vmatmul.mubr.f32.gmra.mrb[0].mxu0 %v1353
    %v1453 = vpop.f32.mrb[0].mxu0
    %v1454 = vadd.f32 %v1338, %v1453
    %v1455 = vpop.f32.mrb[0].mxu0
    %1456 = vmatprep.mubr.f32.mxu0 0.0
    %1457 = vmatmul.mubr.f32.gmra.mrb[0].mxu0 %v1356
    %v1458 = vpop.f32.mrb[0].mxu0
    %v1459 = vadd.f32 %v1338, %v1458
    %v1460 = vpop.f32.mrb[0].mxu0
    %1461 = vmatprep.mubr.f32.mxu0 0.0
    %1462 = vmatmul.mubr.f32.gmra.mrb[0].mxu0 %v1359
    %v1463 = vpop.f32.mrb[0].mxu0
    %v1464 = vadd.f32 %v1338, %v1463
    %v1465 = vpop.f32.mrb[0].mxu0
    %1466 = vmatprep.mubr.f32.mxu0 0.0
    %1467 = vmatmul.mubr.f32.gmra.mrb[0].mxu0 %v1362
    %v1468 = vpop.f32.mrb[0].mxu0
    %v1469 = vadd.f32 %v1338, %v1468
    %v1470 = vpop.f32.mrb[0].mxu0
    %1471 = vmatprep.mubr.f32.mxu0 0.0
    %1472 = vmatmul.mubr.f32.gmra.mrb[0].mxu0 %v1365
    %v1473 = vpop.f32.mrb[0].mxu0
    %v1474 = vadd.f32 %v1338, %v1473
    %v1475 = vpop.f32.mrb[0].mxu0
    %1476 = vdwg.mxu0
    %v1477 = vsel %vm292, %v1326, 0
    %1479 = vmatprep.subr.mxu0 0.0
    %1480 = vmatpush1.msra.mxu0 %v1318
    %1481 = vmatprep.subr.mxu0 0.0
    %1482 = vmatpush1.msra.mxu0 %v1319
    %1483 = vmatprep.subr.mxu0 0.0
    %1484 = vmatpush1.msra.mxu0 %v1320
    %1485 = vmatprep.subr.mxu0 0.0
    %1486 = vmatpush1.msra.mxu0 %v1321
    %1487 = vmatprep.subr.mxu0 0.0
    %1488 = vmatpush1.msra.mxu0 %v1322
    %1489 = vmatprep.subr.mxu0 0.0
    %1490 = vmatpush1.msra.mxu0 %v1323
    %1491 = vmatprep.subr.mxu0 0.0
    %1492 = vmatpush1.msra.mxu0 %v1324
    %1493 = vmatprep.subr.mxu0 0.0
    %1494 = vmatpush1.msra.mxu0 %v1325
    %1495 = vmatprep.subr.mxu0 0.0
    %1496 = vmatpush1.msra.mxu0 %v1477
    %1497 = vmatprep.subr.mxu0 0.0
    %1498 = vmatpush1.msra.mxu0 0.0
    %1499 = vmatprep.subr.mxu0 0.0
    %1500 = vmatpush1.msra.mxu0 0.0
    %1501 = vmatprep.subr.mxu0 0.0
    %1502 = vmatpush1.msra.mxu0 0.0
    %1503 = vmatprep.subr.mxu0 0.0
    %1504 = vmatpush1.msra.mxu0 0.0
    %1505 = vmatprep.subr.mxu0 0.0
    %1506 = vmatpush1.msra.mxu0 0.0
    %1507 = vmatprep.subr.mxu0 0.0
    %1508 = vmatpush1.msra.mxu0 0.0
    %1509 = vmatprep.subr.mxu0 0.0
    %1510 = vmatpush1.msra.mxu0 0.0
    %1511 = vmatprep.subr.mxu0 0.0
    %1512 = vmatpush1.msra.mxu0 0.0
    %1513 = vmatprep.subr.mxu0 0.0
    %1514 = vmatpush1.msra.mxu0 0.0
    %1515 = vmatprep.subr.mxu0 0.0
    %1516 = vmatpush1.msra.mxu0 0.0
    %1517 = vmatprep.subr.mxu0 0.0
    %1518 = vmatpush1.msra.mxu0 0.0
    %1519 = vmatprep.subr.mxu0 0.0
    %1520 = vmatpush1.msra.mxu0 0.0
    %1521 = vmatprep.subr.mxu0 0.0
    %1522 = vmatpush1.msra.mxu0 0.0
    %1523 = vmatprep.subr.mxu0 0.0
    %1524 = vmatpush1.msra.mxu0 0.0
    %1525 = vmatprep.subr.mxu0 0.0
    %1526 = vmatpush1.msra.mxu0 0.0
    %1527 = vmatprep.subr.mxu0 0.0
    %1528 = vmatpush1.msra.mxu0 0.0
    %1529 = vmatprep.subr.mxu0 0.0
    %1530 = vmatpush1.msra.mxu0 0.0
    %1531 = vmatprep.subr.mxu0 0.0
    %1532 = vmatpush1.msra.mxu0 0.0
    %1533 = vmatprep.subr.mxu0 0.0
    %1534 = vmatpush1.msra.mxu0 0.0
    %1535 = vmatprep.subr.mxu0 0.0
    %1536 = vmatpush1.msra.mxu0 0.0
    %1537 = vmatprep.subr.mxu0 0.0
    %1538 = vmatpush1.msra.mxu0 0.0
    %1539 = vmatprep.subr.mxu0 0.0
    %1540 = vmatpush1.msra.mxu0 0.0
    %1541 = vmatprep.subr.mxu0 0.0
    %1542 = vmatpush1.msra.mxu0 0.0
    %1543 = vmatprep.mubr.f32.mxu0 0.0
    %1544 = vmatmul.mubr.f32.gmra.mrb[0].mxu0 %v287
    %v1545 = vpop.f32.mrb[0].mxu0
    %v1546 = vadd.f32 0.0, %v1545
    %v1547 = vpop.f32.mrb[0].mxu0
    %1548 = vmatprep.mubr.f32.mxu0 0.0
    %1549 = vmatmul.mubr.f32.gmra.mrb[0].mxu0 %v290
    %v1550 = vpop.f32.mrb[0].mxu0
    %v1551 = vadd.f32 0.0, %v1550
    %v1552 = vpop.f32.mrb[0].mxu0
    %1553 = vdwg.mxu0
    %1555 = vrot.lane.b32.xlu0 %v1551, 32
    %v1556 = vpop.permute.xlu0 %1555
    %v1558 = vsel %vm168, %v1546, %v1556
    %1560 = vrot.lane.b32.xlu0 %v1558, 64
    %v1561 = vpop.permute.xlu0 %1560
    %v1563 = vsel %vm379, %v1558, %v1561
    %v1564 = vmul.f32 %v1563, %v153
    %v1565 = vmul.f32 %v1563, %v154
    %v1566 = vmul.f32 %v1563, %v155
    %v1567 = vmul.f32 %v1563, %v156
    %s1568 = scalar_lea.vmem %s6, 1024
    %v1569 = vld [vmem:[%s1568] sm:$0xff]
    %v1570 = vld [vmem:[%s1568 + $0x8] sm:$0xff]
    %v1571 = vld [vmem:[%s1568 + $0x10] sm:$0xff]
    %v1572 = vld [vmem:[%s1568 + $0x18] sm:$0xff]
    %v1573 = vld [vmem:[%s1568 + $0x20] sm:$0xff]
    %v1574 = vld [vmem:[%s1568 + $0x28] sm:$0xff]
    %v1575 = vld [vmem:[%s1568 + $0x30] sm:$0xff]
    %v1576 = vld [vmem:[%s1568 + $0x38] sm:$0xff]
    %v1577 = vld [vmem:[%s1568 + $0x40] sm:$0xff]
    %v1578 = vld [vmem:[%s1568 + $0x48] sm:$0xff]
    %v1579 = vld [vmem:[%s1568 + $0x50] sm:$0xff]
    %v1580 = vld [vmem:[%s1568 + $0x58] sm:$0xff]
    %v1581 = vld [vmem:[%s1568 + $0x60] sm:$0xff]
    %v1582 = vld [vmem:[%s1568 + $0x68] sm:$0xff]
    %v1583 = vld [vmem:[%s1568 + $0x70] sm:$0xff]
    %v1584 = vld [vmem:[%s1568 + $0x78] sm:$0xff]
    %v1585 = vld [vmem:[%s1568 + $0x80] sm:$0xff]
    %v1586 = vld [vmem:[%s1568 + $0x88] sm:$0xff]
    %v1587 = vld [vmem:[%s1568 + $0x90] sm:$0xff]
    %v1588 = vld [vmem:[%s1568 + $0x98] sm:$0xff]
    %v1589 = vld [vmem:[%s1568 + $0xa0] sm:$0xff]
    %v1590 = vld [vmem:[%s1568 + $0xa8] sm:$0xff]
    %v1591 = vld [vmem:[%s1568 + $0xb0] sm:$0xff]
    %v1592 = vld [vmem:[%s1568 + $0xb8] sm:$0xff]
    %v1593 = vld [vmem:[%s1568 + $0xc0] sm:$0xff]
    %v1594 = vld [vmem:[%s1568 + $0xc8] sm:$0xff]
    %v1595 = vld [vmem:[%s1568 + $0xd0] sm:$0xff]
    %v1596 = vld [vmem:[%s1568 + $0xd8] sm:$0xff]
    %v1597 = vld [vmem:[%s1568 + $0xe0] sm:$0xff]
    %v1598 = vld [vmem:[%s1568 + $0xe8] sm:$0xff]
    %v1599 = vld [vmem:[%s1568 + $0xf0] sm:$0xff]
    %v1600 = vld [vmem:[%s1568 + $0xf8] sm:$0xff]
    %v1601 = vld [vmem:[%s1568 + $0x100] sm:$0xff]
    %v1602 = vld [vmem:[%s1568 + $0x108] sm:$0xff]
    %v1603 = vld [vmem:[%s1568 + $0x110] sm:$0xff]
    %v1604 = vld [vmem:[%s1568 + $0x118] sm:$0xff]
    %v1605 = vld [vmem:[%s1568 + $0x120] sm:$0xff]
    %v1606 = vld [vmem:[%s1568 + $0x128] sm:$0xff]
    %v1607 = vld [vmem:[%s1568 + $0x130] sm:$0xff]
    %v1608 = vld [vmem:[%s1568 + $0x138] sm:$0xff]
    %v1609 = vld [vmem:[%s1568 + $0x140] sm:$0xff]
    %v1610 = vld [vmem:[%s1568 + $0x148] sm:$0xff]
    %v1611 = vld [vmem:[%s1568 + $0x150] sm:$0xff]
    %v1612 = vld [vmem:[%s1568 + $0x158] sm:$0xff]
    %v1613 = vld [vmem:[%s1568 + $0x160] sm:$0xff]
    %v1614 = vld [vmem:[%s1568 + $0x168] sm:$0xff]
    %v1615 = vld [vmem:[%s1568 + $0x170] sm:$0xff]
    %v1616 = vld [vmem:[%s1568 + $0x178] sm:$0xff]
    %v1617 = vld [vmem:[%s1568 + $0x180] sm:$0xff]
    %v1618 = vld [vmem:[%s1568 + $0x188] sm:$0xff]
    %v1619 = vld [vmem:[%s1568 + $0x190] sm:$0xff]
    %v1620 = vld [vmem:[%s1568 + $0x198] sm:$0xff]
    %v1621 = vld [vmem:[%s1568 + $0x1a0] sm:$0xff]
    %v1622 = vld [vmem:[%s1568 + $0x1a8] sm:$0xff]
    %v1623 = vld [vmem:[%s1568 + $0x1b0] sm:$0xff]
    %v1624 = vld [vmem:[%s1568 + $0x1b8] sm:$0xff]
    %v1625 = vld [vmem:[%s1568 + $0x1c0] sm:$0xff]
    %v1626 = vld [vmem:[%s1568 + $0x1c8] sm:$0xff]
    %v1627 = vld [vmem:[%s1568 + $0x1d0] sm:$0xff]
    %v1628 = vld [vmem:[%s1568 + $0x1d8] sm:$0xff]
    %v1629 = vld [vmem:[%s1568 + $0x1e0] sm:$0xff]
    %v1630 = vld [vmem:[%s1568 + $0x1e8] sm:$0xff]
    %v1631 = vld [vmem:[%s1568 + $0x1f0] sm:$0xff]
    %v1632 = vld [vmem:[%s1568 + $0x1f8] sm:$0xff]
    %1633 = vmatprep.subr.mxu0 0.0
    %1634 = vmatpush1.msra.mxu0 %v1569
    %1635 = vmatprep.subr.mxu0 0.0
    %1636 = vmatpush1.msra.mxu0 %v1570
    %1637 = vmatprep.subr.mxu0 0.0
    %1638 = vmatpush1.msra.mxu0 %v1571
    %1639 = vmatprep.subr.mxu0 0.0
    %1640 = vmatpush1.msra.mxu0 %v1572
    %1641 = vmatprep.subr.mxu0 0.0
    %1642 = vmatpush1.msra.mxu0 %v1573
    %1643 = vmatprep.subr.mxu0 0.0
    %1644 = vmatpush1.msra.mxu0 %v1574
    %1645 = vmatprep.subr.mxu0 0.0
    %1646 = vmatpush1.msra.mxu0 %v1575
    %1647 = vmatprep.subr.mxu0 0.0
    %1648 = vmatpush1.msra.mxu0 %v1576
    %1649 = vmatprep.subr.mxu0 0.0
    %1650 = vmatpush1.msra.mxu0 %v1577
    %1651 = vmatprep.subr.mxu0 0.0
    %1652 = vmatpush1.msra.mxu0 %v1578
    %1653 = vmatprep.subr.mxu0 0.0
    %1654 = vmatpush1.msra.mxu0 %v1579
    %1655 = vmatprep.subr.mxu0 0.0
    %1656 = vmatpush1.msra.mxu0 %v1580
    %1657 = vmatprep.subr.mxu0 0.0
    %1658 = vmatpush1.msra.mxu0 %v1581
    %1659 = vmatprep.subr.mxu0 0.0
    %1660 = vmatpush1.msra.mxu0 %v1582
    %1661 = vmatprep.subr.mxu0 0.0
    %1662 = vmatpush1.msra.mxu0 %v1583
    %1663 = vmatprep.subr.mxu0 0.0
    %1664 = vmatpush1.msra.mxu0 %v1584
    %1665 = vmatprep.subr.mxu0 0.0
    %1666 = vmatpush1.msra.mxu0 %v1585
    %1667 = vmatprep.subr.mxu0 0.0
    %1668 = vmatpush1.msra.mxu0 %v1586
    %1669 = vmatprep.subr.mxu0 0.0
    %1670 = vmatpush1.msra.mxu0 %v1587
    %1671 = vmatprep.subr.mxu0 0.0
    %1672 = vmatpush1.msra.mxu0 %v1588
    %1673 = vmatprep.subr.mxu0 0.0
    %1674 = vmatpush1.msra.mxu0 %v1589
    %1675 = vmatprep.subr.mxu0 0.0
    %1676 = vmatpush1.msra.mxu0 %v1590
    %1677 = vmatprep.subr.mxu0 0.0
    %1678 = vmatpush1.msra.mxu0 %v1591
    %1679 = vmatprep.subr.mxu0 0.0
    %1680 = vmatpush1.msra.mxu0 %v1592
    %1681 = vmatprep.subr.mxu0 0.0
    %1682 = vmatpush1.msra.mxu0 %v1593
    %1683 = vmatprep.subr.mxu0 0.0
    %1684 = vmatpush1.msra.mxu0 %v1594
    %1685 = vmatprep.subr.mxu0 0.0
    %1686 = vmatpush1.msra.mxu0 %v1595
    %1687 = vmatprep.subr.mxu0 0.0
    %1688 = vmatpush1.msra.mxu0 %v1596
    %1689 = vmatprep.subr.mxu0 0.0
    %1690 = vmatpush1.msra.mxu0 %v1597
    %1691 = vmatprep.subr.mxu0 0.0
    %1692 = vmatpush1.msra.mxu0 %v1598
    %1693 = vmatprep.subr.mxu0 0.0
    %1694 = vmatpush1.msra.mxu0 %v1599
    %1695 = vmatprep.subr.mxu0 0.0
    %1696 = vmatpush1.msra.mxu0 %v1600
    %1697 = vmatprep.mubr.f32.mxu0 %v1565
    %1698 = vmatmul.mubr.f32.gmra.mrb[0].mxu0 %v1564
    %v1699 = vpop.f32.mrb[0].mxu0
    %v1700 = vadd.f32 0.0, %v1699
    %v1701 = vpop.f32.mrb[0].mxu0
    %1702 = vdwg.mxu0
    %1703 = vmatprep.subr.mxu0 0.0
    %1704 = vmatpush1.msra.mxu0 %v1601
    %1705 = vmatprep.subr.mxu0 0.0
    %1706 = vmatpush1.msra.mxu0 %v1602
    %1707 = vmatprep.subr.mxu0 0.0
    %1708 = vmatpush1.msra.mxu0 %v1603
    %1709 = vmatprep.subr.mxu0 0.0
    %1710 = vmatpush1.msra.mxu0 %v1604
    %1711 = vmatprep.subr.mxu0 0.0
    %1712 = vmatpush1.msra.mxu0 %v1605
    %1713 = vmatprep.subr.mxu0 0.0
    %1714 = vmatpush1.msra.mxu0 %v1606
    %1715 = vmatprep.subr.mxu0 0.0
    %1716 = vmatpush1.msra.mxu0 %v1607
    %1717 = vmatprep.subr.mxu0 0.0
    %1718 = vmatpush1.msra.mxu0 %v1608
    %1719 = vmatprep.subr.mxu0 0.0
    %1720 = vmatpush1.msra.mxu0 %v1609
    %1721 = vmatprep.subr.mxu0 0.0
    %1722 = vmatpush1.msra.mxu0 %v1610
    %1723 = vmatprep.subr.mxu0 0.0
    %1724 = vmatpush1.msra.mxu0 %v1611
    %1725 = vmatprep.subr.mxu0 0.0
    %1726 = vmatpush1.msra.mxu0 %v1612
    %1727 = vmatprep.subr.mxu0 0.0
    %1728 = vmatpush1.msra.mxu0 %v1613
    %1729 = vmatprep.subr.mxu0 0.0
    %1730 = vmatpush1.msra.mxu0 %v1614
    %1731 = vmatprep.subr.mxu0 0.0
    %1732 = vmatpush1.msra.mxu0 %v1615
    %1733 = vmatprep.subr.mxu0 0.0
    %1734 = vmatpush1.msra.mxu0 %v1616
    %1735 = vmatprep.subr.mxu0 0.0
    %1736 = vmatpush1.msra.mxu0 %v1617
    %1737 = vmatprep.subr.mxu0 0.0
    %1738 = vmatpush1.msra.mxu0 %v1618
    %1739 = vmatprep.subr.mxu0 0.0
    %1740 = vmatpush1.msra.mxu0 %v1619
    %1741 = vmatprep.subr.mxu0 0.0
    %1742 = vmatpush1.msra.mxu0 %v1620
    %1743 = vmatprep.subr.mxu0 0.0
    %1744 = vmatpush1.msra.mxu0 %v1621
    %1745 = vmatprep.subr.mxu0 0.0
    %1746 = vmatpush1.msra.mxu0 %v1622
    %1747 = vmatprep.subr.mxu0 0.0
    %1748 = vmatpush1.msra.mxu0 %v1623
    %1749 = vmatprep.subr.mxu0 0.0
    %1750 = vmatpush1.msra.mxu0 %v1624
    %1751 = vmatprep.subr.mxu0 0.0
    %1752 = vmatpush1.msra.mxu0 %v1625
    %1753 = vmatprep.subr.mxu0 0.0
    %1754 = vmatpush1.msra.mxu0 %v1626
    %1755 = vmatprep.subr.mxu0 0.0
    %1756 = vmatpush1.msra.mxu0 %v1627
    %1757 = vmatprep.subr.mxu0 0.0
    %1758 = vmatpush1.msra.mxu0 %v1628
    %1759 = vmatprep.subr.mxu0 0.0
    %1760 = vmatpush1.msra.mxu0 %v1629
    %1761 = vmatprep.subr.mxu0 0.0
    %1762 = vmatpush1.msra.mxu0 %v1630
    %1763 = vmatprep.subr.mxu0 0.0
    %1764 = vmatpush1.msra.mxu0 %v1631
    %1765 = vmatprep.subr.mxu0 0.0
    %1766 = vmatpush1.msra.mxu0 %v1632
    %1767 = vmatprep.mubr.f32.mxu0 %v1567
    %1768 = vmatmul.mubr.f32.gmra.mrb[0].mxu0 %v1566
    %v1769 = vpop.f32.mrb[0].mxu0
    %v1770 = vadd.f32 %v1700, %v1769
    %v1771 = vpop.f32.mrb[0].mxu0
    %1772 = vdwg.mxu0
    %1774 = vrot.lane.b32.xlu0 %v1770, 96
    %v1775 = vpop.permute.xlu0 %1774
    %1777 = vmatprep.subr.mxu0 0.0
    %1778 = vmatpush1.msra.mxu0 %v1770
    %1779 = vmatprep.subr.mxu0 0.0
    %1780 = vmatpush1.msra.mxu0 %v1775
    %1781 = vmatprep.subr.mxu0 0.0
    %1782 = vmatpush1.msra.mxu0 0.0
    %1783 = vmatprep.subr.mxu0 0.0
    %1784 = vmatpush1.msra.mxu0 0.0
    %1785 = vmatprep.subr.mxu0 0.0
    %1786 = vmatpush1.msra.mxu0 0.0
    %1787 = vmatprep.subr.mxu0 0.0
    %1788 = vmatpush1.msra.mxu0 0.0
    %1789 = vmatprep.subr.mxu0 0.0
    %1790 = vmatpush1.msra.mxu0 0.0
    %1791 = vmatprep.subr.mxu0 0.0
    %1792 = vmatpush1.msra.mxu0 0.0
    %1793 = vmatprep.subr.mxu0 0.0
    %1794 = vmatpush1.msra.mxu0 0.0
    %1795 = vmatprep.subr.mxu0 0.0
    %1796 = vmatpush1.msra.mxu0 0.0
    %1797 = vmatprep.subr.mxu0 0.0
    %1798 = vmatpush1.msra.mxu0 0.0
    %1799 = vmatprep.subr.mxu0 0.0
    %1800 = vmatpush1.msra.mxu0 0.0
    %1801 = vmatprep.subr.mxu0 0.0
    %1802 = vmatpush1.msra.mxu0 0.0
    %1803 = vmatprep.subr.mxu0 0.0
    %1804 = vmatpush1.msra.mxu0 0.0
    %1805 = vmatprep.subr.mxu0 0.0
    %1806 = vmatpush1.msra.mxu0 0.0
    %1807 = vmatprep.subr.mxu0 0.0
    %1808 = vmatpush1.msra.mxu0 0.0
    %1809 = vmatprep.subr.mxu0 0.0
    %1810 = vmatpush1.msra.mxu0 0.0
    %1811 = vmatprep.subr.mxu0 0.0
    %1812 = vmatpush1.msra.mxu0 0.0
    %1813 = vmatprep.subr.mxu0 0.0
    %1814 = vmatpush1.msra.mxu0 0.0
    %1815 = vmatprep.subr.mxu0 0.0
    %1816 = vmatpush1.msra.mxu0 0.0
    %1817 = vmatprep.subr.mxu0 0.0
    %1818 = vmatpush1.msra.mxu0 0.0
    %1819 = vmatprep.subr.mxu0 0.0
    %1820 = vmatpush1.msra.mxu0 0.0
    %1821 = vmatprep.subr.mxu0 0.0
    %1822 = vmatpush1.msra.mxu0 0.0
    %1823 = vmatprep.subr.mxu0 0.0
    %1824 = vmatpush1.msra.mxu0 0.0
    %1825 = vmatprep.subr.mxu0 0.0
    %1826 = vmatpush1.msra.mxu0 0.0
    %1827 = vmatprep.subr.mxu0 0.0
    %1828 = vmatpush1.msra.mxu0 0.0
    %1829 = vmatprep.subr.mxu0 0.0
    %1830 = vmatpush1.msra.mxu0 0.0
    %1831 = vmatprep.subr.mxu0 0.0
    %1832 = vmatpush1.msra.mxu0 0.0
    %1833 = vmatprep.subr.mxu0 0.0
    %1834 = vmatpush1.msra.mxu0 0.0
    %1835 = vmatprep.subr.mxu0 0.0
    %1836 = vmatpush1.msra.mxu0 0.0
    %1837 = vmatprep.subr.mxu0 0.0
    %1838 = vmatpush1.msra.mxu0 0.0
    %1839 = vmatprep.subr.mxu0 0.0
    %1840 = vmatpush1.msra.mxu0 0.0
    %1841 = vmatprep.mubr.f32.mxu0 0.0
    %1842 = vmatmul.mubr.f32.gmra.mrb[0].mxu0 %v595
    %v1843 = vpop.f32.mrb[0].mxu0
    %v1844 = vadd.f32 0.0, %v1843
    %v1845 = vpop.f32.mrb[0].mxu0
    %1846 = vmatprep.mubr.f32.mxu0 0.0
    %1847 = vmatmul.mubr.f32.gmra.mrb[0].mxu0 %v598
    %v1848 = vpop.f32.mrb[0].mxu0
    %v1849 = vadd.f32 0.0, %v1848
    %v1850 = vpop.f32.mrb[0].mxu0
    %1851 = vmatprep.mubr.f32.mxu0 0.0
    %1852 = vmatmul.mubr.f32.gmra.mrb[0].mxu0 %v601
    %v1853 = vpop.f32.mrb[0].mxu0
    %v1854 = vadd.f32 0.0, %v1853
    %v1855 = vpop.f32.mrb[0].mxu0
    %1856 = vmatprep.mubr.f32.mxu0 0.0
    %1857 = vmatmul.mubr.f32.gmra.mrb[0].mxu0 %v604
    %v1858 = vpop.f32.mrb[0].mxu0
    %v1859 = vadd.f32 0.0, %v1858
    %v1860 = vpop.f32.mrb[0].mxu0
    %1861 = vmatprep.mubr.f32.mxu0 0.0
    %1862 = vmatmul.mubr.f32.gmra.mrb[0].mxu0 %v607
    %v1863 = vpop.f32.mrb[0].mxu0
    %v1864 = vadd.f32 0.0, %v1863
    %v1865 = vpop.f32.mrb[0].mxu0
    %1866 = vmatprep.mubr.f32.mxu0 0.0
    %1867 = vmatmul.mubr.f32.gmra.mrb[0].mxu0 %v610
    %v1868 = vpop.f32.mrb[0].mxu0
    %v1869 = vadd.f32 0.0, %v1868
    %v1870 = vpop.f32.mrb[0].mxu0
    %1871 = vmatprep.mubr.f32.mxu0 0.0
    %1872 = vmatmul.mubr.f32.gmra.mrb[0].mxu0 %v613
    %v1873 = vpop.f32.mrb[0].mxu0
    %v1874 = vadd.f32 0.0, %v1873
    %v1875 = vpop.f32.mrb[0].mxu0
    %1876 = vmatprep.mubr.f32.mxu0 0.0
    %1877 = vmatmul.mubr.f32.gmra.mrb[0].mxu0 %v616
    %v1878 = vpop.f32.mrb[0].mxu0
    %v1879 = vadd.f32 0.0, %v1878
    %v1880 = vpop.f32.mrb[0].mxu0
    %1881 = vmatprep.mubr.f32.mxu0 0.0
    %1882 = vmatmul.mubr.f32.gmra.mrb[0].mxu0 %v619
    %v1883 = vpop.f32.mrb[0].mxu0
    %v1884 = vadd.f32 0.0, %v1883
    %v1885 = vpop.f32.mrb[0].mxu0
    %1886 = vdwg.mxu0
    %v1887 = vadd.f32 %v1434, %v1844
    %v1888 = vadd.f32 %v1439, %v1849
    %v1889 = vadd.f32 %v1444, %v1854
    %v1890 = vadd.f32 %v1449, %v1859
    %v1891 = vadd.f32 %v1454, %v1864
    %v1892 = vadd.f32 %v1459, %v1869
    %v1893 = vadd.f32 %v1464, %v1874
    %v1894 = vadd.f32 %v1469, %v1879
    %v1895 = vadd.f32 %v1474, %v1884
    %v1896 = vmax.f32 %v1887, 0.0
    %v1897 = vmax.f32 %v1888, 0.0
    %v1898 = vmax.f32 %v1889, 0.0
    %v1899 = vmax.f32 %v1890, 0.0
    %v1900 = vmax.f32 %v1891, 0.0
    %v1901 = vmax.f32 %v1892, 0.0
    %v1902 = vmax.f32 %v1893, 0.0
    %v1903 = vmax.f32 %v1894, 0.0
    %v1904 = vmax.f32 %v1895, 0.0
    %s1905 = scalar_lea.vmem %s7, 96
    %v1906 = vld [vmem:[%s1905] sm:$0xff]
    %v1907 = vld [vmem:[%s1905 + $0x8] sm:$0xff]
    %v1908 = vld [vmem:[%s1905 + $0x10] sm:$0xff]
    %v1909 = vld [vmem:[%s1905 + $0x18] sm:$0xff]
    %s1910 = scalar_lea.vmem %s8, 3
    %v1911 = vld [vmem:[%s1910] sm:$0x1]
    %v1913 = vlaneseq
    %v1914 = vshrl.u32 %v1913, 7
    %v1915 = vsub.s32 0, %v1914
    %v1916 = vrot.slane %v1911, %v1915
    %v1919 = vsel %vm168, %v1896, 0
    %v1922 = vsel %vm168, %v1897, 0
    %v1925 = vsel %vm168, %v1898, 0
    %v1928 = vsel %vm168, %v1899, 0
    %v1931 = vsel %vm168, %v1900, 0
    %v1934 = vsel %vm168, %v1901, 0
    %v1937 = vsel %vm168, %v1902, 0
    %v1940 = vsel %vm168, %v1903, 0
    %v1943 = vsel %vm168, %v1904, 0
    %1945 = vmatprep.subr.mxu0 0.0
    %1946 = vmatpush1.msra.mxu0 %v1906
    %1947 = vmatprep.subr.mxu0 0.0
    %1948 = vmatpush1.msra.mxu0 %v1907
    %1949 = vmatprep.subr.mxu0 0.0
    %1950 = vmatpush1.msra.mxu0 %v1908
    %1951 = vmatprep.subr.mxu0 0.0
    %1952 = vmatpush1.msra.mxu0 %v1909
    %1953 = vmatprep.subr.mxu0 0.0
    %1954 = vmatpush1.msra.mxu0 0.0
    %1955 = vmatprep.subr.mxu0 0.0
    %1956 = vmatpush1.msra.mxu0 0.0
    %1957 = vmatprep.subr.mxu0 0.0
    %1958 = vmatpush1.msra.mxu0 0.0
    %1959 = vmatprep.subr.mxu0 0.0
    %1960 = vmatpush1.msra.mxu0 0.0
    %1961 = vmatprep.subr.mxu0 0.0
    %1962 = vmatpush1.msra.mxu0 0.0
    %1963 = vmatprep.subr.mxu0 0.0
    %1964 = vmatpush1.msra.mxu0 0.0
    %1965 = vmatprep.subr.mxu0 0.0
    %1966 = vmatpush1.msra.mxu0 0.0
    %1967 = vmatprep.subr.mxu0 0.0
    %1968 = vmatpush1.msra.mxu0 0.0
    %1969 = vmatprep.subr.mxu0 0.0
    %1970 = vmatpush1.msra.mxu0 0.0
    %1971 = vmatprep.subr.mxu0 0.0
    %1972 = vmatpush1.msra.mxu0 0.0
    %1973 = vmatprep.subr.mxu0 0.0
    %1974 = vmatpush1.msra.mxu0 0.0
    %1975 = vmatprep.subr.mxu0 0.0
    %1976 = vmatpush1.msra.mxu0 0.0
    %1977 = vmatprep.subr.mxu0 0.0
    %1978 = vmatpush1.msra.mxu0 0.0
    %1979 = vmatprep.subr.mxu0 0.0
    %1980 = vmatpush1.msra.mxu0 0.0
    %1981 = vmatprep.subr.mxu0 0.0
    %1982 = vmatpush1.msra.mxu0 0.0
    %1983 = vmatprep.subr.mxu0 0.0
    %1984 = vmatpush1.msra.mxu0 0.0
    %1985 = vmatprep.subr.mxu0 0.0
    %1986 = vmatpush1.msra.mxu0 0.0
    %1987 = vmatprep.subr.mxu0 0.0
    %1988 = vmatpush1.msra.mxu0 0.0
    %1989 = vmatprep.subr.mxu0 0.0
    %1990 = vmatpush1.msra.mxu0 0.0
    %1991 = vmatprep.subr.mxu0 0.0
    %1992 = vmatpush1.msra.mxu0 0.0
    %1993 = vmatprep.subr.mxu0 0.0
    %1994 = vmatpush1.msra.mxu0 0.0
    %1995 = vmatprep.subr.mxu0 0.0
    %1996 = vmatpush1.msra.mxu0 0.0
    %1997 = vmatprep.subr.mxu0 0.0
    %1998 = vmatpush1.msra.mxu0 0.0
    %1999 = vmatprep.subr.mxu0 0.0
    %2000 = vmatpush1.msra.mxu0 0.0
    %2001 = vmatprep.subr.mxu0 0.0
    %2002 = vmatpush1.msra.mxu0 0.0
    %2003 = vmatprep.subr.mxu0 0.0
    %2004 = vmatpush1.msra.mxu0 0.0
    %2005 = vmatprep.subr.mxu0 0.0
    %2006 = vmatpush1.msra.mxu0 0.0
    %2007 = vmatprep.subr.mxu0 0.0
    %2008 = vmatpush1.msra.mxu0 0.0
    %2009 = vmatprep.mubr.f32.mxu0 0.0
    %2010 = vmatmul.mubr.f32.gmra.mrb[0].mxu0 %v1919
    %v2011 = vpop.f32.mrb[0].mxu0
    %v2012 = vadd.f32 %v1916, %v2011
    %v2013 = vpop.f32.mrb[0].mxu0
    %2014 = vmatprep.mubr.f32.mxu0 0.0
    %2015 = vmatmul.mubr.f32.gmra.mrb[0].mxu0 %v1922
    %v2016 = vpop.f32.mrb[0].mxu0
    %v2017 = vpop.f32.mrb[0].mxu0
    %2018 = vmatprep.mubr.f32.mxu0 0.0
    %2019 = vmatmul.mubr.f32.gmra.mrb[0].mxu0 %v1925
    %v2020 = vpop.f32.mrb[0].mxu0
    %v2021 = vpop.f32.mrb[0].mxu0
    %2022 = vmatprep.mubr.f32.mxu0 0.0
    %2023 = vmatmul.mubr.f32.gmra.mrb[0].mxu0 %v1928
    %v2024 = vpop.f32.mrb[0].mxu0
    %v2025 = vpop.f32.mrb[0].mxu0
    %2026 = vmatprep.mubr.f32.mxu0 0.0
    %2027 = vmatmul.mubr.f32.gmra.mrb[0].mxu0 %v1931
    %v2028 = vpop.f32.mrb[0].mxu0
    %v2029 = vpop.f32.mrb[0].mxu0
    %2030 = vmatprep.mubr.f32.mxu0 0.0
    %2031 = vmatmul.mubr.f32.gmra.mrb[0].mxu0 %v1934
    %v2032 = vpop.f32.mrb[0].mxu0
    %v2033 = vpop.f32.mrb[0].mxu0
    %2034 = vmatprep.mubr.f32.mxu0 0.0
    %2035 = vmatmul.mubr.f32.gmra.mrb[0].mxu0 %v1937
    %v2036 = vpop.f32.mrb[0].mxu0
    %v2037 = vpop.f32.mrb[0].mxu0
    %2038 = vmatprep.mubr.f32.mxu0 0.0
    %2039 = vmatmul.mubr.f32.gmra.mrb[0].mxu0 %v1940
    %v2040 = vpop.f32.mrb[0].mxu0
    %v2041 = vpop.f32.mrb[0].mxu0
    %2042 = vmatprep.mubr.f32.mxu0 0.0
    %2043 = vmatmul.mubr.f32.gmra.mrb[0].mxu0 %v1943
    %v2044 = vpop.f32.mrb[0].mxu0
    %v2045 = vpop.f32.mrb[0].mxu0
    %2046 = vdwg.mxu0
    %v2047 = vsel %vm292, %v1904, 0
    %2049 = vmatprep.subr.mxu0 0.0
    %2050 = vmatpush1.msra.mxu0 %v1896
    %2051 = vmatprep.subr.mxu0 0.0
    %2052 = vmatpush1.msra.mxu0 %v1897
    %2053 = vmatprep.subr.mxu0 0.0
    %2054 = vmatpush1.msra.mxu0 %v1898
    %2055 = vmatprep.subr.mxu0 0.0
    %2056 = vmatpush1.msra.mxu0 %v1899
    %2057 = vmatprep.subr.mxu0 0.0
    %2058 = vmatpush1.msra.mxu0 %v1900
    %2059 = vmatprep.subr.mxu0 0.0
    %2060 = vmatpush1.msra.mxu0 %v1901
    %2061 = vmatprep.subr.mxu0 0.0
    %2062 = vmatpush1.msra.mxu0 %v1902
    %2063 = vmatprep.subr.mxu0 0.0
    %2064 = vmatpush1.msra.mxu0 %v1903
    %2065 = vmatprep.subr.mxu0 0.0
    %2066 = vmatpush1.msra.mxu0 %v2047
    %2067 = vmatprep.subr.mxu0 0.0
    %2068 = vmatpush1.msra.mxu0 0.0
    %2069 = vmatprep.subr.mxu0 0.0
    %2070 = vmatpush1.msra.mxu0 0.0
    %2071 = vmatprep.subr.mxu0 0.0
    %2072 = vmatpush1.msra.mxu0 0.0
    %2073 = vmatprep.subr.mxu0 0.0
    %2074 = vmatpush1.msra.mxu0 0.0
    %2075 = vmatprep.subr.mxu0 0.0
    %2076 = vmatpush1.msra.mxu0 0.0
    %2077 = vmatprep.subr.mxu0 0.0
    %2078 = vmatpush1.msra.mxu0 0.0
    %2079 = vmatprep.subr.mxu0 0.0
    %2080 = vmatpush1.msra.mxu0 0.0
    %2081 = vmatprep.subr.mxu0 0.0
    %2082 = vmatpush1.msra.mxu0 0.0
    %2083 = vmatprep.subr.mxu0 0.0
    %2084 = vmatpush1.msra.mxu0 0.0
    %2085 = vmatprep.subr.mxu0 0.0
    %2086 = vmatpush1.msra.mxu0 0.0
    %2087 = vmatprep.subr.mxu0 0.0
    %2088 = vmatpush1.msra.mxu0 0.0
    %2089 = vmatprep.subr.mxu0 0.0
    %2090 = vmatpush1.msra.mxu0 0.0
    %2091 = vmatprep.subr.mxu0 0.0
    %2092 = vmatpush1.msra.mxu0 0.0
    %2093 = vmatprep.subr.mxu0 0.0
    %2094 = vmatpush1.msra.mxu0 0.0
    %2095 = vmatprep.subr.mxu0 0.0
    %2096 = vmatpush1.msra.mxu0 0.0
    %2097 = vmatprep.subr.mxu0 0.0
    %2098 = vmatpush1.msra.mxu0 0.0
    %2099 = vmatprep.subr.mxu0 0.0
    %2100 = vmatpush1.msra.mxu0 0.0
    %2101 = vmatprep.subr.mxu0 0.0
    %2102 = vmatpush1.msra.mxu0 0.0
    %2103 = vmatprep.subr.mxu0 0.0
    %2104 = vmatpush1.msra.mxu0 0.0
    %2105 = vmatprep.subr.mxu0 0.0
    %2106 = vmatpush1.msra.mxu0 0.0
    %2107 = vmatprep.subr.mxu0 0.0
    %2108 = vmatpush1.msra.mxu0 0.0
    %2109 = vmatprep.subr.mxu0 0.0
    %2110 = vmatpush1.msra.mxu0 0.0
    %2111 = vmatprep.subr.mxu0 0.0
    %2112 = vmatpush1.msra.mxu0 0.0
    %2113 = vmatprep.mubr.f32.mxu0 0.0
    %2114 = vmatmul.mubr.f32.gmra.mrb[0].mxu0 %v287
    %v2115 = vpop.f32.mrb[0].mxu0
    %v2116 = vadd.f32 0.0, %v2115
    %v2117 = vpop.f32.mrb[0].mxu0
    %2118 = vmatprep.mubr.f32.mxu0 0.0
    %2119 = vmatmul.mubr.f32.gmra.mrb[0].mxu0 %v290
    %v2120 = vpop.f32.mrb[0].mxu0
    %v2121 = vadd.f32 0.0, %v2120
    %v2122 = vpop.f32.mrb[0].mxu0
    %2123 = vdwg.mxu0
    %2125 = vrot.lane.b32.xlu0 %v2121, 32
    %v2126 = vpop.permute.xlu0 %2125
    %v2128 = vsel %vm168, %v2116, %v2126
    %2130 = vrot.lane.b32.xlu0 %v2128, 64
    %v2131 = vpop.permute.xlu0 %2130
    %v2133 = vsel %vm379, %v2128, %v2131
    %v2134 = vmul.f32 %v2133, %v153
    %v2135 = vmul.f32 %v2133, %v154
    %v2136 = vmul.f32 %v2133, %v155
    %v2137 = vmul.f32 %v2133, %v156
    %s2138 = scalar_lea.vmem %s6, 1536
    %v2139 = vld [vmem:[%s2138] sm:$0xff]
    %v2140 = vld [vmem:[%s2138 + $0x8] sm:$0xff]
    %v2141 = vld [vmem:[%s2138 + $0x10] sm:$0xff]
    %v2142 = vld [vmem:[%s2138 + $0x18] sm:$0xff]
    %v2143 = vld [vmem:[%s2138 + $0x20] sm:$0xff]
    %v2144 = vld [vmem:[%s2138 + $0x28] sm:$0xff]
    %v2145 = vld [vmem:[%s2138 + $0x30] sm:$0xff]
    %v2146 = vld [vmem:[%s2138 + $0x38] sm:$0xff]
    %v2147 = vld [vmem:[%s2138 + $0x40] sm:$0xff]
    %v2148 = vld [vmem:[%s2138 + $0x48] sm:$0xff]
    %v2149 = vld [vmem:[%s2138 + $0x50] sm:$0xff]
    %v2150 = vld [vmem:[%s2138 + $0x58] sm:$0xff]
    %v2151 = vld [vmem:[%s2138 + $0x60] sm:$0xff]
    %v2152 = vld [vmem:[%s2138 + $0x68] sm:$0xff]
    %v2153 = vld [vmem:[%s2138 + $0x70] sm:$0xff]
    %v2154 = vld [vmem:[%s2138 + $0x78] sm:$0xff]
    %v2155 = vld [vmem:[%s2138 + $0x80] sm:$0xff]
    %v2156 = vld [vmem:[%s2138 + $0x88] sm:$0xff]
    %v2157 = vld [vmem:[%s2138 + $0x90] sm:$0xff]
    %v2158 = vld [vmem:[%s2138 + $0x98] sm:$0xff]
    %v2159 = vld [vmem:[%s2138 + $0xa0] sm:$0xff]
    %v2160 = vld [vmem:[%s2138 + $0xa8] sm:$0xff]
    %v2161 = vld [vmem:[%s2138 + $0xb0] sm:$0xff]
    %v2162 = vld [vmem:[%s2138 + $0xb8] sm:$0xff]
    %v2163 = vld [vmem:[%s2138 + $0xc0] sm:$0xff]
    %v2164 = vld [vmem:[%s2138 + $0xc8] sm:$0xff]
    %v2165 = vld [vmem:[%s2138 + $0xd0] sm:$0xff]
    %v2166 = vld [vmem:[%s2138 + $0xd8] sm:$0xff]
    %v2167 = vld [vmem:[%s2138 + $0xe0] sm:$0xff]
    %v2168 = vld [vmem:[%s2138 + $0xe8] sm:$0xff]
    %v2169 = vld [vmem:[%s2138 + $0xf0] sm:$0xff]
    %v2170 = vld [vmem:[%s2138 + $0xf8] sm:$0xff]
    %v2171 = vld [vmem:[%s2138 + $0x100] sm:$0xff]
    %v2172 = vld [vmem:[%s2138 + $0x108] sm:$0xff]
    %v2173 = vld [vmem:[%s2138 + $0x110] sm:$0xff]
    %v2174 = vld [vmem:[%s2138 + $0x118] sm:$0xff]
    %v2175 = vld [vmem:[%s2138 + $0x120] sm:$0xff]
    %v2176 = vld [vmem:[%s2138 + $0x128] sm:$0xff]
    %v2177 = vld [vmem:[%s2138 + $0x130] sm:$0xff]
    %v2178 = vld [vmem:[%s2138 + $0x138] sm:$0xff]
    %v2179 = vld [vmem:[%s2138 + $0x140] sm:$0xff]
    %v2180 = vld [vmem:[%s2138 + $0x148] sm:$0xff]
    %v2181 = vld [vmem:[%s2138 + $0x150] sm:$0xff]
    %v2182 = vld [vmem:[%s2138 + $0x158] sm:$0xff]
    %v2183 = vld [vmem:[%s2138 + $0x160] sm:$0xff]
    %v2184 = vld [vmem:[%s2138 + $0x168] sm:$0xff]
    %v2185 = vld [vmem:[%s2138 + $0x170] sm:$0xff]
    %v2186 = vld [vmem:[%s2138 + $0x178] sm:$0xff]
    %v2187 = vld [vmem:[%s2138 + $0x180] sm:$0xff]
    %v2188 = vld [vmem:[%s2138 + $0x188] sm:$0xff]
    %v2189 = vld [vmem:[%s2138 + $0x190] sm:$0xff]
    %v2190 = vld [vmem:[%s2138 + $0x198] sm:$0xff]
    %v2191 = vld [vmem:[%s2138 + $0x1a0] sm:$0xff]
    %v2192 = vld [vmem:[%s2138 + $0x1a8] sm:$0xff]
    %v2193 = vld [vmem:[%s2138 + $0x1b0] sm:$0xff]
    %v2194 = vld [vmem:[%s2138 + $0x1b8] sm:$0xff]
    %v2195 = vld [vmem:[%s2138 + $0x1c0] sm:$0xff]
    %v2196 = vld [vmem:[%s2138 + $0x1c8] sm:$0xff]
    %v2197 = vld [vmem:[%s2138 + $0x1d0] sm:$0xff]
    %v2198 = vld [vmem:[%s2138 + $0x1d8] sm:$0xff]
    %v2199 = vld [vmem:[%s2138 + $0x1e0] sm:$0xff]
    %v2200 = vld [vmem:[%s2138 + $0x1e8] sm:$0xff]
    %v2201 = vld [vmem:[%s2138 + $0x1f0] sm:$0xff]
    %v2202 = vld [vmem:[%s2138 + $0x1f8] sm:$0xff]
    %2203 = vmatprep.subr.mxu0 0.0
    %2204 = vmatpush1.msra.mxu0 %v2139
    %2205 = vmatprep.subr.mxu0 0.0
    %2206 = vmatpush1.msra.mxu0 %v2140
    %2207 = vmatprep.subr.mxu0 0.0
    %2208 = vmatpush1.msra.mxu0 %v2141
    %2209 = vmatprep.subr.mxu0 0.0
    %2210 = vmatpush1.msra.mxu0 %v2142
    %2211 = vmatprep.subr.mxu0 0.0
    %2212 = vmatpush1.msra.mxu0 %v2143
    %2213 = vmatprep.subr.mxu0 0.0
    %2214 = vmatpush1.msra.mxu0 %v2144
    %2215 = vmatprep.subr.mxu0 0.0
    %2216 = vmatpush1.msra.mxu0 %v2145
    %2217 = vmatprep.subr.mxu0 0.0
    %2218 = vmatpush1.msra.mxu0 %v2146
    %2219 = vmatprep.subr.mxu0 0.0
    %2220 = vmatpush1.msra.mxu0 %v2147
    %2221 = vmatprep.subr.mxu0 0.0
    %2222 = vmatpush1.msra.mxu0 %v2148
    %2223 = vmatprep.subr.mxu0 0.0
    %2224 = vmatpush1.msra.mxu0 %v2149
    %2225 = vmatprep.subr.mxu0 0.0
    %2226 = vmatpush1.msra.mxu0 %v2150
    %2227 = vmatprep.subr.mxu0 0.0
    %2228 = vmatpush1.msra.mxu0 %v2151
    %2229 = vmatprep.subr.mxu0 0.0
    %2230 = vmatpush1.msra.mxu0 %v2152
    %2231 = vmatprep.subr.mxu0 0.0
    %2232 = vmatpush1.msra.mxu0 %v2153
    %2233 = vmatprep.subr.mxu0 0.0
    %2234 = vmatpush1.msra.mxu0 %v2154
    %2235 = vmatprep.subr.mxu0 0.0
    %2236 = vmatpush1.msra.mxu0 %v2155
    %2237 = vmatprep.subr.mxu0 0.0
    %2238 = vmatpush1.msra.mxu0 %v2156
    %2239 = vmatprep.subr.mxu0 0.0
    %2240 = vmatpush1.msra.mxu0 %v2157
    %2241 = vmatprep.subr.mxu0 0.0
    %2242 = vmatpush1.msra.mxu0 %v2158
    %2243 = vmatprep.subr.mxu0 0.0
    %2244 = vmatpush1.msra.mxu0 %v2159
    %2245 = vmatprep.subr.mxu0 0.0
    %2246 = vmatpush1.msra.mxu0 %v2160
    %2247 = vmatprep.subr.mxu0 0.0
    %2248 = vmatpush1.msra.mxu0 %v2161
    %2249 = vmatprep.subr.mxu0 0.0
    %2250 = vmatpush1.msra.mxu0 %v2162
    %2251 = vmatprep.subr.mxu0 0.0
    %2252 = vmatpush1.msra.mxu0 %v2163
    %2253 = vmatprep.subr.mxu0 0.0
    %2254 = vmatpush1.msra.mxu0 %v2164
    %2255 = vmatprep.subr.mxu0 0.0
    %2256 = vmatpush1.msra.mxu0 %v2165
    %2257 = vmatprep.subr.mxu0 0.0
    %2258 = vmatpush1.msra.mxu0 %v2166
    %2259 = vmatprep.subr.mxu0 0.0
    %2260 = vmatpush1.msra.mxu0 %v2167
    %2261 = vmatprep.subr.mxu0 0.0
    %2262 = vmatpush1.msra.mxu0 %v2168
    %2263 = vmatprep.subr.mxu0 0.0
    %2264 = vmatpush1.msra.mxu0 %v2169
    %2265 = vmatprep.subr.mxu0 0.0
    %2266 = vmatpush1.msra.mxu0 %v2170
    %2267 = vmatprep.mubr.f32.mxu0 %v2135
    %2268 = vmatmul.mubr.f32.gmra.mrb[0].mxu0 %v2134
    %v2269 = vpop.f32.mrb[0].mxu0
    %v2270 = vadd.f32 0.0, %v2269
    %v2271 = vpop.f32.mrb[0].mxu0
    %2272 = vdwg.mxu0
    %2273 = vmatprep.subr.mxu0 0.0
    %2274 = vmatpush1.msra.mxu0 %v2171
    %2275 = vmatprep.subr.mxu0 0.0
    %2276 = vmatpush1.msra.mxu0 %v2172
    %2277 = vmatprep.subr.mxu0 0.0
    %2278 = vmatpush1.msra.mxu0 %v2173
    %2279 = vmatprep.subr.mxu0 0.0
    %2280 = vmatpush1.msra.mxu0 %v2174
    %2281 = vmatprep.subr.mxu0 0.0
    %2282 = vmatpush1.msra.mxu0 %v2175
    %2283 = vmatprep.subr.mxu0 0.0
    %2284 = vmatpush1.msra.mxu0 %v2176
    %2285 = vmatprep.subr.mxu0 0.0
    %2286 = vmatpush1.msra.mxu0 %v2177
    %2287 = vmatprep.subr.mxu0 0.0
    %2288 = vmatpush1.msra.mxu0 %v2178
    %2289 = vmatprep.subr.mxu0 0.0
    %2290 = vmatpush1.msra.mxu0 %v2179
    %2291 = vmatprep.subr.mxu0 0.0
    %2292 = vmatpush1.msra.mxu0 %v2180
    %2293 = vmatprep.subr.mxu0 0.0
    %2294 = vmatpush1.msra.mxu0 %v2181
    %2295 = vmatprep.subr.mxu0 0.0
    %2296 = vmatpush1.msra.mxu0 %v2182
    %2297 = vmatprep.subr.mxu0 0.0
    %2298 = vmatpush1.msra.mxu0 %v2183
    %2299 = vmatprep.subr.mxu0 0.0
    %2300 = vmatpush1.msra.mxu0 %v2184
    %2301 = vmatprep.subr.mxu0 0.0
    %2302 = vmatpush1.msra.mxu0 %v2185
    %2303 = vmatprep.subr.mxu0 0.0
    %2304 = vmatpush1.msra.mxu0 %v2186
    %2305 = vmatprep.subr.mxu0 0.0
    %2306 = vmatpush1.msra.mxu0 %v2187
    %2307 = vmatprep.subr.mxu0 0.0
    %2308 = vmatpush1.msra.mxu0 %v2188
    %2309 = vmatprep.subr.mxu0 0.0
    %2310 = vmatpush1.msra.mxu0 %v2189
    %2311 = vmatprep.subr.mxu0 0.0
    %2312 = vmatpush1.msra.mxu0 %v2190
    %2313 = vmatprep.subr.mxu0 0.0
    %2314 = vmatpush1.msra.mxu0 %v2191
    %2315 = vmatprep.subr.mxu0 0.0
    %2316 = vmatpush1.msra.mxu0 %v2192
    %2317 = vmatprep.subr.mxu0 0.0
    %2318 = vmatpush1.msra.mxu0 %v2193
    %2319 = vmatprep.subr.mxu0 0.0
    %2320 = vmatpush1.msra.mxu0 %v2194
    %2321 = vmatprep.subr.mxu0 0.0
    %2322 = vmatpush1.msra.mxu0 %v2195
    %2323 = vmatprep.subr.mxu0 0.0
    %2324 = vmatpush1.msra.mxu0 %v2196
    %2325 = vmatprep.subr.mxu0 0.0
    %2326 = vmatpush1.msra.mxu0 %v2197
    %2327 = vmatprep.subr.mxu0 0.0
    %2328 = vmatpush1.msra.mxu0 %v2198
    %2329 = vmatprep.subr.mxu0 0.0
    %2330 = vmatpush1.msra.mxu0 %v2199
    %2331 = vmatprep.subr.mxu0 0.0
    %2332 = vmatpush1.msra.mxu0 %v2200
    %2333 = vmatprep.subr.mxu0 0.0
    %2334 = vmatpush1.msra.mxu0 %v2201
    %2335 = vmatprep.subr.mxu0 0.0
    %2336 = vmatpush1.msra.mxu0 %v2202
    %2337 = vmatprep.mubr.f32.mxu0 %v2137
    %2338 = vmatmul.mubr.f32.gmra.mrb[0].mxu0 %v2136
    %v2339 = vpop.f32.mrb[0].mxu0
    %v2340 = vadd.f32 %v2270, %v2339
    %v2341 = vpop.f32.mrb[0].mxu0
    %2342 = vdwg.mxu0
    %2344 = vrot.lane.b32.xlu0 %v2340, 96
    %v2345 = vpop.permute.xlu0 %2344
    %2347 = vmatprep.subr.mxu0 0.0
    %2348 = vmatpush1.msra.mxu0 %v2340
    %2349 = vmatprep.subr.mxu0 0.0
    %2350 = vmatpush1.msra.mxu0 %v2345
    %2351 = vmatprep.subr.mxu0 0.0
    %2352 = vmatpush1.msra.mxu0 0.0
    %2353 = vmatprep.subr.mxu0 0.0
    %2354 = vmatpush1.msra.mxu0 0.0
    %2355 = vmatprep.subr.mxu0 0.0
    %2356 = vmatpush1.msra.mxu0 0.0
    %2357 = vmatprep.subr.mxu0 0.0
    %2358 = vmatpush1.msra.mxu0 0.0
    %2359 = vmatprep.subr.mxu0 0.0
    %2360 = vmatpush1.msra.mxu0 0.0
    %2361 = vmatprep.subr.mxu0 0.0
    %2362 = vmatpush1.msra.mxu0 0.0
    %2363 = vmatprep.subr.mxu0 0.0
    %2364 = vmatpush1.msra.mxu0 0.0
    %2365 = vmatprep.subr.mxu0 0.0
    %2366 = vmatpush1.msra.mxu0 0.0
    %2367 = vmatprep.subr.mxu0 0.0
    %2368 = vmatpush1.msra.mxu0 0.0
    %2369 = vmatprep.subr.mxu0 0.0
    %2370 = vmatpush1.msra.mxu0 0.0
    %2371 = vmatprep.subr.mxu0 0.0
    %2372 = vmatpush1.msra.mxu0 0.0
    %2373 = vmatprep.subr.mxu0 0.0
    %2374 = vmatpush1.msra.mxu0 0.0
    %2375 = vmatprep.subr.mxu0 0.0
    %2376 = vmatpush1.msra.mxu0 0.0
    %2377 = vmatprep.subr.mxu0 0.0
    %2378 = vmatpush1.msra.mxu0 0.0
    %2379 = vmatprep.subr.mxu0 0.0
    %2380 = vmatpush1.msra.mxu0 0.0
    %2381 = vmatprep.subr.mxu0 0.0
    %2382 = vmatpush1.msra.mxu0 0.0
    %2383 = vmatprep.subr.mxu0 0.0
    %2384 = vmatpush1.msra.mxu0 0.0
    %2385 = vmatprep.subr.mxu0 0.0
    %2386 = vmatpush1.msra.mxu0 0.0
    %2387 = vmatprep.subr.mxu0 0.0
    %2388 = vmatpush1.msra.mxu0 0.0
    %2389 = vmatprep.subr.mxu0 0.0
    %2390 = vmatpush1.msra.mxu0 0.0
    %2391 = vmatprep.subr.mxu0 0.0
    %2392 = vmatpush1.msra.mxu0 0.0
    %2393 = vmatprep.subr.mxu0 0.0
    %2394 = vmatpush1.msra.mxu0 0.0
    %2395 = vmatprep.subr.mxu0 0.0
    %2396 = vmatpush1.msra.mxu0 0.0
    %2397 = vmatprep.subr.mxu0 0.0
    %2398 = vmatpush1.msra.mxu0 0.0
    %2399 = vmatprep.subr.mxu0 0.0
    %2400 = vmatpush1.msra.mxu0 0.0
    %2401 = vmatprep.subr.mxu0 0.0
    %2402 = vmatpush1.msra.mxu0 0.0
    %2403 = vmatprep.subr.mxu0 0.0
    %2404 = vmatpush1.msra.mxu0 0.0
    %2405 = vmatprep.subr.mxu0 0.0
    %2406 = vmatpush1.msra.mxu0 0.0
    %2407 = vmatprep.subr.mxu0 0.0
    %2408 = vmatpush1.msra.mxu0 0.0
    %2409 = vmatprep.subr.mxu0 0.0
    %2410 = vmatpush1.msra.mxu0 0.0
    %2411 = vmatprep.mubr.f32.mxu0 0.0
    %2412 = vmatmul.mubr.f32.gmra.mrb[0].mxu0 %v595
    %v2413 = vpop.f32.mrb[0].mxu0
    %v2414 = vadd.f32 0.0, %v2413
    %v2415 = vpop.f32.mrb[0].mxu0
    %2416 = vmatprep.mubr.f32.mxu0 0.0
    %2417 = vmatmul.mubr.f32.gmra.mrb[0].mxu0 %v598
    %v2418 = vpop.f32.mrb[0].mxu0
    %v2419 = vpop.f32.mrb[0].mxu0
    %2420 = vmatprep.mubr.f32.mxu0 0.0
    %2421 = vmatmul.mubr.f32.gmra.mrb[0].mxu0 %v601
    %v2422 = vpop.f32.mrb[0].mxu0
    %v2423 = vpop.f32.mrb[0].mxu0
    %2424 = vmatprep.mubr.f32.mxu0 0.0
    %2425 = vmatmul.mubr.f32.gmra.mrb[0].mxu0 %v604
    %v2426 = vpop.f32.mrb[0].mxu0
    %v2427 = vpop.f32.mrb[0].mxu0
    %2428 = vmatprep.mubr.f32.mxu0 0.0
    %2429 = vmatmul.mubr.f32.gmra.mrb[0].mxu0 %v607
    %v2430 = vpop.f32.mrb[0].mxu0
    %v2431 = vpop.f32.mrb[0].mxu0
    %2432 = vmatprep.mubr.f32.mxu0 0.0
    %2433 = vmatmul.mubr.f32.gmra.mrb[0].mxu0 %v610
    %v2434 = vpop.f32.mrb[0].mxu0
    %v2435 = vpop.f32.mrb[0].mxu0
    %2436 = vmatprep.mubr.f32.mxu0 0.0
    %2437 = vmatmul.mubr.f32.gmra.mrb[0].mxu0 %v613
    %v2438 = vpop.f32.mrb[0].mxu0
    %v2439 = vpop.f32.mrb[0].mxu0
    %2440 = vmatprep.mubr.f32.mxu0 0.0
    %2441 = vmatmul.mubr.f32.gmra.mrb[0].mxu0 %v616
    %v2442 = vpop.f32.mrb[0].mxu0
    %v2443 = vpop.f32.mrb[0].mxu0
    %2444 = vmatprep.mubr.f32.mxu0 0.0
    %2445 = vmatmul.mubr.f32.gmra.mrb[0].mxu0 %v619
    %v2446 = vpop.f32.mrb[0].mxu0
    %v2447 = vpop.f32.mrb[0].mxu0
    %2448 = vdwg.mxu0
    %v2449 = vadd.f32 %v2012, %v2414
    %v2450 = vld [vmem:[%s9] sm:$0xff]
    %v2451 = vld [vmem:[%s9 + $0x8] sm:$0xff]
    %v2452 = vld [vmem:[%s9 + $0x10] sm:$0xff]
    %v2453 = vld [vmem:[%s9 + $0x18] sm:$0xff]
    %v2454 = vld [vmem:[%s9 + $0x20] sm:$0xff]
    %v2455 = vld [vmem:[%s9 + $0x28] sm:$0xff]
    %v2456 = vld [vmem:[%s9 + $0x30] sm:$0xff]
    %v2457 = vld [vmem:[%s9 + $0x38] sm:$0xff]
    %v2458 = vld [vmem:[%s10] sm:$0x3]
    %v2460 = vlaneseq
    %v2461 = vshrl.u32 %v2460, 7
    %v2462 = vsub.s32 0, %v2461
    %v2463 = vrot.slane %v2458, %v2462
    %v2464 = vlaneseq
    %v2465 = vshrl.u32 %v2464, 7
    %v2466 = vsub.s32 1, %v2465
    %v2467 = vrot.slane %v2458, %v2466
    %v2471 = vsel %vm168, %v2449, 0
    %2473 = vmatprep.subr.mxu0 %v2451
    %2474 = vmatpush1.msra.mxu0 %v2450
    %2475 = vmatprep.subr.mxu0 %v2453
    %2476 = vmatpush1.msra.mxu0 %v2452
    %2477 = vmatprep.subr.mxu0 %v2455
    %2478 = vmatpush1.msra.mxu0 %v2454
    %2479 = vmatprep.subr.mxu0 %v2457
    %2480 = vmatpush1.msra.mxu0 %v2456
    %2481 = vmatprep.subr.mxu0 0.0
    %2482 = vmatpush1.msra.mxu0 0.0
    %2483 = vmatprep.subr.mxu0 0.0
    %2484 = vmatpush1.msra.mxu0 0.0
    %2485 = vmatprep.subr.mxu0 0.0
    %2486 = vmatpush1.msra.mxu0 0.0
    %2487 = vmatprep.subr.mxu0 0.0
    %2488 = vmatpush1.msra.mxu0 0.0
    %2489 = vmatprep.subr.mxu0 0.0
    %2490 = vmatpush1.msra.mxu0 0.0
    %2491 = vmatprep.subr.mxu0 0.0
    %2492 = vmatpush1.msra.mxu0 0.0
    %2493 = vmatprep.subr.mxu0 0.0
    %2494 = vmatpush1.msra.mxu0 0.0
    %2495 = vmatprep.subr.mxu0 0.0
    %2496 = vmatpush1.msra.mxu0 0.0
    %2497 = vmatprep.subr.mxu0 0.0
    %2498 = vmatpush1.msra.mxu0 0.0
    %2499 = vmatprep.subr.mxu0 0.0
    %2500 = vmatpush1.msra.mxu0 0.0
    %2501 = vmatprep.subr.mxu0 0.0
    %2502 = vmatpush1.msra.mxu0 0.0
    %2503 = vmatprep.subr.mxu0 0.0
    %2504 = vmatpush1.msra.mxu0 0.0
    %2505 = vmatprep.subr.mxu0 0.0
    %2506 = vmatpush1.msra.mxu0 0.0
    %2507 = vmatprep.subr.mxu0 0.0
    %2508 = vmatpush1.msra.mxu0 0.0
    %2509 = vmatprep.subr.mxu0 0.0
    %2510 = vmatpush1.msra.mxu0 0.0
    %2511 = vmatprep.subr.mxu0 0.0
    %2512 = vmatpush1.msra.mxu0 0.0
    %2513 = vmatprep.subr.mxu0 0.0
    %2514 = vmatpush1.msra.mxu0 0.0
    %2515 = vmatprep.subr.mxu0 0.0
    %2516 = vmatpush1.msra.mxu0 0.0
    %2517 = vmatprep.subr.mxu0 0.0
    %2518 = vmatpush1.msra.mxu0 0.0
    %2519 = vmatprep.subr.mxu0 0.0
    %2520 = vmatpush1.msra.mxu0 0.0
    %2521 = vmatprep.subr.mxu0 0.0
    %2522 = vmatpush1.msra.mxu0 0.0
    %2523 = vmatprep.subr.mxu0 0.0
    %2524 = vmatpush1.msra.mxu0 0.0
    %2525 = vmatprep.subr.mxu0 0.0
    %2526 = vmatpush1.msra.mxu0 0.0
    %2527 = vmatprep.subr.mxu0 0.0
    %2528 = vmatpush1.msra.mxu0 0.0
    %2529 = vmatprep.subr.mxu0 0.0
    %2530 = vmatpush1.msra.mxu0 0.0
    %2531 = vmatprep.subr.mxu0 0.0
    %2532 = vmatpush1.msra.mxu0 0.0
    %2533 = vmatprep.subr.mxu0 0.0
    %2534 = vmatpush1.msra.mxu0 0.0
    %2535 = vmatprep.subr.mxu0 0.0
    %2536 = vmatpush1.msra.mxu0 0.0
    %2537 = vmatprep.mubr.f32.mxu0 0.0
    %2538 = vmatmul.mubr.f32.gmra.mrb[0].mxu0 %v2471
    %v2539 = vpop.f32.mrb[0].mxu0
    %v2540 = vadd.f32 %v2463, %v2539
    %v2541 = vpop.f32.mrb[0].mxu0
    %v2542 = vadd.f32 %v2467, %v2541
    %2543 = vdwg.mxu0
    %v2544 = vmax.f32 %v2540, 0.0
    %v2545 = vmax.f32 %v2542, 0.0
    %v2546 = vld [vmem:[%s11] sm:$0xff]
    %v2547 = vld [vmem:[%s11 + $0x8] sm:$0xff]
    %v2548 = vld [vmem:[%s11 + $0x10] sm:$0xff]
    %v2549 = vld [vmem:[%s11 + $0x18] sm:$0xff]
    %v2550 = vld [vmem:[%s11 + $0x20] sm:$0xff]
    %v2551 = vld [vmem:[%s11 + $0x28] sm:$0xff]
    %v2552 = vld [vmem:[%s11 + $0x30] sm:$0xff]
    %v2553 = vld [vmem:[%s11 + $0x38] sm:$0xff]
    %v2554 = vld [vmem:[%s11 + $0x40] sm:$0xff]
    %v2555 = vld [vmem:[%s11 + $0x48] sm:$0xff]
    %v2556 = vld [vmem:[%s11 + $0x50] sm:$0xff]
    %v2557 = vld [vmem:[%s11 + $0x58] sm:$0xff]
    %v2558 = vld [vmem:[%s11 + $0x60] sm:$0xff]
    %v2559 = vld [vmem:[%s11 + $0x68] sm:$0xff]
    %v2560 = vld [vmem:[%s11 + $0x70] sm:$0xff]
    %v2561 = vld [vmem:[%s11 + $0x78] sm:$0xff]
    %v2562 = vld [vmem:[%s11 + $0x80] sm:$0xff]
    %v2563 = vld [vmem:[%s11 + $0x88] sm:$0xff]
    %v2564 = vld [vmem:[%s11 + $0x90] sm:$0xff]
    %v2565 = vld [vmem:[%s11 + $0x98] sm:$0xff]
    %v2566 = vld [vmem:[%s11 + $0xa0] sm:$0xff]
    %v2567 = vld [vmem:[%s11 + $0xa8] sm:$0xff]
    %v2568 = vld [vmem:[%s11 + $0xb0] sm:$0xff]
    %v2569 = vld [vmem:[%s11 + $0xb8] sm:$0xff]
    %v2570 = vld [vmem:[%s11 + $0xc0] sm:$0xff]
    %v2571 = vld [vmem:[%s11 + $0xc8] sm:$0xff]
    %v2572 = vld [vmem:[%s11 + $0xd0] sm:$0xff]
    %v2573 = vld [vmem:[%s11 + $0xd8] sm:$0xff]
    %v2574 = vld [vmem:[%s11 + $0xe0] sm:$0xff]
    %v2575 = vld [vmem:[%s11 + $0xe8] sm:$0xff]
    %v2576 = vld [vmem:[%s11 + $0xf0] sm:$0xff]
    %v2577 = vld [vmem:[%s11 + $0xf8] sm:$0xff]
    %v2578 = vld [vmem:[%s12] sm:$0x1]
    %v2580 = vlaneseq
    %v2581 = vshrl.u32 %v2580, 7
    %v2582 = vsub.s32 0, %v2581
    %v2583 = vrot.slane %v2578, %v2582
    %2585 = vmatprep.subr.mxu0 0.0
    %2586 = vmatpush1.msra.mxu0 %v2546
    %2587 = vmatprep.subr.mxu0 0.0
    %2588 = vmatpush1.msra.mxu0 %v2547
    %2589 = vmatprep.subr.mxu0 0.0
    %2590 = vmatpush1.msra.mxu0 %v2548
    %2591 = vmatprep.subr.mxu0 0.0
    %2592 = vmatpush1.msra.mxu0 %v2549
    %2593 = vmatprep.subr.mxu0 0.0
    %2594 = vmatpush1.msra.mxu0 %v2550
    %2595 = vmatprep.subr.mxu0 0.0
    %2596 = vmatpush1.msra.mxu0 %v2551
    %2597 = vmatprep.subr.mxu0 0.0
    %2598 = vmatpush1.msra.mxu0 %v2552
    %2599 = vmatprep.subr.mxu0 0.0
    %2600 = vmatpush1.msra.mxu0 %v2553
    %2601 = vmatprep.subr.mxu0 0.0
    %2602 = vmatpush1.msra.mxu0 %v2554
    %2603 = vmatprep.subr.mxu0 0.0
    %2604 = vmatpush1.msra.mxu0 %v2555
    %2605 = vmatprep.subr.mxu0 0.0
    %2606 = vmatpush1.msra.mxu0 %v2556
    %2607 = vmatprep.subr.mxu0 0.0
    %2608 = vmatpush1.msra.mxu0 %v2557
    %2609 = vmatprep.subr.mxu0 0.0
    %2610 = vmatpush1.msra.mxu0 %v2558
    %2611 = vmatprep.subr.mxu0 0.0
    %2612 = vmatpush1.msra.mxu0 %v2559
    %2613 = vmatprep.subr.mxu0 0.0
    %2614 = vmatpush1.msra.mxu0 %v2560
    %2615 = vmatprep.subr.mxu0 0.0
    %2616 = vmatpush1.msra.mxu0 %v2561
    %2617 = vmatprep.subr.mxu0 0.0
    %2618 = vmatpush1.msra.mxu0 %v2562
    %2619 = vmatprep.subr.mxu0 0.0
    %2620 = vmatpush1.msra.mxu0 %v2563
    %2621 = vmatprep.subr.mxu0 0.0
    %2622 = vmatpush1.msra.mxu0 %v2564
    %2623 = vmatprep.subr.mxu0 0.0
    %2624 = vmatpush1.msra.mxu0 %v2565
    %2625 = vmatprep.subr.mxu0 0.0
    %2626 = vmatpush1.msra.mxu0 %v2566
    %2627 = vmatprep.subr.mxu0 0.0
    %2628 = vmatpush1.msra.mxu0 %v2567
    %2629 = vmatprep.subr.mxu0 0.0
    %2630 = vmatpush1.msra.mxu0 %v2568
    %2631 = vmatprep.subr.mxu0 0.0
    %2632 = vmatpush1.msra.mxu0 %v2569
    %2633 = vmatprep.subr.mxu0 0.0
    %2634 = vmatpush1.msra.mxu0 %v2570
    %2635 = vmatprep.subr.mxu0 0.0
    %2636 = vmatpush1.msra.mxu0 %v2571
    %2637 = vmatprep.subr.mxu0 0.0
    %2638 = vmatpush1.msra.mxu0 %v2572
    %2639 = vmatprep.subr.mxu0 0.0
    %2640 = vmatpush1.msra.mxu0 %v2573
    %2641 = vmatprep.subr.mxu0 0.0
    %2642 = vmatpush1.msra.mxu0 %v2574
    %2643 = vmatprep.subr.mxu0 0.0
    %2644 = vmatpush1.msra.mxu0 %v2575
    %2645 = vmatprep.subr.mxu0 0.0
    %2646 = vmatpush1.msra.mxu0 %v2576
    %2647 = vmatprep.subr.mxu0 0.0
    %2648 = vmatpush1.msra.mxu0 %v2577
    %2649 = vmatprep.mubr.f32.mxu0 %v2545
    %2650 = vmatmul.mubr.f32.gmra.mrb[0].mxu0 %v2544
    %v2651 = vpop.f32.mrb[0].mxu0
    %v2652 = vadd.f32 %v2583, %v2651
    %v2653 = vpop.f32.mrb[0].mxu0
    %2654 = vdwg.mxu0
    %v2655 = vld [vmem:[%s13] sm:$0x1]
    %v2656 = vld [vmem:[#allocation2] sm:$0x1]
    %2658 = vset.pattern.permute.xlu0 0
    %2659 = vperm.xlu0 %2658, %v2656
    %v2660 = vpop.permute.xlu0 %2659
    %v2662 = vlaneseq
    %v2663 = vshrl.u32 %v2662, 7
    %v2664 = vsub.s32 0, %v2663
    %v2665 = vrot.slane %v2660, %v2664
    %vm2666 = vcmask 15360
    %v2668 = vsel %vm2666, %v2655, 0
    %v2671 = vsel %vm140, %v2652, 0
    %2673 = vmatprep.subr.mxu0 0.0
    %2674 = vmatpush1.msra.mxu0 %v2671
    %2675 = vmatprep.subr.mxu0 0.0
    %2676 = vmatpush1.msra.mxu0 0.0
    %2677 = vmatprep.subr.mxu0 0.0
    %2678 = vmatpush1.msra.mxu0 0.0
    %2679 = vmatprep.subr.mxu0 0.0
    %2680 = vmatpush1.msra.mxu0 0.0
    %2681 = vmatprep.subr.mxu0 0.0
    %2682 = vmatpush1.msra.mxu0 0.0
    %2683 = vmatprep.subr.mxu0 0.0
    %2684 = vmatpush1.msra.mxu0 0.0
    %2685 = vmatprep.subr.mxu0 0.0
    %2686 = vmatpush1.msra.mxu0 0.0
    %2687 = vmatprep.subr.mxu0 0.0
    %2688 = vmatpush1.msra.mxu0 0.0
    %2689 = vmatprep.subr.mxu0 0.0
    %2690 = vmatpush1.msra.mxu0 0.0
    %2691 = vmatprep.subr.mxu0 0.0
    %2692 = vmatpush1.msra.mxu0 0.0
    %2693 = vmatprep.subr.mxu0 0.0
    %2694 = vmatpush1.msra.mxu0 0.0
    %2695 = vmatprep.subr.mxu0 0.0
    %2696 = vmatpush1.msra.mxu0 0.0
    %2697 = vmatprep.subr.mxu0 0.0
    %2698 = vmatpush1.msra.mxu0 0.0
    %2699 = vmatprep.subr.mxu0 0.0
    %2700 = vmatpush1.msra.mxu0 0.0
    %2701 = vmatprep.subr.mxu0 0.0
    %2702 = vmatpush1.msra.mxu0 0.0
    %2703 = vmatprep.subr.mxu0 0.0
    %2704 = vmatpush1.msra.mxu0 0.0
    %2705 = vmatprep.subr.mxu0 0.0
    %2706 = vmatpush1.msra.mxu0 0.0
    %2707 = vmatprep.subr.mxu0 0.0
    %2708 = vmatpush1.msra.mxu0 0.0
    %2709 = vmatprep.subr.mxu0 0.0
    %2710 = vmatpush1.msra.mxu0 0.0
    %2711 = vmatprep.subr.mxu0 0.0
    %2712 = vmatpush1.msra.mxu0 0.0
    %2713 = vmatprep.subr.mxu0 0.0
    %2714 = vmatpush1.msra.mxu0 0.0
    %2715 = vmatprep.subr.mxu0 0.0
    %2716 = vmatpush1.msra.mxu0 0.0
    %2717 = vmatprep.subr.mxu0 0.0
    %2718 = vmatpush1.msra.mxu0 0.0
    %2719 = vmatprep.subr.mxu0 0.0
    %2720 = vmatpush1.msra.mxu0 0.0
    %2721 = vmatprep.subr.mxu0 0.0
    %2722 = vmatpush1.msra.mxu0 0.0
    %2723 = vmatprep.subr.mxu0 0.0
    %2724 = vmatpush1.msra.mxu0 0.0
    %2725 = vmatprep.subr.mxu0 0.0
    %2726 = vmatpush1.msra.mxu0 0.0
    %2727 = vmatprep.subr.mxu0 0.0
    %2728 = vmatpush1.msra.mxu0 0.0
    %2729 = vmatprep.subr.mxu0 0.0
    %2730 = vmatpush1.msra.mxu0 0.0
    %2731 = vmatprep.subr.mxu0 0.0
    %2732 = vmatpush1.msra.mxu0 0.0
    %2733 = vmatprep.subr.mxu0 0.0
    %2734 = vmatpush1.msra.mxu0 0.0
    %2735 = vmatprep.subr.mxu0 0.0
    %2736 = vmatpush1.msra.mxu0 0.0
    %2737 = vmatprep.mubr.f32.mxu0 0.0
    %2738 = vmatmul.mubr.f32.gmra.mrb[0].mxu0 %v2668
    %v2739 = vpop.f32.mrb[0].mxu0
    %v2740 = vadd.f32 %v2665, %v2739
    %v2741 = vpop.f32.mrb[0].mxu0
    %2742 = vdwg.mxu0
    %vm2743 = vcmask 8192
    %2744 = vst.msk [vmem:[#allocation3] sm:$0x1] %vm2743, %v2740
    // Predicated region
    $region62: #{tpu_custom_call.1} parent=1 // pred_check
      _
    $region63: #{tpu_custom_call.1} parent=1 // pred_check_branch
      %2746 = sbr.rel (0) target = $region65
    $region64: #{tpu_custom_call.1} parent=1 // pred_region
      %s2748 = ssub.s32 16, 16
      %2749 = vsyncadd [#allocation4], %s2748
      %s2751 = sshll.u32 [#allocation3], 4
      %s2752 = int_to_ptr.vmem [resolvable:$true] %s2751
      %2754 = dma.vmem_to_hbm [thread:$0]  %s2752, 16, %s15, [#allocation4]
    $region65: #{tpu_custom_call.1} parent=1 // pred_fallthru
      _
    // Predicated region
    $region66: #{tpu_custom_call.1} parent=1 // pred_check
      _
    $region67: #{tpu_custom_call.1} parent=1 // pred_check_branch
      %2756 = sbr.rel (0) target = $region69
    $region68: #{tpu_custom_call.1} parent=1 // pred_region
      %2757 = dma.done [#allocation4], 16
    $region69: #{tpu_custom_call.1} parent=1 // pred_fallthru
      _
    %2758 = vsyncpa [#allocation4], 1

</llo_original>
